<compile_context>
chip_gen: v5e
topology: v5e:2x2
jax: 0.10.0
libtpu: 0.0.40
codegen_flags: <defaults>
</compile_context>

<pallas_src>
import numpy as np
import jax
import jax.numpy as jnp
from jax import lax
from jax.experimental import pallas as pl
from jax.experimental.pallas import tpu as pltpu

H_SP = 4
W_SP = 4


# ----------------------------------------------------------------------------
# Parameter setup (glue)
# ----------------------------------------------------------------------------
def conv3x3_same_as_matrix(w, b, cin, cout, h, w_):
    """w: (cout, cin, 3, 3) OIHW, b: (cout,).
    Returns A: (cin*h*w_, cout*h*w_) and b_flat: (cout*h*w_,) such that
    out_flat = in_flat @ A + b_flat, with channel-major (c, h, w) flattening,
    matching PyTorch's .view(B, -1) on an NCHW tensor."""
    A = np.zeros((cin * h * w_, cout * h * w_), np.float32)
    for co in range(cout):
        for ho in range(h):
            for wo in range(w_):
                o = co * h * w_ + ho * w_ + wo
                for ci in range(cin):
                    for kh in range(3):
                        for kw in range(3):
                            hi, wi = ho + kh - 1, wo + kw - 1
                            if 0 <= hi < h and 0 <= wi < w_:
                                A[ci * h * w_ + hi * w_ + wi, o] = w[co, ci, kh, kw]
    b_flat = np.repeat(np.asarray(b, np.float32), h * w_)
    return A, b_flat


def init_params():
    """Deterministic synthetic parameters (not a checkpoint load)."""
    key = jax.random.PRNGKey(1)

    def dense(key, fan_in, fan_out):
        kw, kb = jax.random.split(key)
        scale = 1.0 / np.sqrt(fan_in)
        w = jax.random.normal(kw, (fan_in, fan_out), jnp.float32) * scale
        b = jax.random.normal(kb, (fan_out,), jnp.float32) * scale
        return np.asarray(w), np.asarray(b)

    keys = jax.random.split(key, 16)
    p = {}

    # --- BLEAoANet convs: 1 -> 16 -> 32, 3x3, stride 1, pad 1 ---
    kw1, kb1 = jax.random.split(keys[0])
    conv1_w = np.asarray(jax.random.normal(kw1, (16, 1, 3, 3), jnp.float32)) * (1.0 / 3.0)
    conv1_b = np.asarray(jax.random.normal(kb1, (16,), jnp.float32)) * (1.0 / 3.0)
    kw2, kb2 = jax.random.split(keys[1])
    conv2_w = np.asarray(jax.random.normal(kw2, (32, 16, 3, 3), jnp.float32)) * (1.0 / 12.0)
    conv2_b = np.asarray(jax.random.normal(kb2, (32,), jnp.float32)) * (1.0 / 12.0)
    p["conv1_w"], p["conv1_b"] = conv1_w, conv1_b
    p["conv2_w"], p["conv2_b"] = conv2_w, conv2_b
    p["A1"], p["A1_b"] = conv3x3_same_as_matrix(conv1_w, conv1_b, 1, 16, H_SP, W_SP)
    p["A2"], p["A2_b"] = conv3x3_same_as_matrix(conv2_w, conv2_b, 16, 32, H_SP, W_SP)

    p["wb1"], p["bb1"] = dense(keys[2], 32 * 4 * 4, 128)   # ble fc1
    p["wb2"], p["bb2"] = dense(keys[3], 128, 64)            # ble fc2 (no relu)

    # --- PointNet ---
    p["wm1"], p["bm1"] = dense(keys[4], 3, 64)
    p["wm2"], p["bm2"] = dense(keys[5], 64, 128)
    p["wm3"], p["bm3"] = dense(keys[6], 128, 1024)
    p["wm4"], p["bm4"] = dense(keys[7], 1024, 512)
    p["wm5"], p["bm5"] = dense(keys[8], 512, 256)           # (no relu)

    # --- Fusion head ---
    p["wf1"], p["bf1"] = dense(keys[9], 320, 128)
    p["wf2"], p["bf2"] = dense(keys[10], 128, 64)
    p["wf3"], p["bf3"] = dense(keys[11], 64, 3)
    return p


def pack_params(p):
    """Fold bias-only layers into the fusion matmul (exact, f32), pad every
    lane-narrow dim up to 128 (exact zero-padding), cast weights to bf16
    (biases stay f32 as (1, N) rows for the f32 epilogue)."""
    bf16 = lambda a: jnp.asarray(np.asarray(a, np.float32), jnp.bfloat16)

    def row(v, n=None):
        v = np.asarray(v, np.float32).reshape(-1)
        if n is not None and n > v.shape[0]:
            v = np.pad(v, (0, n - v.shape[0]))
        return jnp.asarray(v.reshape(1, -1))

    wf1 = np.asarray(p["wf1"], np.float32)          # (320, 128); rows 0:64 = ble feat
    wb2 = np.asarray(p["wb2"], np.float32)
    wm5 = np.asarray(p["wm5"], np.float32)
    # concat(ble_feat, mm_feat) @ wf1 + bf1, with ble_feat = x@wb2 + bb2 (no relu)
    # and mm_feat = y@wm5 + bm5 (no relu), folds exactly into:
    #   x @ (wb2 @ wf1[:64]) + y @ (wm5 @ wf1[64:]) + (bf1 + bb2@wf1[:64] + bm5@wf1[64:])
    wble = wb2 @ wf1[:64]                           # (128, 128)
    wmm = wm5 @ wf1[64:]                            # (512, 128)
    bf1f = (np.asarray(p["bf1"], np.float32)
            + np.asarray(p["bb2"], np.float32) @ wf1[:64]
            + np.asarray(p["bm5"], np.float32) @ wf1[64:])

    # Lane padding (all exact: padded activation cols are relu(0+0)=0 and the
    # matching padded weight rows are 0):
    #   pointnet fc1: K 3->8, N 64->128;  pointnet fc2: K 64->128
    #   fusion  fc2: N 64->128;           fusion  fc3: K 64->128, N 3->128
    wm1p = np.zeros((8, 128), np.float32)
    wm1p[:3, :64] = np.asarray(p["wm1"], np.float32)
    wm2p = np.zeros((128, 128), np.float32)
    wm2p[:64, :] = np.asarray(p["wm2"], np.float32)
    wf2p = np.zeros((128, 128), np.float32)
    wf2p[:, :64] = np.asarray(p["wf2"], np.float32)
    wf3p = np.zeros((128, 128), np.float32)
    wf3p[:64, :3] = np.asarray(p["wf3"], np.float32)

    # TODO(synk): v7x-only fp8 packing of wm3/wm4 (per-tensor scales folded into
    # the f32 epilogue) — skipped to keep one code path across chip generations.
    return {
        "A1": bf16(p["A1"]), "A1_b": row(p["A1_b"]),
        "A2": bf16(p["A2"]), "A2_b": row(p["A2_b"]),
        "wb1": bf16(p["wb1"]), "bb1": row(p["bb1"]),
        "wble": bf16(wble),
        "wm1p": bf16(wm1p), "bm1": row(p["bm1"], 128),
        "wm2p": bf16(wm2p), "bm2": row(p["bm2"]),
        "wm3": bf16(p["wm3"]), "bm3": row(p["bm3"]),
        "wm4": bf16(p["wm4"]), "bm4": row(p["bm4"]),
        "wmm": bf16(wmm),
        "bf1f": row(bf1f),
        "wf2p": bf16(wf2p), "bf2": row(p["bf2"], 128),
        "wf3p": bf16(wf3p), "bf3p": row(p["bf3"], 128),
    }


# ----------------------------------------------------------------------------
# Pallas kernel: one batch tile per grid step; chain of bf16 matmuls with f32
# accumulation; bias/ReLU epilogues in f32 (no bf16 VPU on v5e), then a single
# bf16 cast per activation so large intermediates are stored in VMEM as bf16.
# ----------------------------------------------------------------------------
def fusion_kernel(ble_ref, mm_ref,
                  a1_ref, a1b_ref, a2_ref, a2b_ref,
                  wb1_ref, bb1_ref, wble_ref,
                  wm1_ref, bm1_ref, wm2_ref, bm2_ref, wm3_ref, bm3_ref,
                  wm4_ref, bm4_ref, wmm_ref,
                  bf1_ref, wf2_ref, bf2_ref, wf3_ref, bf3_ref,
                  out_ref):
    def dot(act_bf16, w_ref):
        return jnp.dot(act_bf16, w_ref[...], preferred_element_type=jnp.float32)

    def relu_bf16(acc_f32, b_ref):
        # f32 bias-add + ReLU, single cast to bf16 for the next MXU operand.
        return jnp.maximum(acc_f32 + b_ref[...], 0.0).astype(jnp.bfloat16)

    # BLE branch: conv1 -> relu -> conv2 -> relu -> fc1 -> relu   (convs as dense)
    x = relu_bf16(dot(ble_ref[...], a1_ref), a1b_ref)       # (TB, 256)
    x = relu_bf16(dot(x, a2_ref), a2b_ref)                   # (TB, 512)
    x = relu_bf16(dot(x, wb1_ref), bb1_ref)                   # (TB, 128)

    # mmWave PointNet branch: fc1..fc4 with relu (fc5 folded into fusion fc1)
    y = relu_bf16(dot(mm_ref[...], wm1_ref), bm1_ref)         # (TB, 128) lane-padded
    y = relu_bf16(dot(y, wm2_ref), bm2_ref)                   # (TB, 128)
    # TODO(synk): on v7x run the two dots below on the fp8 MXU path (wm3/wm4 are
    # ~68% of total FLOPs); scales would be applied in the f32 epilogue here.
    y = relu_bf16(dot(y, wm3_ref), bm3_ref)                   # (TB, 1024)
    y = relu_bf16(dot(y, wm4_ref), bm4_ref)                   # (TB, 512)

    # Fusion head: concat + fc1 realized as split-weight matmuls with the
    # bias-only feature layers folded in; then fc2 -> relu -> fc3 (lane-padded).
    z = jnp.maximum(dot(x, wble_ref) + dot(y, wmm_ref) + bf1_ref[...],
                    0.0).astype(jnp.bfloat16)                 # (TB, 128)
    z = relu_bf16(dot(z, wf2_ref), bf2_ref)                   # (TB, 128) lane-padded
    out_ref[...] = (dot(z, wf3_ref) + bf3_ref[...]).astype(out_ref.dtype)  # (TB, 128)


# ----------------------------------------------------------------------------
# Wrapper
# ----------------------------------------------------------------------------
def _round_up(x, m):
    return ((x + m - 1) // m) * m


def _choose_batch_tile(B, max_tile):
    """Pick a batch tile (multiple of 16, <= max_tile) that keeps batch-padding
    waste low while still amortizing per-grid-step overhead (prefer big tiles
    on ties)."""
    max_tile = max(16, _round_up(min(max_tile, 1024), 16))
    b16 = _round_up(B, 16)
    if b16 <= max_tile:
        return b16                      # whole batch in one tile, minimal padding
    best_tb = max_tile
    best_pad = _round_up(B, max_tile) - B
    for tb in (1024, 512, 256, 128):
        if tb > max_tile:
            continue
        pad = _round_up(B, tb) - B
        if pad < best_pad or (pad == best_pad and tb > best_tb):
            best_tb, best_pad = tb, pad
    return best_tb


def _vmem_limit_bytes():
    """64 MiB where physical VMEM is 128 MiB (v5e/v6e); 32 MiB otherwise (v7x)."""
    try:
        cap = getattr(pltpu.get_tpu_info(), "vmem_capacity_bytes", None)
    except Exception:
        cap = None
    if cap is not None and cap >= 128 * 1024 * 1024:
        return 64 * 1024 * 1024
    return 32 * 1024 * 1024


def fusion_net(ble_input, mmwave_input, kp, *, max_batch_tile=1024):
    """ble_input: (B, 1, 4, 4) NCHW;  mmwave_input: (B, 3). Returns (B, 3) f32."""
    B = ble_input.shape[0]
    TB = _choose_batch_tile(B, max_batch_tile)
    B_pad = _round_up(B, TB)

    ble_flat = ble_input.reshape(B, -1).astype(jnp.bfloat16)          # (B, 16) c-major
    mm = mmwave_input.astype(jnp.bfloat16)
    mm = jnp.pad(mm, ((0, 0), (0, 8 - mm.shape[1])))                  # (B, 8) lane pad
    if B_pad != B:
        ble_flat = jnp.pad(ble_flat, ((0, B_pad - B), (0, 0)))
        mm = jnp.pad(mm, ((0, B_pad - B), (0, 0)))

    weights = (
        kp["A1"], kp["A1_b"], kp["A2"], kp["A2_b"],
        kp["wb1"], kp["bb1"], kp["wble"],
        kp["wm1p"], kp["bm1"], kp["wm2p"], kp["bm2"], kp["wm3"], kp["bm3"],
        kp["wm4"], kp["bm4"], kp["wmm"],
        kp["bf1f"], kp["wf2p"], kp["bf2"], kp["wf3p"], kp["bf3p"],
    )

    batch_spec = lambda cols: pl.BlockSpec((TB, cols), lambda i: (i, 0))
    # Constant index_map: weights are DMA'd once and stay VMEM-resident across
    # batch tiles (total ~2 MiB bf16). pipeline_mode=pl.Buffered(1) would drop
    # the second buffer, but VMEM is nowhere near binding here, so keep defaults.
    resident = lambda a: pl.BlockSpec(a.shape, lambda i: (0, 0))

    out = pl.pallas_call(
        fusion_kernel,
        out_shape=jax.ShapeDtypeStruct((B_pad, 128), jnp.bfloat16),
        grid=(B_pad // TB,),
        in_specs=[batch_spec(16), batch_spec(8)] + [resident(a) for a in weights],
        out_specs=pl.BlockSpec((TB, 128), lambda i: (i, 0)),
        compiler_params=pltpu.CompilerParams(
            # TODO(synk): pltpu.CORE_PARALLEL (or pl.core_map over a 2-TC mesh)
            # on v7x to explicitly shard batch tiles across both TensorCores.
            dimension_semantics=("parallel",),
            vmem_limit_bytes=_vmem_limit_bytes(),
        ),
    )(ble_flat, mm, *weights)
    return out[:B, :3].astype(jnp.float32)


# ----------------------------------------------------------------------------
# References for correctness checks.
# ----------------------------------------------------------------------------
def reference_f32(ble_input, mmwave_input, p):
    """Faithful f32 mirror of the PyTorch forward (convs via lax.conv)."""
    relu = lambda x: jnp.maximum(x, 0.0)
    dn = ("NCHW", "OIHW", "NCHW")
    x = ble_input.astype(jnp.float32)
    x = relu(lax.conv_general_dilated(x, jnp.asarray(p["conv1_w"]), (1, 1), "SAME",
                                      dimension_numbers=dn)
             + jnp.asarray(p["conv1_b"]).reshape(1, -1, 1, 1))
    x = relu(lax.conv_general_dilated(x, jnp.asarray(p["conv2_w"]), (1, 1), "SAME",
                                      dimension_numbers=dn)
             + jnp.asarray(p["conv2_b"]).reshape(1, -1, 1, 1))
    x = x.reshape(x.shape[0], -1)
    x = relu(x @ jnp.asarray(p["wb1"]) + jnp.asarray(p["bb1"]))
    ble_feat = x @ jnp.asarray(p["wb2"]) + jnp.asarray(p["bb2"])

    y = mmwave_input.astype(jnp.float32)
    y = relu(y @ jnp.asarray(p["wm1"]) + jnp.asarray(p["bm1"]))
    y = relu(y @ jnp.asarray(p["wm2"]) + jnp.asarray(p["bm2"]))
    y = relu(y @ jnp.asarray(p["wm3"]) + jnp.asarray(p["bm3"]))
    y = relu(y @ jnp.asarray(p["wm4"]) + jnp.asarray(p["bm4"]))
    mm_feat = y @ jnp.asarray(p["wm5"]) + jnp.asarray(p["bm5"])

    z = jnp.concatenate([ble_feat, mm_feat], axis=1)
    z = relu(z @ jnp.asarray(p["wf1"]) + jnp.asarray(p["bf1"]))
    z = relu(z @ jnp.asarray(p["wf2"]) + jnp.asarray(p["bf2"]))
    return z @ jnp.asarray(p["wf3"]) + jnp.asarray(p["bf3"])


def reference_bf16(ble_input, mmwave_input, kp):
    """Mirrors the kernel's bf16 math (folded + lane-padded weights, f32 accumulation)."""
    relu = lambda x: jnp.maximum(x, 0.0)
    dot = lambda a, w: jnp.dot(a.astype(jnp.bfloat16), w,
                               preferred_element_type=jnp.float32)
    B = ble_input.shape[0]
    ble = ble_input.reshape(B, -1).astype(jnp.bfloat16)
    mm = jnp.pad(mmwave_input.astype(jnp.bfloat16), ((0, 0), (0, 5)))

    x = relu(dot(ble, kp["A1"]) + kp["A1_b"])
    x = relu(dot(x, kp["A2"]) + kp["A2_b"])
    x = relu(dot(x, kp["wb1"]) + kp["bb1"])

    y = relu(dot(mm, kp["wm1p"]) + kp["bm1"])
    y = relu(dot(y, kp["wm2p"]) + kp["bm2"])
    y = relu(dot(y, kp["wm3"]) + kp["bm3"])
    y = relu(dot(y, kp["wm4"]) + kp["bm4"])

    z = relu(dot(x, kp["wble"]) + dot(y, kp["wmm"]) + kp["bf1f"])
    z = relu(dot(z, kp["wf2p"]) + kp["bf2"])
    out = dot(z, kp["wf3p"]) + kp["bf3p"]
    return out[:, :3]


if __name__ == "__main__":
    params = init_params()
    packed = pack_params(params)

    key = jax.random.PRNGKey(0)
    k1, k2, k3, k4 = jax.random.split(key, 4)

    # --- Small single-tile case (B=2, one grid step) ---
    B = 2
    ble_input = jax.random.normal(k1, (B, 1, 4, 4), jnp.float32)   # NCHW, like PyTorch
    mmwave_input = jax.random.normal(k2, (B, 3), jnp.float32)

    out = jax.block_until_ready(fusion_net(ble_input, mmwave_input, packed))
    assert out.shape == (B, 3)

    # Tight check against a reference mirroring the kernel's bf16/fold math
    # (tolerance covers the bf16 rounding of the final output tile).
    ref_b = jax.block_until_ready(reference_bf16(ble_input, mmwave_input, packed))
    np.testing.assert_allclose(np.asarray(out), np.asarray(ref_b), rtol=2e-2, atol=2e-2)

    # Looser check against the exact f32 PyTorch-style forward (bf16 noise).
    ref_f = jax.block_until_ready(reference_f32(ble_input, mmwave_input, params))
    np.testing.assert_allclose(np.asarray(out), np.asarray(ref_f), rtol=1e-1, atol=1e-1)

    # --- Multi-tile / padded-batch case: B=40, TB forced to 16 -> grid of 3 steps,
    # exercising batch padding and the "parallel" batch axis with >1 tile. ---
    B2 = 40
    ble2 = jax.random.normal(k3, (B2, 1, 4, 4), jnp.float32)
    mm2 = jax.random.normal(k4, (B2, 3), jnp.float32)
    out2 = jax.block_until_ready(fusion_net(ble2, mm2, packed, max_batch_tile=16))
    assert out2.shape == (B2, 3)
    ref2 = jax.block_until_ready(reference_bf16(ble2, mm2, packed))
    np.testing.assert_allclose(np.asarray(out2), np.asarray(ref2), rtol=2e-2, atol=2e-2)

    print("KERNEL_OK")
</pallas_src>

<mosaic_0001>
module attributes {stable_mosaic.version = 11 : i64} {
  func.func @fusion_kernel(%arg0: i32, %arg1: memref<16x16xbf16, #tpu.memory_space<vmem>>, %arg2: memref<16x8xbf16, #tpu.memory_space<vmem>>, %arg3: memref<16x256xbf16, #tpu.memory_space<vmem>>, %arg4: memref<1x256xf32, #tpu.memory_space<vmem>>, %arg5: memref<256x512xbf16, #tpu.memory_space<vmem>>, %arg6: memref<1x512xf32, #tpu.memory_space<vmem>>, %arg7: memref<512x128xbf16, #tpu.memory_space<vmem>>, %arg8: memref<1x128xf32, #tpu.memory_space<vmem>>, %arg9: memref<128x128xbf16, #tpu.memory_space<vmem>>, %arg10: memref<8x128xbf16, #tpu.memory_space<vmem>>, %arg11: memref<1x128xf32, #tpu.memory_space<vmem>>, %arg12: memref<128x128xbf16, #tpu.memory_space<vmem>>, %arg13: memref<1x128xf32, #tpu.memory_space<vmem>>, %arg14: memref<128x1024xbf16, #tpu.memory_space<vmem>>, %arg15: memref<1x1024xf32, #tpu.memory_space<vmem>>, %arg16: memref<1024x512xbf16, #tpu.memory_space<vmem>>, %arg17: memref<1x512xf32, #tpu.memory_space<vmem>>, %arg18: memref<512x128xbf16, #tpu.memory_space<vmem>>, %arg19: memref<1x128xf32, #tpu.memory_space<vmem>>, %arg20: memref<128x128xbf16, #tpu.memory_space<vmem>>, %arg21: memref<1x128xf32, #tpu.memory_space<vmem>>, %arg22: memref<128x128xbf16, #tpu.memory_space<vmem>>, %arg23: memref<1x128xf32, #tpu.memory_space<vmem>>, %arg24: memref<16x128xbf16, #tpu.memory_space<vmem>>) attributes {dimension_semantics = [#tpu.dimension_semantics<parallel>], iteration_bounds = array<i64: 1>, scalar_prefetch = 0 : i64, scratch_operands = 0 : i64, tpu.core_type = #tpu.core_type<tc>, window_params = [{transform_indices = @transform_0, window_bounds = array<i64: 16, 16>}, {transform_indices = @transform_1, window_bounds = array<i64: 16, 8>}, {pipeline_mode = #tpu.pipeline_mode<synchronous>, transform_indices = @transform_2, window_bounds = array<i64: 16, 256>}, {pipeline_mode = #tpu.pipeline_mode<synchronous>, transform_indices = @transform_3, window_bounds = array<i64: 1, 256>}, {pipeline_mode = #tpu.pipeline_mode<synchronous>, transform_indices = @transform_4, window_bounds = array<i64: 256, 512>}, {pipeline_mode = #tpu.pipeline_mode<synchronous>, transform_indices = @transform_5, window_bounds = array<i64: 1, 512>}, {pipeline_mode = #tpu.pipeline_mode<synchronous>, transform_indices = @transform_6, window_bounds = array<i64: 512, 128>}, {pipeline_mode = #tpu.pipeline_mode<synchronous>, transform_indices = @transform_7, window_bounds = array<i64: 1, 128>}, {pipeline_mode = #tpu.pipeline_mode<synchronous>, transform_indices = @transform_8, window_bounds = array<i64: 128, 128>}, {pipeline_mode = #tpu.pipeline_mode<synchronous>, transform_indices = @transform_9, window_bounds = array<i64: 8, 128>}, {pipeline_mode = #tpu.pipeline_mode<synchronous>, transform_indices = @transform_10, window_bounds = array<i64: 1, 128>}, {pipeline_mode = #tpu.pipeline_mode<synchronous>, transform_indices = @transform_11, window_bounds = array<i64: 128, 128>}, {pipeline_mode = #tpu.pipeline_mode<synchronous>, transform_indices = @transform_12, window_bounds = array<i64: 1, 128>}, {pipeline_mode = #tpu.pipeline_mode<synchronous>, transform_indices = @transform_13, window_bounds = array<i64: 128, 1024>}, {pipeline_mode = #tpu.pipeline_mode<synchronous>, transform_indices = @transform_14, window_bounds = array<i64: 1, 1024>}, {pipeline_mode = #tpu.pipeline_mode<synchronous>, transform_indices = @transform_15, window_bounds = array<i64: 1024, 512>}, {pipeline_mode = #tpu.pipeline_mode<synchronous>, transform_indices = @transform_16, window_bounds = array<i64: 1, 512>}, {pipeline_mode = #tpu.pipeline_mode<synchronous>, transform_indices = @transform_17, window_bounds = array<i64: 512, 128>}, {pipeline_mode = #tpu.pipeline_mode<synchronous>, transform_indices = @transform_18, window_bounds = array<i64: 1, 128>}, {pipeline_mode = #tpu.pipeline_mode<synchronous>, transform_indices = @transform_19, window_bounds = array<i64: 128, 128>}, {pipeline_mode = #tpu.pipeline_mode<synchronous>, transform_indices = @transform_20, window_bounds = array<i64: 1, 128>}, {pipeline_mode = #tpu.pipeline_mode<synchronous>, transform_indices = @transform_21, window_bounds = array<i64: 128, 128>}, {pipeline_mode = #tpu.pipeline_mode<synchronous>, transform_indices = @transform_22, window_bounds = array<i64: 1, 128>}, {transform_indices = @transform_23, window_bounds = array<i64: 16, 128>}]} {
    %c0 = arith.constant 0 : index
    %c0_0 = arith.constant 0 : index
    %0 = vector.load %arg1[%c0, %c0_0] : memref<16x16xbf16, #tpu.memory_space<vmem>>, vector<16x16xbf16>
    %c0_1 = arith.constant 0 : index
    %c0_2 = arith.constant 0 : index
    %1 = vector.load %arg3[%c0_1, %c0_2] : memref<16x256xbf16, #tpu.memory_space<vmem>>, vector<16x256xbf16>
    %cst = arith.constant dense<0.000000e+00> : vector<16x256xf32>
    %2 = tpu.matmul %0, %1, %cst {dimension_numbers = #tpu.dot_dimension_numbers<[1], [0], [0], [1], [0, 0, 1, 1], [], []>} : vector<16x16xbf16>, vector<16x256xbf16>, vector<16x256xf32> -> vector<16x256xf32>
    %c0_3 = arith.constant 0 : index
    %c0_4 = arith.constant 0 : index
    %3 = vector.load %arg4[%c0_3, %c0_4] : memref<1x256xf32, #tpu.memory_space<vmem>>, vector<1x256xf32>
    %4 = vector.broadcast %3 : vector<1x256xf32> to vector<16x256xf32>
    %5 = arith.addf %2, %4 : vector<16x256xf32>
    %cst_5 = arith.constant 0.000000e+00 : f32
    %6 = vector.broadcast %cst_5 : f32 to vector<16x256xf32>
    %7 = arith.maximumf %5, %6 : vector<16x256xf32>
    %8 = arith.truncf %7 : vector<16x256xf32> to vector<16x256xbf16>
    %c0_6 = arith.constant 0 : index
    %c0_7 = arith.constant 0 : index
    %9 = vector.load %arg5[%c0_6, %c0_7] : memref<256x512xbf16, #tpu.memory_space<vmem>>, vector<256x512xbf16>
    %cst_8 = arith.constant dense<0.000000e+00> : vector<16x512xf32>
    %10 = tpu.matmul %8, %9, %cst_8 {dimension_numbers = #tpu.dot_dimension_numbers<[1], [0], [0], [1], [0, 0, 1, 1], [], []>} : vector<16x256xbf16>, vector<256x512xbf16>, vector<16x512xf32> -> vector<16x512xf32>
    %c0_9 = arith.constant 0 : index
    %c0_10 = arith.constant 0 : index
    %11 = vector.load %arg6[%c0_9, %c0_10] : memref<1x512xf32, #tpu.memory_space<vmem>>, vector<1x512xf32>
    %12 = vector.broadcast %11 : vector<1x512xf32> to vector<16x512xf32>
    %13 = arith.addf %10, %12 : vector<16x512xf32>
    %cst_11 = arith.constant 0.000000e+00 : f32
    %14 = vector.broadcast %cst_11 : f32 to vector<16x512xf32>
    %15 = arith.maximumf %13, %14 : vector<16x512xf32>
    %16 = arith.truncf %15 : vector<16x512xf32> to vector<16x512xbf16>
    %c0_12 = arith.constant 0 : index
    %c0_13 = arith.constant 0 : index
    %17 = vector.load %arg7[%c0_12, %c0_13] : memref<512x128xbf16, #tpu.memory_space<vmem>>, vector<512x128xbf16>
    %cst_14 = arith.constant dense<0.000000e+00> : vector<16x128xf32>
    %18 = tpu.matmul %16, %17, %cst_14 {dimension_numbers = #tpu.dot_dimension_numbers<[1], [0], [0], [1], [0, 0, 1, 1], [], []>} : vector<16x512xbf16>, vector<512x128xbf16>, vector<16x128xf32> -> vector<16x128xf32>
    %c0_15 = arith.constant 0 : index
    %c0_16 = arith.constant 0 : index
    %19 = vector.load %arg8[%c0_15, %c0_16] : memref<1x128xf32, #tpu.memory_space<vmem>>, vector<1x128xf32>
    %20 = vector.broadcast %19 : vector<1x128xf32> to vector<16x128xf32>
    %21 = arith.addf %18, %20 : vector<16x128xf32>
    %cst_17 = arith.constant 0.000000e+00 : f32
    %22 = vector.broadcast %cst_17 : f32 to vector<16x128xf32>
    %23 = arith.maximumf %21, %22 : vector<16x128xf32>
    %24 = arith.truncf %23 : vector<16x128xf32> to vector<16x128xbf16>
    %c0_18 = arith.constant 0 : index
    %c0_19 = arith.constant 0 : index
    %25 = vector.load %arg2[%c0_18, %c0_19] : memref<16x8xbf16, #tpu.memory_space<vmem>>, vector<16x8xbf16>
    %c0_20 = arith.constant 0 : index
    %c0_21 = arith.constant 0 : index
    %26 = vector.load %arg10[%c0_20, %c0_21] : memref<8x128xbf16, #tpu.memory_space<vmem>>, vector<8x128xbf16>
    %cst_22 = arith.constant dense<0.000000e+00> : vector<16x128xf32>
    %27 = tpu.matmul %25, %26, %cst_22 {dimension_numbers = #tpu.dot_dimension_numbers<[1], [0], [0], [1], [0, 0, 1, 1], [], []>} : vector<16x8xbf16>, vector<8x128xbf16>, vector<16x128xf32> -> vector<16x128xf32>
    %c0_23 = arith.constant 0 : index
    %c0_24 = arith.constant 0 : index
    %28 = vector.load %arg11[%c0_23, %c0_24] : memref<1x128xf32, #tpu.memory_space<vmem>>, vector<1x128xf32>
    %29 = vector.broadcast %28 : vector<1x128xf32> to vector<16x128xf32>
    %30 = arith.addf %27, %29 : vector<16x128xf32>
    %cst_25 = arith.constant 0.000000e+00 : f32
    %31 = vector.broadcast %cst_25 : f32 to vector<16x128xf32>
    %32 = arith.maximumf %30, %31 : vector<16x128xf32>
    %33 = arith.truncf %32 : vector<16x128xf32> to vector<16x128xbf16>
    %c0_26 = arith.constant 0 : index
    %c0_27 = arith.constant 0 : index
    %34 = vector.load %arg12[%c0_26, %c0_27] : memref<128x128xbf16, #tpu.memory_space<vmem>>, vector<128x128xbf16>
    %cst_28 = arith.constant dense<0.000000e+00> : vector<16x128xf32>
    %35 = tpu.matmul %33, %34, %cst_28 {dimension_numbers = #tpu.dot_dimension_numbers<[1], [0], [0], [1], [0, 0, 1, 1], [], []>} : vector<16x128xbf16>, vector<128x128xbf16>, vector<16x128xf32> -> vector<16x128xf32>
    %c0_29 = arith.constant 0 : index
    %c0_30 = arith.constant 0 : index
    %36 = vector.load %arg13[%c0_29, %c0_30] : memref<1x128xf32, #tpu.memory_space<vmem>>, vector<1x128xf32>
    %37 = vector.broadcast %36 : vector<1x128xf32> to vector<16x128xf32>
    %38 = arith.addf %35, %37 : vector<16x128xf32>
    %cst_31 = arith.constant 0.000000e+00 : f32
    %39 = vector.broadcast %cst_31 : f32 to vector<16x128xf32>
    %40 = arith.maximumf %38, %39 : vector<16x128xf32>
    %41 = arith.truncf %40 : vector<16x128xf32> to vector<16x128xbf16>
    %c0_32 = arith.constant 0 : index
    %c0_33 = arith.constant 0 : index
    %42 = vector.load %arg14[%c0_32, %c0_33] : memref<128x1024xbf16, #tpu.memory_space<vmem>>, vector<128x1024xbf16>
    %cst_34 = arith.constant dense<0.000000e+00> : vector<16x1024xf32>
    %43 = tpu.matmul %41, %42, %cst_34 {dimension_numbers = #tpu.dot_dimension_numbers<[1], [0], [0], [1], [0, 0, 1, 1], [], []>} : vector<16x128xbf16>, vector<128x1024xbf16>, vector<16x1024xf32> -> vector<16x1024xf32>
    %c0_35 = arith.constant 0 : index
    %c0_36 = arith.constant 0 : index
    %44 = vector.load %arg15[%c0_35, %c0_36] : memref<1x1024xf32, #tpu.memory_space<vmem>>, vector<1x1024xf32>
    %45 = vector.broadcast %44 : vector<1x1024xf32> to vector<16x1024xf32>
    %46 = arith.addf %43, %45 : vector<16x1024xf32>
    %cst_37 = arith.constant 0.000000e+00 : f32
    %47 = vector.broadcast %cst_37 : f32 to vector<16x1024xf32>
    %48 = arith.maximumf %46, %47 : vector<16x1024xf32>
    %49 = arith.truncf %48 : vector<16x1024xf32> to vector<16x1024xbf16>
    %c0_38 = arith.constant 0 : index
    %c0_39 = arith.constant 0 : index
    %50 = vector.load %arg16[%c0_38, %c0_39] : memref<1024x512xbf16, #tpu.memory_space<vmem>>, vector<1024x512xbf16>
    %cst_40 = arith.constant dense<0.000000e+00> : vector<16x512xf32>
    %51 = tpu.matmul %49, %50, %cst_40 {dimension_numbers = #tpu.dot_dimension_numbers<[1], [0], [0], [1], [0, 0, 1, 1], [], []>} : vector<16x1024xbf16>, vector<1024x512xbf16>, vector<16x512xf32> -> vector<16x512xf32>
    %c0_41 = arith.constant 0 : index
    %c0_42 = arith.constant 0 : index
    %52 = vector.load %arg17[%c0_41, %c0_42] : memref<1x512xf32, #tpu.memory_space<vmem>>, vector<1x512xf32>
    %53 = vector.broadcast %52 : vector<1x512xf32> to vector<16x512xf32>
    %54 = arith.addf %51, %53 : vector<16x512xf32>
    %cst_43 = arith.constant 0.000000e+00 : f32
    %55 = vector.broadcast %cst_43 : f32 to vector<16x512xf32>
    %56 = arith.maximumf %54, %55 : vector<16x512xf32>
    %57 = arith.truncf %56 : vector<16x512xf32> to vector<16x512xbf16>
    %c0_44 = arith.constant 0 : index
    %c0_45 = arith.constant 0 : index
    %58 = vector.load %arg9[%c0_44, %c0_45] : memref<128x128xbf16, #tpu.memory_space<vmem>>, vector<128x128xbf16>
    %cst_46 = arith.constant dense<0.000000e+00> : vector<16x128xf32>
    %59 = tpu.matmul %24, %58, %cst_46 {dimension_numbers = #tpu.dot_dimension_numbers<[1], [0], [0], [1], [0, 0, 1, 1], [], []>} : vector<16x128xbf16>, vector<128x128xbf16>, vector<16x128xf32> -> vector<16x128xf32>
    %c0_47 = arith.constant 0 : index
    %c0_48 = arith.constant 0 : index
    %60 = vector.load %arg18[%c0_47, %c0_48] : memref<512x128xbf16, #tpu.memory_space<vmem>>, vector<512x128xbf16>
    %cst_49 = arith.constant dense<0.000000e+00> : vector<16x128xf32>
    %61 = tpu.matmul %57, %60, %cst_49 {dimension_numbers = #tpu.dot_dimension_numbers<[1], [0], [0], [1], [0, 0, 1, 1], [], []>} : vector<16x512xbf16>, vector<512x128xbf16>, vector<16x128xf32> -> vector<16x128xf32>
    %62 = arith.addf %59, %61 : vector<16x128xf32>
    %c0_50 = arith.constant 0 : index
    %c0_51 = arith.constant 0 : index
    %63 = vector.load %arg19[%c0_50, %c0_51] : memref<1x128xf32, #tpu.memory_space<vmem>>, vector<1x128xf32>
    %64 = vector.broadcast %63 : vector<1x128xf32> to vector<16x128xf32>
    %65 = arith.addf %62, %64 : vector<16x128xf32>
    %cst_52 = arith.constant 0.000000e+00 : f32
    %66 = vector.broadcast %cst_52 : f32 to vector<16x128xf32>
    %67 = arith.maximumf %65, %66 : vector<16x128xf32>
    %68 = arith.truncf %67 : vector<16x128xf32> to vector<16x128xbf16>
    %c0_53 = arith.constant 0 : index
    %c0_54 = arith.constant 0 : index
    %69 = vector.load %arg20[%c0_53, %c0_54] : memref<128x128xbf16, #tpu.memory_space<vmem>>, vector<128x128xbf16>
    %cst_55 = arith.constant dense<0.000000e+00> : vector<16x128xf32>
    %70 = tpu.matmul %68, %69, %cst_55 {dimension_numbers = #tpu.dot_dimension_numbers<[1], [0], [0], [1], [0, 0, 1, 1], [], []>} : vector<16x128xbf16>, vector<128x128xbf16>, vector<16x128xf32> -> vector<16x128xf32>
    %c0_56 = arith.constant 0 : index
    %c0_57 = arith.constant 0 : index
    %71 = vector.load %arg21[%c0_56, %c0_57] : memref<1x128xf32, #tpu.memory_space<vmem>>, vector<1x128xf32>
    %72 = vector.broadcast %71 : vector<1x128xf32> to vector<16x128xf32>
    %73 = arith.addf %70, %72 : vector<16x128xf32>
    %cst_58 = arith.constant 0.000000e+00 : f32
    %74 = vector.broadcast %cst_58 : f32 to vector<16x128xf32>
    %75 = arith.maximumf %73, %74 : vector<16x128xf32>
    %76 = arith.truncf %75 : vector<16x128xf32> to vector<16x128xbf16>
    %c0_59 = arith.constant 0 : index
    %c0_60 = arith.constant 0 : index
    %77 = vector.load %arg22[%c0_59, %c0_60] : memref<128x128xbf16, #tpu.memory_space<vmem>>, vector<128x128xbf16>
    %cst_61 = arith.constant dense<0.000000e+00> : vector<16x128xf32>
    %78 = tpu.matmul %76, %77, %cst_61 {dimension_numbers = #tpu.dot_dimension_numbers<[1], [0], [0], [1], [0, 0, 1, 1], [], []>} : vector<16x128xbf16>, vector<128x128xbf16>, vector<16x128xf32> -> vector<16x128xf32>
    %c0_62 = arith.constant 0 : index
    %c0_63 = arith.constant 0 : index
    %79 = vector.load %arg23[%c0_62, %c0_63] : memref<1x128xf32, #tpu.memory_space<vmem>>, vector<1x128xf32>
    %80 = vector.broadcast %79 : vector<1x128xf32> to vector<16x128xf32>
    %81 = arith.addf %78, %80 : vector<16x128xf32>
    %82 = arith.truncf %81 : vector<16x128xf32> to vector<16x128xbf16>
    %c0_64 = arith.constant 0 : index
    %c0_65 = arith.constant 0 : index
    %83 = vector.load %arg24[%c0_64, %c0_65] : memref<16x128xbf16, #tpu.memory_space<vmem>>, vector<16x128xbf16>
    tpu.vector_store %arg24[%c0_64, %c0_65], %82 {strides = array<i32>} : memref<16x128xbf16, #tpu.memory_space<vmem>>, vector<16x128xbf16>,
    return
  }
  func.func @transform_0(%arg0: i32) -> (i32, i32) {
    %c0_i32 = arith.constant 0 : i32
    %c0_i32_0 = arith.constant 0 : i32
    return %arg0, %c0_i32 : i32, i32
  }
  func.func @transform_1(%arg0: i32) -> (i32, i32) {
    %c0_i32 = arith.constant 0 : i32
    %c0_i32_0 = arith.constant 0 : i32
    return %arg0, %c0_i32 : i32, i32
  }
  func.func @transform_2(%arg0: i32) -> (i32, i32) {
    %c0_i32 = arith.constant 0 : i32
    %c0_i32_0 = arith.constant 0 : i32
    %c0_i32_1 = arith.constant 0 : i32
    return %c0_i32, %c0_i32_0 : i32, i32
  }
  func.func @transform_3(%arg0: i32) -> (i32, i32) {
    %c0_i32 = arith.constant 0 : i32
    %c0_i32_0 = arith.constant 0 : i32
    %c0_i32_1 = arith.constant 0 : i32
    return %c0_i32, %c0_i32_0 : i32, i32
  }
  func.func @transform_4(%arg0: i32) -> (i32, i32) {
    %c0_i32 = arith.constant 0 : i32
    %c0_i32_0 = arith.constant 0 : i32
    %c0_i32_1 = arith.constant 0 : i32
    return %c0_i32, %c0_i32_0 : i32, i32
  }
  func.func @transform_5(%arg0: i32) -> (i32, i32) {
    %c0_i32 = arith.constant 0 : i32
    %c0_i32_0 = arith.constant 0 : i32
    %c0_i32_1 = arith.constant 0 : i32
    return %c0_i32, %c0_i32_0 : i32, i32
  }
  func.func @transform_6(%arg0: i32) -> (i32, i32) {
    %c0_i32 = arith.constant 0 : i32
    %c0_i32_0 = arith.constant 0 : i32
    %c0_i32_1 = arith.constant 0 : i32
    return %c0_i32, %c0_i32_0 : i32, i32
  }
  func.func @transform_7(%arg0: i32) -> (i32, i32) {
    %c0_i32 = arith.constant 0 : i32
    %c0_i32_0 = arith.constant 0 : i32
    %c0_i32_1 = arith.constant 0 : i32
    return %c0_i32, %c0_i32_0 : i32, i32
  }
  func.func @transform_8(%arg0: i32) -> (i32, i32) {
    %c0_i32 = arith.constant 0 : i32
    %c0_i32_0 = arith.constant 0 : i32
    %c0_i32_1 = arith.constant 0 : i32
    return %c0_i32, %c0_i32_0 : i32, i32
  }
  func.func @transform_9(%arg0: i32) -> (i32, i32) {
    %c0_i32 = arith.constant 0 : i32
    %c0_i32_0 = arith.constant 0 : i32
    %c0_i32_1 = arith.constant 0 : i32
    return %c0_i32, %c0_i32_0 : i32, i32
  }
  func.func @transform_10(%arg0: i32) -> (i32, i32) {
    %c0_i32 = arith.constant 0 : i32
    %c0_i32_0 = arith.constant 0 : i32
    %c0_i32_1 = arith.constant 0 : i32
    return %c0_i32, %c0_i32_0 : i32, i32
  }
  func.func @transform_11(%arg0: i32) -> (i32, i32) {
    %c0_i32 = arith.constant 0 : i32
    %c0_i32_0 = arith.constant 0 : i32
    %c0_i32_1 = arith.constant 0 : i32
    return %c0_i32, %c0_i32_0 : i32, i32
  }
  func.func @transform_12(%arg0: i32) -> (i32, i32) {
    %c0_i32 = arith.constant 0 : i32
    %c0_i32_0 = arith.constant 0 : i32
    %c0_i32_1 = arith.constant 0 : i32
    return %c0_i32, %c0_i32_0 : i32, i32
  }
  func.func @transform_13(%arg0: i32) -> (i32, i32) {
    %c0_i32 = arith.constant 0 : i32
    %c0_i32_0 = arith.constant 0 : i32
    %c0_i32_1 = arith.constant 0 : i32
    return %c0_i32, %c0_i32_0 : i32, i32
  }
  func.func @transform_14(%arg0: i32) -> (i32, i32) {
    %c0_i32 = arith.constant 0 : i32
    %c0_i32_0 = arith.constant 0 : i32
    %c0_i32_1 = arith.constant 0 : i32
    return %c0_i32, %c0_i32_0 : i32, i32
  }
  func.func @transform_15(%arg0: i32) -> (i32, i32) {
    %c0_i32 = arith.constant 0 : i32
    %c0_i32_0 = arith.constant 0 : i32
    %c0_i32_1 = arith.constant 0 : i32
    return %c0_i32, %c0_i32_0 : i32, i32
  }
  func.func @transform_16(%arg0: i32) -> (i32, i32) {
    %c0_i32 = arith.constant 0 : i32
    %c0_i32_0 = arith.constant 0 : i32
    %c0_i32_1 = arith.constant 0 : i32
    return %c0_i32, %c0_i32_0 : i32, i32
  }
  func.func @transform_17(%arg0: i32) -> (i32, i32) {
    %c0_i32 = arith.constant 0 : i32
    %c0_i32_0 = arith.constant 0 : i32
    %c0_i32_1 = arith.constant 0 : i32
    return %c0_i32, %c0_i32_0 : i32, i32
  }
  func.func @transform_18(%arg0: i32) -> (i32, i32) {
    %c0_i32 = arith.constant 0 : i32
    %c0_i32_0 = arith.constant 0 : i32
    %c0_i32_1 = arith.constant 0 : i32
    return %c0_i32, %c0_i32_0 : i32, i32
  }
  func.func @transform_19(%arg0: i32) -> (i32, i32) {
    %c0_i32 = arith.constant 0 : i32
    %c0_i32_0 = arith.constant 0 : i32
    %c0_i32_1 = arith.constant 0 : i32
    return %c0_i32, %c0_i32_0 : i32, i32
  }
  func.func @transform_20(%arg0: i32) -> (i32, i32) {
    %c0_i32 = arith.constant 0 : i32
    %c0_i32_0 = arith.constant 0 : i32
    %c0_i32_1 = arith.constant 0 : i32
    return %c0_i32, %c0_i32_0 : i32, i32
  }
  func.func @transform_21(%arg0: i32) -> (i32, i32) {
    %c0_i32 = arith.constant 0 : i32
    %c0_i32_0 = arith.constant 0 : i32
    %c0_i32_1 = arith.constant 0 : i32
    return %c0_i32, %c0_i32_0 : i32, i32
  }
  func.func @transform_22(%arg0: i32) -> (i32, i32) {
    %c0_i32 = arith.constant 0 : i32
    %c0_i32_0 = arith.constant 0 : i32
    %c0_i32_1 = arith.constant 0 : i32
    return %c0_i32, %c0_i32_0 : i32, i32
  }
  func.func @transform_23(%arg0: i32) -> (i32, i32) {
    %c0_i32 = arith.constant 0 : i32
    %c0_i32_0 = arith.constant 0 : i32
    return %arg0, %c0_i32 : i32, i32
  }
}

</mosaic_0001>

<llo_original>
// kernel: tpu_custom_call.1
$region0: #{tpu_custom_call.1}
  #allocation0 [shape = 'u32[]', space=smem, size = 0x4, offset = 0x4, fixed_abs, tag = 'smem constant byte address 0x4 - core index']
  #allocation1 [shape = 'u32[72,128]{1,0:T(1,128)}', space=vmem, size = 0x9000, scoped, tag = 'internal scratch']
  %s0 = inlined_call_operand.vmem [shape: bf16[16,16], index: 0, kind: input, shape index: {}]
  %s1 = inlined_call_operand.vmem [shape: bf16[16,8], index: 1, kind: input, shape index: {}]
  %s2 = inlined_call_operand.hbm [shape: bf16[16,256], index: 2, kind: input, shape index: {}]
  %s3 = inlined_call_operand.hbm [shape: f32[1,256], index: 3, kind: input, shape index: {}]
  %s4 = inlined_call_operand.hbm [shape: bf16[256,512], index: 4, kind: input, shape index: {}]
  %s5 = inlined_call_operand.hbm [shape: f32[1,512], index: 5, kind: input, shape index: {}]
  %s6 = inlined_call_operand.hbm [shape: bf16[512,128], index: 6, kind: input, shape index: {}]
  %s7 = inlined_call_operand.hbm [shape: f32[1,128], index: 7, kind: input, shape index: {}]
  %s8 = inlined_call_operand.hbm [shape: bf16[128,128], index: 8, kind: input, shape index: {}]
  %s9 = inlined_call_operand.vmem [shape: bf16[8,128], index: 9, kind: input, shape index: {}]
  %s10 = inlined_call_operand.hbm [shape: f32[1,128], index: 10, kind: input, shape index: {}]
  %s11 = inlined_call_operand.hbm [shape: bf16[128,128], index: 11, kind: input, shape index: {}]
  %s12 = inlined_call_operand.hbm [shape: f32[1,128], index: 12, kind: input, shape index: {}]
  %s13 = inlined_call_operand.hbm [shape: bf16[128,1024], index: 13, kind: input, shape index: {}]
  %s14 = inlined_call_operand.vmem [shape: f32[1,1024], index: 14, kind: input, shape index: {}]
  %s15 = inlined_call_operand.hbm [shape: bf16[1024,512], index: 15, kind: input, shape index: {}]
  %s16 = inlined_call_operand.vmem [shape: f32[1,512], index: 16, kind: input, shape index: {}]
  %s17 = inlined_call_operand.hbm [shape: bf16[512,128], index: 17, kind: input, shape index: {}]
  %s18 = inlined_call_operand.vmem [shape: f32[1,128], index: 18, kind: input, shape index: {}]
  %s19 = inlined_call_operand.hbm [shape: bf16[128,128], index: 19, kind: input, shape index: {}]
  %s20 = inlined_call_operand.vmem [shape: f32[1,128], index: 20, kind: input, shape index: {}]
  %s21 = inlined_call_operand.hbm [shape: bf16[128,128], index: 21, kind: input, shape index: {}]
  %s22 = inlined_call_operand.vmem [shape: f32[1,128], index: 22, kind: input, shape index: {}]
  %s23 = inlined_call_operand.hbm [shape: bf16[16,128], index: 23, kind: output, shape index: {}]
  %s24 = sld [smem:[#allocation0]]
  $region162: #{tpu_custom_call.1} parent=0
    _
  %s26 = ssub.s32 1, %s24
  %s27 = scalar_select 0, %s26, %s24
  $region1: #{tpu_custom_call.1} parent=0
    #allocation2 [shape = 'u8[8192]{0}', space=vmem, size = 0x2000, scoped, tag = 'input window, operand 2, single buffered']
    #allocation3 [shape = 's32[1]{0}', space=sflag, size = 0x4, scoped, tag = 'scoped memory for tpu_custom_call.1']
    #allocation4 [shape = 's32[1]{0}', space=sflag, size = 0x4, scoped, tag = 'scoped memory for tpu_custom_call.1']
    #allocation5 [shape = 'u8[1024]{0}', space=vmem, size = 0x400, scoped, tag = 'input window, operand 3, single buffered']
    #allocation6 [shape = 's32[1]{0}', space=sflag, size = 0x4, scoped, tag = 'scoped memory for tpu_custom_call.1']
    #allocation7 [shape = 'u8[262144]{0}', space=vmem, size = 0x40000, scoped, tag = 'input window, operand 4, single buffered']
    #allocation8 [shape = 'u8[2048]{0}', space=vmem, size = 0x800, scoped, tag = 'input window, operand 5, single buffered']
    #allocation9 [shape = 's32[1]{0}', space=sflag, size = 0x4, scoped, tag = 'scoped memory for tpu_custom_call.1']
    #allocation10 [shape = 'u8[131072]{0}', space=vmem, size = 0x20000, scoped, tag = 'input window, operand 6, single buffered']
    #allocation11 [shape = 'u8[512]{0}', space=vmem, size = 0x400, scoped, tag = 'input window, operand 7, single buffered']
    #allocation12 [shape = 's32[1]{0}', space=sflag, size = 0x4, scoped, tag = 'scoped memory for tpu_custom_call.1']
    #allocation13 [shape = 'u8[32768]{0}', space=vmem, size = 0x8000, scoped, tag = 'input window, operand 8, single buffered']
    #allocation14 [shape = 'u8[512]{0}', space=vmem, size = 0x400, scoped, tag = 'input window, operand 10, single buffered']
    #allocation15 [shape = 's32[1]{0}', space=sflag, size = 0x4, scoped, tag = 'scoped memory for tpu_custom_call.1']
    #allocation16 [shape = 'u8[32768]{0}', space=vmem, size = 0x8000, scoped, tag = 'input window, operand 11, single buffered']
    #allocation17 [shape = 'u8[512]{0}', space=vmem, size = 0x400, scoped, tag = 'input window, operand 12, single buffered']
    #allocation18 [shape = 's32[1]{0}', space=sflag, size = 0x4, scoped, tag = 'scoped memory for tpu_custom_call.1']
    #allocation19 [shape = 'u8[262144]{0}', space=vmem, size = 0x40000, scoped, tag = 'input window, operand 13, single buffered']
    #allocation20 [shape = 'u8[1048576]{0}', space=vmem, size = 0x100000, scoped, tag = 'input window, operand 15, single buffered']
    #allocation21 [shape = 's32[1]{0}', space=sflag, size = 0x4, scoped, tag = 'scoped memory for tpu_custom_call.1']
    #allocation22 [shape = 'u8[131072]{0}', space=vmem, size = 0x20000, scoped, tag = 'input window, operand 17, single buffered']
    #allocation23 [shape = 'u8[32768]{0}', space=vmem, size = 0x8000, scoped, tag = 'input window, operand 19, single buffered']
    #allocation24 [shape = 's32[1]{0}', space=sflag, size = 0x4, scoped, tag = 'scoped memory for tpu_custom_call.1']
    #allocation25 [shape = 'u8[32768]{0}', space=vmem, size = 0x8000, scoped, tag = 'input window, operand 21, single buffered']
    #allocation26 [shape = 'u8[4096]{0}', space=vmem, size = 0x1000, scoped, tag = 'output window, operand 0, single buffered']
    %28 = vsyncpa [#allocation3], 0
    %29 = vsyncpa [#allocation6], 0
    %30 = vsyncpa [#allocation9], 0
    %31 = vsyncpa [#allocation12], 0
    %32 = vsyncpa [#allocation15], 0
    %33 = vsyncpa [#allocation18], 0
    %34 = vsyncpa [#allocation21], 0
    %35 = vsyncpa [#allocation24], 0
    %36 = vsyncpa [#allocation4], 0
    // Predicated region
    $region2: #{tpu_custom_call.1} parent=1 // pred_check
      _
    $region3: #{tpu_custom_call.1} parent=1 // pred_check_branch
      %38 = sbr.rel (0) target = $region5
    $region4: #{tpu_custom_call.1} parent=1 // pred_region
      _
    $region5: #{tpu_custom_call.1} parent=1 // pred_fallthru
      _
    // Predicated region
    $region6: #{tpu_custom_call.1} parent=1 // pred_check
      _
    $region7: #{tpu_custom_call.1} parent=1 // pred_check_branch
      %40 = sbr.rel (0) target = $region9
    $region8: #{tpu_custom_call.1} parent=1 // pred_region
      _
    $region9: #{tpu_custom_call.1} parent=1 // pred_fallthru
      _
    // Predicated region
    $region10: #{tpu_custom_call.1} parent=1 // pred_check
      _
    $region11: #{tpu_custom_call.1} parent=1 // pred_check_branch
      %42 = sbr.rel (0) target = $region13
    $region12: #{tpu_custom_call.1} parent=1 // pred_region
      %44 = vsyncadd [#allocation3], 0
      %s45 = sshll.u32 %s2, 4
      %s46 = int_to_ptr.hbm [resolvable:$true] %s45
      %s47 = sshll.u32 [#allocation2], 4
      %s48 = int_to_ptr.vmem [resolvable:$true] %s47
      %53 = dma.hbm_to_vmem [thread:$0]  %s46, 256, %s48, [#allocation3], 128, 128, 8
    $region13: #{tpu_custom_call.1} parent=1 // pred_fallthru
      _
    // Predicated region
    $region14: #{tpu_custom_call.1} parent=1 // pred_check
      _
    $region15: #{tpu_custom_call.1} parent=1 // pred_check_branch
      %55 = sbr.rel (0) target = $region17
    $region16: #{tpu_custom_call.1} parent=1 // pred_region
      %57 = vsyncadd [#allocation6], 0
      %s59 = sshll.u32 %s3, 4
      %s60 = int_to_ptr.hbm [resolvable:$true] %s59
      %s61 = sshll.u32 [#allocation5], 4
      %s62 = int_to_ptr.vmem [resolvable:$true] %s61
      %64 = dma.hbm_to_vmem [thread:$0]  %s60, 32, %s62, [#allocation6]
    $region17: #{tpu_custom_call.1} parent=1 // pred_fallthru
      _
    // Predicated region
    $region18: #{tpu_custom_call.1} parent=1 // pred_check
      _
    $region19: #{tpu_custom_call.1} parent=1 // pred_check_branch
      %66 = sbr.rel (0) target = $region21
    $region20: #{tpu_custom_call.1} parent=1 // pred_region
      %68 = vsyncadd [#allocation6], 0
      %s69 = sshll.u32 %s4, 4
      %s70 = int_to_ptr.hbm [resolvable:$true] %s69
      %s71 = sshll.u32 [#allocation7], 4
      %s72 = int_to_ptr.vmem [resolvable:$true] %s71
      %77 = dma.hbm_to_vmem [thread:$0]  %s70, 8192, %s72, [#allocation6], 256, 256, 16
    $region21: #{tpu_custom_call.1} parent=1 // pred_fallthru
      _
    // Predicated region
    $region22: #{tpu_custom_call.1} parent=1 // pred_check
      _
    $region23: #{tpu_custom_call.1} parent=1 // pred_check_branch
      %79 = sbr.rel (0) target = $region25
    $region24: #{tpu_custom_call.1} parent=1 // pred_region
      %81 = vsyncadd [#allocation9], 0
      %s83 = sshll.u32 %s5, 4
      %s84 = int_to_ptr.hbm [resolvable:$true] %s83
      %s85 = sshll.u32 [#allocation8], 4
      %s86 = int_to_ptr.vmem [resolvable:$true] %s85
      %88 = dma.hbm_to_vmem [thread:$0]  %s84, 64, %s86, [#allocation9]
    $region25: #{tpu_custom_call.1} parent=1 // pred_fallthru
      _
    // Predicated region
    $region26: #{tpu_custom_call.1} parent=1 // pred_check
      _
    $region27: #{tpu_custom_call.1} parent=1 // pred_check_branch
      %90 = sbr.rel (0) target = $region29
    $region28: #{tpu_custom_call.1} parent=1 // pred_region
      %92 = vsyncadd [#allocation9], 0
      %s93 = sshll.u32 %s6, 4
      %s94 = int_to_ptr.hbm [resolvable:$true] %s93
      %s95 = sshll.u32 [#allocation10], 4
      %s96 = int_to_ptr.vmem [resolvable:$true] %s95
      %101 = dma.hbm_to_vmem [thread:$0]  %s94, 4096, %s96, [#allocation9], 64, 64, 4
    $region29: #{tpu_custom_call.1} parent=1 // pred_fallthru
      _
    // Predicated region
    $region30: #{tpu_custom_call.1} parent=1 // pred_check
      _
    $region31: #{tpu_custom_call.1} parent=1 // pred_check_branch
      %103 = sbr.rel (0) target = $region33
    $region32: #{tpu_custom_call.1} parent=1 // pred_region
      %105 = vsyncadd [#allocation12], 0
      %s107 = sshll.u32 %s7, 4
      %s108 = int_to_ptr.hbm [resolvable:$true] %s107
      %s109 = sshll.u32 [#allocation11], 4
      %s110 = int_to_ptr.vmem [resolvable:$true] %s109
      %112 = dma.hbm_to_vmem [thread:$0]  %s108, 16, %s110, [#allocation12]
    $region33: #{tpu_custom_call.1} parent=1 // pred_fallthru
      _
    // Predicated region
    $region34: #{tpu_custom_call.1} parent=1 // pred_check
      _
    $region35: #{tpu_custom_call.1} parent=1 // pred_check_branch
      %114 = sbr.rel (0) target = $region37
    $region36: #{tpu_custom_call.1} parent=1 // pred_region
      %116 = vsyncadd [#allocation12], 0
      %s117 = sshll.u32 %s8, 4
      %s118 = int_to_ptr.hbm [resolvable:$true] %s117
      %s119 = sshll.u32 [#allocation13], 4
      %s120 = int_to_ptr.vmem [resolvable:$true] %s119
      %125 = dma.hbm_to_vmem [thread:$0]  %s118, 1024, %s120, [#allocation12], 64, 64, 4
    $region37: #{tpu_custom_call.1} parent=1 // pred_fallthru
      _
    // Predicated region
    $region38: #{tpu_custom_call.1} parent=1 // pred_check
      _
    $region39: #{tpu_custom_call.1} parent=1 // pred_check_branch
      %127 = sbr.rel (0) target = $region41
    $region40: #{tpu_custom_call.1} parent=1 // pred_region
      _
    $region41: #{tpu_custom_call.1} parent=1 // pred_fallthru
      _
    // Predicated region
    $region42: #{tpu_custom_call.1} parent=1 // pred_check
      _
    $region43: #{tpu_custom_call.1} parent=1 // pred_check_branch
      %129 = sbr.rel (0) target = $region45
    $region44: #{tpu_custom_call.1} parent=1 // pred_region
      %131 = vsyncadd [#allocation15], 0
      %s133 = sshll.u32 %s10, 4
      %s134 = int_to_ptr.hbm [resolvable:$true] %s133
      %s135 = sshll.u32 [#allocation14], 4
      %s136 = int_to_ptr.vmem [resolvable:$true] %s135
      %138 = dma.hbm_to_vmem [thread:$0]  %s134, 16, %s136, [#allocation15]
    $region45: #{tpu_custom_call.1} parent=1 // pred_fallthru
      _
    // Predicated region
    $region46: #{tpu_custom_call.1} parent=1 // pred_check
      _
    $region47: #{tpu_custom_call.1} parent=1 // pred_check_branch
      %140 = sbr.rel (0) target = $region49
    $region48: #{tpu_custom_call.1} parent=1 // pred_region
      %142 = vsyncadd [#allocation15], 0
      %s143 = sshll.u32 %s11, 4
      %s144 = int_to_ptr.hbm [resolvable:$true] %s143
      %s145 = sshll.u32 [#allocation16], 4
      %s146 = int_to_ptr.vmem [resolvable:$true] %s145
      %151 = dma.hbm_to_vmem [thread:$0]  %s144, 1024, %s146, [#allocation15], 64, 64, 4
    $region49: #{tpu_custom_call.1} parent=1 // pred_fallthru
      _
    // Predicated region
    $region50: #{tpu_custom_call.1} parent=1 // pred_check
      _
    $region51: #{tpu_custom_call.1} parent=1 // pred_check_branch
      %153 = sbr.rel (0) target = $region53
    $region52: #{tpu_custom_call.1} parent=1 // pred_region
      %155 = vsyncadd [#allocation18], 0
      %s157 = sshll.u32 %s12, 4
      %s158 = int_to_ptr.hbm [resolvable:$true] %s157
      %s159 = sshll.u32 [#allocation17], 4
      %s160 = int_to_ptr.vmem [resolvable:$true] %s159
      %162 = dma.hbm_to_vmem [thread:$0]  %s158, 16, %s160, [#allocation18]
    $region53: #{tpu_custom_call.1} parent=1 // pred_fallthru
      _
    // Predicated region
    $region54: #{tpu_custom_call.1} parent=1 // pred_check
      _
    $region55: #{tpu_custom_call.1} parent=1 // pred_check_branch
      %164 = sbr.rel (0) target = $region57
    $region56: #{tpu_custom_call.1} parent=1 // pred_region
      %166 = vsyncadd [#allocation18], 0
      %s167 = sshll.u32 %s13, 4
      %s168 = int_to_ptr.hbm [resolvable:$true] %s167
      %s169 = sshll.u32 [#allocation19], 4
      %s170 = int_to_ptr.vmem [resolvable:$true] %s169
      %175 = dma.hbm_to_vmem [thread:$0]  %s168, 8192, %s170, [#allocation18], 512, 512, 32
    $region57: #{tpu_custom_call.1} parent=1 // pred_fallthru
      _
    // Predicated region
    $region58: #{tpu_custom_call.1} parent=1 // pred_check
      _
    $region59: #{tpu_custom_call.1} parent=1 // pred_check_branch
      %177 = sbr.rel (0) target = $region61
    $region60: #{tpu_custom_call.1} parent=1 // pred_region
      _
    $region61: #{tpu_custom_call.1} parent=1 // pred_fallthru
      _
    // Predicated region
    $region62: #{tpu_custom_call.1} parent=1 // pred_check
      _
    $region63: #{tpu_custom_call.1} parent=1 // pred_check_branch
      %179 = sbr.rel (0) target = $region65
    $region64: #{tpu_custom_call.1} parent=1 // pred_region
      %181 = vsyncadd [#allocation21], 0
      %s182 = sshll.u32 %s15, 4
      %s183 = int_to_ptr.hbm [resolvable:$true] %s182
      %s184 = sshll.u32 [#allocation20], 4
      %s185 = int_to_ptr.vmem [resolvable:$true] %s184
      %190 = dma.hbm_to_vmem [thread:$0]  %s183, 32768, %s185, [#allocation21], 256, 256, 16
    $region65: #{tpu_custom_call.1} parent=1 // pred_fallthru
      _
    // Predicated region
    $region66: #{tpu_custom_call.1} parent=1 // pred_check
      _
    $region67: #{tpu_custom_call.1} parent=1 // pred_check_branch
      %192 = sbr.rel (0) target = $region69
    $region68: #{tpu_custom_call.1} parent=1 // pred_region
      _
    $region69: #{tpu_custom_call.1} parent=1 // pred_fallthru
      _
    // Predicated region
    $region70: #{tpu_custom_call.1} parent=1 // pred_check
      _
    $region71: #{tpu_custom_call.1} parent=1 // pred_check_branch
      %194 = sbr.rel (0) target = $region73
    $region72: #{tpu_custom_call.1} parent=1 // pred_region
      %196 = vsyncadd [#allocation21], 0
      %s197 = sshll.u32 %s17, 4
      %s198 = int_to_ptr.hbm [resolvable:$true] %s197
      %s199 = sshll.u32 [#allocation22], 4
      %s200 = int_to_ptr.vmem [resolvable:$true] %s199
      %205 = dma.hbm_to_vmem [thread:$0]  %s198, 4096, %s200, [#allocation21], 64, 64, 4
    $region73: #{tpu_custom_call.1} parent=1 // pred_fallthru
      _
    // Predicated region
    $region74: #{tpu_custom_call.1} parent=1 // pred_check
      _
    $region75: #{tpu_custom_call.1} parent=1 // pred_check_branch
      %207 = sbr.rel (0) target = $region77
    $region76: #{tpu_custom_call.1} parent=1 // pred_region
      _
    $region77: #{tpu_custom_call.1} parent=1 // pred_fallthru
      _
    // Predicated region
    $region78: #{tpu_custom_call.1} parent=1 // pred_check
      _
    $region79: #{tpu_custom_call.1} parent=1 // pred_check_branch
      %209 = sbr.rel (0) target = $region81
    $region80: #{tpu_custom_call.1} parent=1 // pred_region
      %211 = vsyncadd [#allocation24], 0
      %s212 = sshll.u32 %s19, 4
      %s213 = int_to_ptr.hbm [resolvable:$true] %s212
      %s214 = sshll.u32 [#allocation23], 4
      %s215 = int_to_ptr.vmem [resolvable:$true] %s214
      %220 = dma.hbm_to_vmem [thread:$0]  %s213, 1024, %s215, [#allocation24], 64, 64, 4
    $region81: #{tpu_custom_call.1} parent=1 // pred_fallthru
      _
    // Predicated region
    $region82: #{tpu_custom_call.1} parent=1 // pred_check
      _
    $region83: #{tpu_custom_call.1} parent=1 // pred_check_branch
      %222 = sbr.rel (0) target = $region85
    $region84: #{tpu_custom_call.1} parent=1 // pred_region
      _
    $region85: #{tpu_custom_call.1} parent=1 // pred_fallthru
      _
    // Predicated region
    $region86: #{tpu_custom_call.1} parent=1 // pred_check
      _
    $region87: #{tpu_custom_call.1} parent=1 // pred_check_branch
      %224 = sbr.rel (0) target = $region89
    $region88: #{tpu_custom_call.1} parent=1 // pred_region
      %226 = vsyncadd [#allocation24], 0
      %s227 = sshll.u32 %s21, 4
      %s228 = int_to_ptr.hbm [resolvable:$true] %s227
      %s229 = sshll.u32 [#allocation25], 4
      %s230 = int_to_ptr.vmem [resolvable:$true] %s229
      %235 = dma.hbm_to_vmem [thread:$0]  %s228, 1024, %s230, [#allocation24], 64, 64, 4
    $region89: #{tpu_custom_call.1} parent=1 // pred_fallthru
      _
    // Predicated region
    $region90: #{tpu_custom_call.1} parent=1 // pred_check
      _
    $region91: #{tpu_custom_call.1} parent=1 // pred_check_branch
      %237 = sbr.rel (0) target = $region93
    $region92: #{tpu_custom_call.1} parent=1 // pred_region
      _
    $region93: #{tpu_custom_call.1} parent=1 // pred_fallthru
      _
    // Predicated region
    $region94: #{tpu_custom_call.1} parent=1 // pred_check
      _
    $region95: #{tpu_custom_call.1} parent=1 // pred_check_branch
      %239 = sbr.rel (0) target = $region97
    $region96: #{tpu_custom_call.1} parent=1 // pred_region
      %241 = dma.done [#allocation3], 256
    $region97: #{tpu_custom_call.1} parent=1 // pred_fallthru
      _
    // Predicated region
    $region98: #{tpu_custom_call.1} parent=1 // pred_check
      _
    $region99: #{tpu_custom_call.1} parent=1 // pred_check_branch
      %243 = sbr.rel (0) target = $region101
    $region100: #{tpu_custom_call.1} parent=1 // pred_region
      %245 = dma.done [#allocation6], 32
    $region101: #{tpu_custom_call.1} parent=1 // pred_fallthru
      _
    // Predicated region
    $region102: #{tpu_custom_call.1} parent=1 // pred_check
      _
    $region103: #{tpu_custom_call.1} parent=1 // pred_check_branch
      %247 = sbr.rel (0) target = $region105
    $region104: #{tpu_custom_call.1} parent=1 // pred_region
      %249 = dma.done [#allocation6], 8192
    $region105: #{tpu_custom_call.1} parent=1 // pred_fallthru
      _
    // Predicated region
    $region106: #{tpu_custom_call.1} parent=1 // pred_check
      _
    $region107: #{tpu_custom_call.1} parent=1 // pred_check_branch
      %251 = sbr.rel (0) target = $region109
    $region108: #{tpu_custom_call.1} parent=1 // pred_region
      %253 = dma.done [#allocation9], 64
    $region109: #{tpu_custom_call.1} parent=1 // pred_fallthru
      _
    // Predicated region
    $region110: #{tpu_custom_call.1} parent=1 // pred_check
      _
    $region111: #{tpu_custom_call.1} parent=1 // pred_check_branch
      %255 = sbr.rel (0) target = $region113
    $region112: #{tpu_custom_call.1} parent=1 // pred_region
      %257 = dma.done [#allocation9], 4096
    $region113: #{tpu_custom_call.1} parent=1 // pred_fallthru
      _
    // Predicated region
    $region114: #{tpu_custom_call.1} parent=1 // pred_check
      _
    $region115: #{tpu_custom_call.1} parent=1 // pred_check_branch
      %259 = sbr.rel (0) target = $region117
    $region116: #{tpu_custom_call.1} parent=1 // pred_region
      %261 = dma.done [#allocation12], 16
    $region117: #{tpu_custom_call.1} parent=1 // pred_fallthru
      _
    // Predicated region
    $region118: #{tpu_custom_call.1} parent=1 // pred_check
      _
    $region119: #{tpu_custom_call.1} parent=1 // pred_check_branch
      %263 = sbr.rel (0) target = $region121
    $region120: #{tpu_custom_call.1} parent=1 // pred_region
      %265 = dma.done [#allocation12], 1024
    $region121: #{tpu_custom_call.1} parent=1 // pred_fallthru
      _
    // Predicated region
    $region122: #{tpu_custom_call.1} parent=1 // pred_check
      _
    $region123: #{tpu_custom_call.1} parent=1 // pred_check_branch
      %267 = sbr.rel (0) target = $region125
    $region124: #{tpu_custom_call.1} parent=1 // pred_region
      %269 = dma.done [#allocation15], 16
    $region125: #{tpu_custom_call.1} parent=1 // pred_fallthru
      _
    // Predicated region
    $region126: #{tpu_custom_call.1} parent=1 // pred_check
      _
    $region127: #{tpu_custom_call.1} parent=1 // pred_check_branch
      %271 = sbr.rel (0) target = $region129
    $region128: #{tpu_custom_call.1} parent=1 // pred_region
      %273 = dma.done [#allocation15], 1024
    $region129: #{tpu_custom_call.1} parent=1 // pred_fallthru
      _
    // Predicated region
    $region130: #{tpu_custom_call.1} parent=1 // pred_check
      _
    $region131: #{tpu_custom_call.1} parent=1 // pred_check_branch
      %275 = sbr.rel (0) target = $region133
    $region132: #{tpu_custom_call.1} parent=1 // pred_region
      %277 = dma.done [#allocation18], 16
    $region133: #{tpu_custom_call.1} parent=1 // pred_fallthru
      _
    // Predicated region
    $region134: #{tpu_custom_call.1} parent=1 // pred_check
      _
    $region135: #{tpu_custom_call.1} parent=1 // pred_check_branch
      %279 = sbr.rel (0) target = $region137
    $region136: #{tpu_custom_call.1} parent=1 // pred_region
      %281 = dma.done [#allocation18], 8192
    $region137: #{tpu_custom_call.1} parent=1 // pred_fallthru
      _
    // Predicated region
    $region138: #{tpu_custom_call.1} parent=1 // pred_check
      _
    $region139: #{tpu_custom_call.1} parent=1 // pred_check_branch
      %283 = sbr.rel (0) target = $region141
    $region140: #{tpu_custom_call.1} parent=1 // pred_region
      %285 = dma.done [#allocation21], 32768
    $region141: #{tpu_custom_call.1} parent=1 // pred_fallthru
      _
    // Predicated region
    $region142: #{tpu_custom_call.1} parent=1 // pred_check
      _
    $region143: #{tpu_custom_call.1} parent=1 // pred_check_branch
      %287 = sbr.rel (0) target = $region145
    $region144: #{tpu_custom_call.1} parent=1 // pred_region
      %289 = dma.done [#allocation21], 4096
    $region145: #{tpu_custom_call.1} parent=1 // pred_fallthru
      _
    // Predicated region
    $region146: #{tpu_custom_call.1} parent=1 // pred_check
      _
    $region147: #{tpu_custom_call.1} parent=1 // pred_check_branch
      %291 = sbr.rel (0) target = $region149
    $region148: #{tpu_custom_call.1} parent=1 // pred_region
      %293 = dma.done [#allocation24], 1024
    $region149: #{tpu_custom_call.1} parent=1 // pred_fallthru
      _
    // Predicated region
    $region150: #{tpu_custom_call.1} parent=1 // pred_check
      _
    $region151: #{tpu_custom_call.1} parent=1 // pred_check_branch
      %295 = sbr.rel (0) target = $region153
    $region152: #{tpu_custom_call.1} parent=1 // pred_region
      %297 = dma.done [#allocation24], 1024
    $region153: #{tpu_custom_call.1} parent=1 // pred_fallthru
      _
    %v299 = vld [vmem:[%s0] sm:$0xf]
    %v300 = vld [vmem:[%s0 + $0x4] sm:$0xf]
    %v301 = vld [vmem:[#allocation2] sm:$0xff]
    %v302 = vld [vmem:[#allocation2 + $0x8] sm:$0xff]
    %v303 = vld [vmem:[#allocation5] sm:$0x3]
    %v305 = vperm.slane %v303, 0
    %v306 = vperm.slane %v303, 1
    %v311 = vunpack.c.l.b16 %v299
    %v312 = vunpack.c.l.b16 %v300
    %v313 = vpack.c.b16 %v312, %v311
    %v316 = vunpack.c.l.b16 %v301
    %v317 = vunpack.c.h.b16 %v301
    %v318 = vunpack.c.l.b16 %v302
    %v319 = vunpack.c.h.b16 %v302
    %v320 = vpack.c.b16 %v318, %v316
    %v321 = vpack.c.b16 %v319, %v317
    %vm324 = vcmask 130048
    %v326 = vsel %vm324, %v313, 0
    %328 = vmatpush.bf16.msra.mxu0 0
    %329 = vmatpush.bf16.msra.mxu0 0
    %330 = vmatpush.bf16.msra.mxu0 0
    %331 = vmatpush.bf16.msra.mxu0 0
    %332 = vmatpush.bf16.msra.mxu0 0
    %333 = vmatpush.bf16.msra.mxu0 0
    %334 = vmatpush.bf16.msra.mxu0 0
    %335 = vmatpush.bf16.msra.mxu0 %v320
    %336 = vmatmul.bf16.gmra.mxu0 %v326
    %v337 = vpop.f32.mrf.mxu0
    %v338 = vadd.f32 %v305, %v337
    %v339 = vpop.f32.mrf.mxu0
    %v340 = vadd.f32 %v305, %v339
    %341 = vdwg.mxu0
    %342 = vmatpush.bf16.msra.mxu0 0
    %343 = vmatpush.bf16.msra.mxu0 0
    %344 = vmatpush.bf16.msra.mxu0 0
    %345 = vmatpush.bf16.msra.mxu0 0
    %346 = vmatpush.bf16.msra.mxu0 0
    %347 = vmatpush.bf16.msra.mxu0 0
    %348 = vmatpush.bf16.msra.mxu0 0
    %349 = vmatpush.bf16.msra.mxu0 %v321
    %350 = vmatmul.bf16.gmra.mxu0 %v326
    %v351 = vpop.f32.mrf.mxu0
    %v352 = vadd.f32 %v306, %v351
    %v353 = vpop.f32.mrf.mxu0
    %v354 = vadd.f32 %v306, %v353
    %355 = vdwg.mxu0
    %v356 = vmax.f32 %v338, 0.0
    %v357 = vmax.f32 %v352, 0.0
    %v358 = vmax.f32 %v340, 0.0
    %v359 = vmax.f32 %v354, 0.0
    %v360 = vpack.c.bf16 %v358, %v356
    %v361 = vpack.c.bf16 %v359, %v357
    %v362 = vld [vmem:[#allocation7] sm:$0xff]
    %v363 = vld [vmem:[#allocation7 + $0x8] sm:$0xff]
    %v364 = vld [vmem:[#allocation7 + $0x10] sm:$0xff]
    %v365 = vld [vmem:[#allocation7 + $0x18] sm:$0xff]
    %v366 = vld [vmem:[#allocation7 + $0x20] sm:$0xff]
    %v367 = vld [vmem:[#allocation7 + $0x28] sm:$0xff]
    %v368 = vld [vmem:[#allocation7 + $0x30] sm:$0xff]
    %v369 = vld [vmem:[#allocation7 + $0x38] sm:$0xff]
    %v370 = vld [vmem:[#allocation7 + $0x40] sm:$0xff]
    %v371 = vld [vmem:[#allocation7 + $0x48] sm:$0xff]
    %v372 = vld [vmem:[#allocation7 + $0x50] sm:$0xff]
    %v373 = vld [vmem:[#allocation7 + $0x58] sm:$0xff]
    %v374 = vld [vmem:[#allocation7 + $0x60] sm:$0xff]
    %v375 = vld [vmem:[#allocation7 + $0x68] sm:$0xff]
    %v376 = vld [vmem:[#allocation7 + $0x70] sm:$0xff]
    %v377 = vld [vmem:[#allocation7 + $0x78] sm:$0xff]
    %v378 = vld [vmem:[#allocation7 + $0x80] sm:$0xff]
    %v379 = vld [vmem:[#allocation7 + $0x88] sm:$0xff]
    %v380 = vld [vmem:[#allocation7 + $0x90] sm:$0xff]
    %v381 = vld [vmem:[#allocation7 + $0x98] sm:$0xff]
    %v382 = vld [vmem:[#allocation7 + $0xa0] sm:$0xff]
    %v383 = vld [vmem:[#allocation7 + $0xa8] sm:$0xff]
    %v384 = vld [vmem:[#allocation7 + $0xb0] sm:$0xff]
    %v385 = vld [vmem:[#allocation7 + $0xb8] sm:$0xff]
    %v386 = vld [vmem:[#allocation7 + $0xc0] sm:$0xff]
    %v387 = vld [vmem:[#allocation7 + $0xc8] sm:$0xff]
    %v388 = vld [vmem:[#allocation7 + $0xd0] sm:$0xff]
    %v389 = vld [vmem:[#allocation7 + $0xd8] sm:$0xff]
    %v390 = vld [vmem:[#allocation7 + $0xe0] sm:$0xff]
    %v391 = vld [vmem:[#allocation7 + $0xe8] sm:$0xff]
    %v392 = vld [vmem:[#allocation7 + $0xf0] sm:$0xff]
    %v393 = vld [vmem:[#allocation7 + $0xf8] sm:$0xff]
    %v394 = vld [vmem:[#allocation7 + $0x100] sm:$0xff]
    %v395 = vld [vmem:[#allocation7 + $0x108] sm:$0xff]
    %v396 = vld [vmem:[#allocation7 + $0x110] sm:$0xff]
    %v397 = vld [vmem:[#allocation7 + $0x118] sm:$0xff]
    %v398 = vld [vmem:[#allocation7 + $0x120] sm:$0xff]
    %v399 = vld [vmem:[#allocation7 + $0x128] sm:$0xff]
    %v400 = vld [vmem:[#allocation7 + $0x130] sm:$0xff]
    %v401 = vld [vmem:[#allocation7 + $0x138] sm:$0xff]
    %v402 = vld [vmem:[#allocation7 + $0x140] sm:$0xff]
    %v403 = vld [vmem:[#allocation7 + $0x148] sm:$0xff]
    %v404 = vld [vmem:[#allocation7 + $0x150] sm:$0xff]
    %v405 = vld [vmem:[#allocation7 + $0x158] sm:$0xff]
    %v406 = vld [vmem:[#allocation7 + $0x160] sm:$0xff]
    %v407 = vld [vmem:[#allocation7 + $0x168] sm:$0xff]
    %v408 = vld [vmem:[#allocation7 + $0x170] sm:$0xff]
    %v409 = vld [vmem:[#allocation7 + $0x178] sm:$0xff]
    %v410 = vld [vmem:[#allocation7 + $0x180] sm:$0xff]
    %v411 = vld [vmem:[#allocation7 + $0x188] sm:$0xff]
    %v412 = vld [vmem:[#allocation7 + $0x190] sm:$0xff]
    %v413 = vld [vmem:[#allocation7 + $0x198] sm:$0xff]
    %v414 = vld [vmem:[#allocation7 + $0x1a0] sm:$0xff]
    %v415 = vld [vmem:[#allocation7 + $0x1a8] sm:$0xff]
    %v416 = vld [vmem:[#allocation7 + $0x1b0] sm:$0xff]
    %v417 = vld [vmem:[#allocation7 + $0x1b8] sm:$0xff]
    %v418 = vld [vmem:[#allocation7 + $0x1c0] sm:$0xff]
    %v419 = vld [vmem:[#allocation7 + $0x1c8] sm:$0xff]
    %v420 = vld [vmem:[#allocation7 + $0x1d0] sm:$0xff]
    %v421 = vld [vmem:[#allocation7 + $0x1d8] sm:$0xff]
    %v422 = vld [vmem:[#allocation7 + $0x1e0] sm:$0xff]
    %v423 = vld [vmem:[#allocation7 + $0x1e8] sm:$0xff]
    %v424 = vld [vmem:[#allocation7 + $0x1f0] sm:$0xff]
    %v425 = vld [vmem:[#allocation7 + $0x1f8] sm:$0xff]
    %v426 = vld [vmem:[#allocation8] sm:$0xf]
    %v428 = vperm.slane %v426, 0
    %v429 = vperm.slane %v426, 1
    %v430 = vperm.slane %v426, 2
    %v431 = vperm.slane %v426, 3
    %v500 = vunpack.c.l.b16 %v362
    %v501 = vunpack.c.h.b16 %v362
    %v502 = vunpack.c.l.b16 %v363
    %v503 = vunpack.c.h.b16 %v363
    %v504 = vunpack.c.l.b16 %v364
    %v505 = vunpack.c.h.b16 %v364
    %v506 = vunpack.c.l.b16 %v365
    %v507 = vunpack.c.h.b16 %v365
    %v508 = vunpack.c.l.b16 %v366
    %v509 = vunpack.c.h.b16 %v366
    %v510 = vunpack.c.l.b16 %v367
    %v511 = vunpack.c.h.b16 %v367
    %v512 = vunpack.c.l.b16 %v368
    %v513 = vunpack.c.h.b16 %v368
    %v514 = vunpack.c.l.b16 %v369
    %v515 = vunpack.c.h.b16 %v369
    %v516 = vunpack.c.l.b16 %v370
    %v517 = vunpack.c.h.b16 %v370
    %v518 = vunpack.c.l.b16 %v371
    %v519 = vunpack.c.h.b16 %v371
    %v520 = vunpack.c.l.b16 %v372
    %v521 = vunpack.c.h.b16 %v372
    %v522 = vunpack.c.l.b16 %v373
    %v523 = vunpack.c.h.b16 %v373
    %v524 = vunpack.c.l.b16 %v374
    %v525 = vunpack.c.h.b16 %v374
    %v526 = vunpack.c.l.b16 %v375
    %v527 = vunpack.c.h.b16 %v375
    %v528 = vunpack.c.l.b16 %v376
    %v529 = vunpack.c.h.b16 %v376
    %v530 = vunpack.c.l.b16 %v377
    %v531 = vunpack.c.h.b16 %v377
    %v532 = vunpack.c.l.b16 %v378
    %v533 = vunpack.c.h.b16 %v378
    %v534 = vunpack.c.l.b16 %v379
    %v535 = vunpack.c.h.b16 %v379
    %v536 = vunpack.c.l.b16 %v380
    %v537 = vunpack.c.h.b16 %v380
    %v538 = vunpack.c.l.b16 %v381
    %v539 = vunpack.c.h.b16 %v381
    %v540 = vunpack.c.l.b16 %v382
    %v541 = vunpack.c.h.b16 %v382
    %v542 = vunpack.c.l.b16 %v383
    %v543 = vunpack.c.h.b16 %v383
    %v544 = vunpack.c.l.b16 %v384
    %v545 = vunpack.c.h.b16 %v384
    %v546 = vunpack.c.l.b16 %v385
    %v547 = vunpack.c.h.b16 %v385
    %v548 = vunpack.c.l.b16 %v386
    %v549 = vunpack.c.h.b16 %v386
    %v550 = vunpack.c.l.b16 %v387
    %v551 = vunpack.c.h.b16 %v387
    %v552 = vunpack.c.l.b16 %v388
    %v553 = vunpack.c.h.b16 %v388
    %v554 = vunpack.c.l.b16 %v389
    %v555 = vunpack.c.h.b16 %v389
    %v556 = vunpack.c.l.b16 %v390
    %v557 = vunpack.c.h.b16 %v390
    %v558 = vunpack.c.l.b16 %v391
    %v559 = vunpack.c.h.b16 %v391
    %v560 = vunpack.c.l.b16 %v392
    %v561 = vunpack.c.h.b16 %v392
    %v562 = vunpack.c.l.b16 %v393
    %v563 = vunpack.c.h.b16 %v393
    %v564 = vunpack.c.l.b16 %v394
    %v565 = vunpack.c.h.b16 %v394
    %v566 = vunpack.c.l.b16 %v395
    %v567 = vunpack.c.h.b16 %v395
    %v568 = vunpack.c.l.b16 %v396
    %v569 = vunpack.c.h.b16 %v396
    %v570 = vunpack.c.l.b16 %v397
    %v571 = vunpack.c.h.b16 %v397
    %v572 = vunpack.c.l.b16 %v398
    %v573 = vunpack.c.h.b16 %v398
    %v574 = vunpack.c.l.b16 %v399
    %v575 = vunpack.c.h.b16 %v399
    %v576 = vunpack.c.l.b16 %v400
    %v577 = vunpack.c.h.b16 %v400
    %v578 = vunpack.c.l.b16 %v401
    %v579 = vunpack.c.h.b16 %v401
    %v580 = vunpack.c.l.b16 %v402
    %v581 = vunpack.c.h.b16 %v402
    %v582 = vunpack.c.l.b16 %v403
    %v583 = vunpack.c.h.b16 %v403
    %v584 = vunpack.c.l.b16 %v404
    %v585 = vunpack.c.h.b16 %v404
    %v586 = vunpack.c.l.b16 %v405
    %v587 = vunpack.c.h.b16 %v405
    %v588 = vunpack.c.l.b16 %v406
    %v589 = vunpack.c.h.b16 %v406
    %v590 = vunpack.c.l.b16 %v407
    %v591 = vunpack.c.h.b16 %v407
    %v592 = vunpack.c.l.b16 %v408
    %v593 = vunpack.c.h.b16 %v408
    %v594 = vunpack.c.l.b16 %v409
    %v595 = vunpack.c.h.b16 %v409
    %v596 = vunpack.c.l.b16 %v410
    %v597 = vunpack.c.h.b16 %v410
    %v598 = vunpack.c.l.b16 %v411
    %v599 = vunpack.c.h.b16 %v411
    %v600 = vunpack.c.l.b16 %v412
    %v601 = vunpack.c.h.b16 %v412
    %v602 = vunpack.c.l.b16 %v413
    %v603 = vunpack.c.h.b16 %v413
    %v604 = vunpack.c.l.b16 %v414
    %v605 = vunpack.c.h.b16 %v414
    %v606 = vunpack.c.l.b16 %v415
    %v607 = vunpack.c.h.b16 %v415
    %v608 = vunpack.c.l.b16 %v416
    %v609 = vunpack.c.h.b16 %v416
    %v610 = vunpack.c.l.b16 %v417
    %v611 = vunpack.c.h.b16 %v417
    %v612 = vunpack.c.l.b16 %v418
    %v613 = vunpack.c.h.b16 %v418
    %v614 = vunpack.c.l.b16 %v419
    %v615 = vunpack.c.h.b16 %v419
    %v616 = vunpack.c.l.b16 %v420
    %v617 = vunpack.c.h.b16 %v420
    %v618 = vunpack.c.l.b16 %v421
    %v619 = vunpack.c.h.b16 %v421
    %v620 = vunpack.c.l.b16 %v422
    %v621 = vunpack.c.h.b16 %v422
    %v622 = vunpack.c.l.b16 %v423
    %v623 = vunpack.c.h.b16 %v423
    %v624 = vunpack.c.l.b16 %v424
    %v625 = vunpack.c.h.b16 %v424
    %v626 = vunpack.c.l.b16 %v425
    %v627 = vunpack.c.h.b16 %v425
    %v628 = vpack.c.b16 %v504, %v500
    %v629 = vpack.c.b16 %v505, %v501
    %v630 = vpack.c.b16 %v506, %v502
    %v631 = vpack.c.b16 %v507, %v503
    %v632 = vpack.c.b16 %v512, %v508
    %v633 = vpack.c.b16 %v513, %v509
    %v634 = vpack.c.b16 %v514, %v510
    %v635 = vpack.c.b16 %v515, %v511
    %v636 = vpack.c.b16 %v520, %v516
    %v637 = vpack.c.b16 %v521, %v517
    %v638 = vpack.c.b16 %v522, %v518
    %v639 = vpack.c.b16 %v523, %v519
    %v640 = vpack.c.b16 %v528, %v524
    %v641 = vpack.c.b16 %v529, %v525
    %v642 = vpack.c.b16 %v530, %v526
    %v643 = vpack.c.b16 %v531, %v527
    %v644 = vpack.c.b16 %v536, %v532
    %v645 = vpack.c.b16 %v537, %v533
    %v646 = vpack.c.b16 %v538, %v534
    %v647 = vpack.c.b16 %v539, %v535
    %v648 = vpack.c.b16 %v544, %v540
    %v649 = vpack.c.b16 %v545, %v541
    %v650 = vpack.c.b16 %v546, %v542
    %v651 = vpack.c.b16 %v547, %v543
    %v652 = vpack.c.b16 %v552, %v548
    %v653 = vpack.c.b16 %v553, %v549
    %v654 = vpack.c.b16 %v554, %v550
    %v655 = vpack.c.b16 %v555, %v551
    %v656 = vpack.c.b16 %v560, %v556
    %v657 = vpack.c.b16 %v561, %v557
    %v658 = vpack.c.b16 %v562, %v558
    %v659 = vpack.c.b16 %v563, %v559
    %v660 = vpack.c.b16 %v568, %v564
    %v661 = vpack.c.b16 %v569, %v565
    %v662 = vpack.c.b16 %v570, %v566
    %v663 = vpack.c.b16 %v571, %v567
    %v664 = vpack.c.b16 %v576, %v572
    %v665 = vpack.c.b16 %v577, %v573
    %v666 = vpack.c.b16 %v578, %v574
    %v667 = vpack.c.b16 %v579, %v575
    %v668 = vpack.c.b16 %v584, %v580
    %v669 = vpack.c.b16 %v585, %v581
    %v670 = vpack.c.b16 %v586, %v582
    %v671 = vpack.c.b16 %v587, %v583
    %v672 = vpack.c.b16 %v592, %v588
    %v673 = vpack.c.b16 %v593, %v589
    %v674 = vpack.c.b16 %v594, %v590
    %v675 = vpack.c.b16 %v595, %v591
    %v676 = vpack.c.b16 %v600, %v596
    %v677 = vpack.c.b16 %v601, %v597
    %v678 = vpack.c.b16 %v602, %v598
    %v679 = vpack.c.b16 %v603, %v599
    %v680 = vpack.c.b16 %v608, %v604
    %v681 = vpack.c.b16 %v609, %v605
    %v682 = vpack.c.b16 %v610, %v606
    %v683 = vpack.c.b16 %v611, %v607
    %v684 = vpack.c.b16 %v616, %v612
    %v685 = vpack.c.b16 %v617, %v613
    %v686 = vpack.c.b16 %v618, %v614
    %v687 = vpack.c.b16 %v619, %v615
    %v688 = vpack.c.b16 %v624, %v620
    %v689 = vpack.c.b16 %v625, %v621
    %v690 = vpack.c.b16 %v626, %v622
    %v691 = vpack.c.b16 %v627, %v623
    %756 = vmatpush.bf16.msra.mxu0 %v656
    %757 = vmatpush.bf16.msra.mxu0 %v652
    %758 = vmatpush.bf16.msra.mxu0 %v648
    %759 = vmatpush.bf16.msra.mxu0 %v644
    %760 = vmatpush.bf16.msra.mxu0 %v640
    %761 = vmatpush.bf16.msra.mxu0 %v636
    %762 = vmatpush.bf16.msra.mxu0 %v632
    %763 = vmatpush.bf16.msra.mxu0 %v628
    %764 = vmatmul.bf16.gmra.mxu0 %v360
    %v765 = vpop.f32.mrf.mxu0
    %v766 = vadd.f32 %v428, %v765
    %v767 = vpop.f32.mrf.mxu0
    %v768 = vadd.f32 %v428, %v767
    %769 = vdwg.mxu0
    %770 = vmatpush.bf16.msra.mxu0 %v688
    %771 = vmatpush.bf16.msra.mxu0 %v684
    %772 = vmatpush.bf16.msra.mxu0 %v680
    %773 = vmatpush.bf16.msra.mxu0 %v676
    %774 = vmatpush.bf16.msra.mxu0 %v672
    %775 = vmatpush.bf16.msra.mxu0 %v668
    %776 = vmatpush.bf16.msra.mxu0 %v664
    %777 = vmatpush.bf16.msra.mxu0 %v660
    %778 = vmatmul.bf16.gmra.mxu0 %v361
    %v779 = vpop.f32.mrf.mxu0
    %v780 = vadd.f32 %v766, %v779
    %v781 = vpop.f32.mrf.mxu0
    %v782 = vadd.f32 %v768, %v781
    %783 = vdwg.mxu0
    %784 = vmatpush.bf16.msra.mxu0 %v657
    %785 = vmatpush.bf16.msra.mxu0 %v653
    %786 = vmatpush.bf16.msra.mxu0 %v649
    %787 = vmatpush.bf16.msra.mxu0 %v645
    %788 = vmatpush.bf16.msra.mxu0 %v641
    %789 = vmatpush.bf16.msra.mxu0 %v637
    %790 = vmatpush.bf16.msra.mxu0 %v633
    %791 = vmatpush.bf16.msra.mxu0 %v629
    %792 = vmatmul.bf16.gmra.mxu0 %v360
    %v793 = vpop.f32.mrf.mxu0
    %v794 = vadd.f32 %v429, %v793
    %v795 = vpop.f32.mrf.mxu0
    %v796 = vadd.f32 %v429, %v795
    %797 = vdwg.mxu0
    %798 = vmatpush.bf16.msra.mxu0 %v689
    %799 = vmatpush.bf16.msra.mxu0 %v685
    %800 = vmatpush.bf16.msra.mxu0 %v681
    %801 = vmatpush.bf16.msra.mxu0 %v677
    %802 = vmatpush.bf16.msra.mxu0 %v673
    %803 = vmatpush.bf16.msra.mxu0 %v669
    %804 = vmatpush.bf16.msra.mxu0 %v665
    %805 = vmatpush.bf16.msra.mxu0 %v661
    %806 = vmatmul.bf16.gmra.mxu0 %v361
    %v807 = vpop.f32.mrf.mxu0
    %v808 = vadd.f32 %v794, %v807
    %v809 = vpop.f32.mrf.mxu0
    %v810 = vadd.f32 %v796, %v809
    %811 = vdwg.mxu0
    %812 = vmatpush.bf16.msra.mxu0 %v658
    %813 = vmatpush.bf16.msra.mxu0 %v654
    %814 = vmatpush.bf16.msra.mxu0 %v650
    %815 = vmatpush.bf16.msra.mxu0 %v646
    %816 = vmatpush.bf16.msra.mxu0 %v642
    %817 = vmatpush.bf16.msra.mxu0 %v638
    %818 = vmatpush.bf16.msra.mxu0 %v634
    %819 = vmatpush.bf16.msra.mxu0 %v630
    %820 = vmatmul.bf16.gmra.mxu0 %v360
    %v821 = vpop.f32.mrf.mxu0
    %v822 = vadd.f32 %v430, %v821
    %v823 = vpop.f32.mrf.mxu0
    %v824 = vadd.f32 %v430, %v823
    %825 = vdwg.mxu0
    %826 = vmatpush.bf16.msra.mxu0 %v690
    %827 = vmatpush.bf16.msra.mxu0 %v686
    %828 = vmatpush.bf16.msra.mxu0 %v682
    %829 = vmatpush.bf16.msra.mxu0 %v678
    %830 = vmatpush.bf16.msra.mxu0 %v674
    %831 = vmatpush.bf16.msra.mxu0 %v670
    %832 = vmatpush.bf16.msra.mxu0 %v666
    %833 = vmatpush.bf16.msra.mxu0 %v662
    %834 = vmatmul.bf16.gmra.mxu0 %v361
    %v835 = vpop.f32.mrf.mxu0
    %v836 = vadd.f32 %v822, %v835
    %v837 = vpop.f32.mrf.mxu0
    %v838 = vadd.f32 %v824, %v837
    %839 = vdwg.mxu0
    %840 = vmatpush.bf16.msra.mxu0 %v659
    %841 = vmatpush.bf16.msra.mxu0 %v655
    %842 = vmatpush.bf16.msra.mxu0 %v651
    %843 = vmatpush.bf16.msra.mxu0 %v647
    %844 = vmatpush.bf16.msra.mxu0 %v643
    %845 = vmatpush.bf16.msra.mxu0 %v639
    %846 = vmatpush.bf16.msra.mxu0 %v635
    %847 = vmatpush.bf16.msra.mxu0 %v631
    %848 = vmatmul.bf16.gmra.mxu0 %v360
    %v849 = vpop.f32.mrf.mxu0
    %v850 = vadd.f32 %v431, %v849
    %v851 = vpop.f32.mrf.mxu0
    %v852 = vadd.f32 %v431, %v851
    %853 = vdwg.mxu0
    %854 = vmatpush.bf16.msra.mxu0 %v691
    %855 = vmatpush.bf16.msra.mxu0 %v687
    %856 = vmatpush.bf16.msra.mxu0 %v683
    %857 = vmatpush.bf16.msra.mxu0 %v679
    %858 = vmatpush.bf16.msra.mxu0 %v675
    %859 = vmatpush.bf16.msra.mxu0 %v671
    %860 = vmatpush.bf16.msra.mxu0 %v667
    %861 = vmatpush.bf16.msra.mxu0 %v663
    %862 = vmatmul.bf16.gmra.mxu0 %v361
    %v863 = vpop.f32.mrf.mxu0
    %v864 = vadd.f32 %v850, %v863
    %v865 = vpop.f32.mrf.mxu0
    %v866 = vadd.f32 %v852, %v865
    %867 = vdwg.mxu0
    %v868 = vmax.f32 %v780, 0.0
    %v869 = vmax.f32 %v808, 0.0
    %v870 = vmax.f32 %v836, 0.0
    %v871 = vmax.f32 %v864, 0.0
    %v872 = vmax.f32 %v782, 0.0
    %v873 = vmax.f32 %v810, 0.0
    %v874 = vmax.f32 %v838, 0.0
    %v875 = vmax.f32 %v866, 0.0
    %v876 = vpack.c.bf16 %v872, %v868
    %v877 = vpack.c.bf16 %v873, %v869
    %v878 = vpack.c.bf16 %v874, %v870
    %v879 = vpack.c.bf16 %v875, %v871
    %v880 = vld [vmem:[#allocation10] sm:$0xf]
    %v881 = vld [vmem:[#allocation10 + $0x4] sm:$0xf]
    %v882 = vld [vmem:[#allocation10 + $0x8] sm:$0xf]
    %v883 = vld [vmem:[#allocation10 + $0xc] sm:$0xf]
    %v884 = vld [vmem:[#allocation10 + $0x10] sm:$0xf]
    %v885 = vld [vmem:[#allocation10 + $0x14] sm:$0xf]
    %v886 = vld [vmem:[#allocation10 + $0x18] sm:$0xf]
    %v887 = vld [vmem:[#allocation10 + $0x1c] sm:$0xf]
    %v888 = vld [vmem:[#allocation10 + $0x20] sm:$0xf]
    %v889 = vld [vmem:[#allocation10 + $0x24] sm:$0xf]
    %v890 = vld [vmem:[#allocation10 + $0x28] sm:$0xf]
    %v891 = vld [vmem:[#allocation10 + $0x2c] sm:$0xf]
    %v892 = vld [vmem:[#allocation10 + $0x30] sm:$0xf]
    %v893 = vld [vmem:[#allocation10 + $0x34] sm:$0xf]
    %v894 = vld [vmem:[#allocation10 + $0x38] sm:$0xf]
    %v895 = vld [vmem:[#allocation10 + $0x3c] sm:$0xf]
    %v896 = vld [vmem:[#allocation10 + $0x40] sm:$0xf]
    %v897 = vld [vmem:[#allocation10 + $0x44] sm:$0xf]
    %v898 = vld [vmem:[#allocation10 + $0x48] sm:$0xf]
    %v899 = vld [vmem:[#allocation10 + $0x4c] sm:$0xf]
    %v900 = vld [vmem:[#allocation10 + $0x50] sm:$0xf]
    %v901 = vld [vmem:[#allocation10 + $0x54] sm:$0xf]
    %v902 = vld [vmem:[#allocation10 + $0x58] sm:$0xf]
    %v903 = vld [vmem:[#allocation10 + $0x5c] sm:$0xf]
    %v904 = vld [vmem:[#allocation10 + $0x60] sm:$0xf]
    %v905 = vld [vmem:[#allocation10 + $0x64] sm:$0xf]
    %v906 = vld [vmem:[#allocation10 + $0x68] sm:$0xf]
    %v907 = vld [vmem:[#allocation10 + $0x6c] sm:$0xf]
    %v908 = vld [vmem:[#allocation10 + $0x70] sm:$0xf]
    %v909 = vld [vmem:[#allocation10 + $0x74] sm:$0xf]
    %v910 = vld [vmem:[#allocation10 + $0x78] sm:$0xf]
    %v911 = vld [vmem:[#allocation10 + $0x7c] sm:$0xf]
    %v912 = vld [vmem:[#allocation10 + $0x80] sm:$0xf]
    %v913 = vld [vmem:[#allocation10 + $0x84] sm:$0xf]
    %v914 = vld [vmem:[#allocation10 + $0x88] sm:$0xf]
    %v915 = vld [vmem:[#allocation10 + $0x8c] sm:$0xf]
    %v916 = vld [vmem:[#allocation10 + $0x90] sm:$0xf]
    %v917 = vld [vmem:[#allocation10 + $0x94] sm:$0xf]
    %v918 = vld [vmem:[#allocation10 + $0x98] sm:$0xf]
    %v919 = vld [vmem:[#allocation10 + $0x9c] sm:$0xf]
    %v920 = vld [vmem:[#allocation10 + $0xa0] sm:$0xf]
    %v921 = vld [vmem:[#allocation10 + $0xa4] sm:$0xf]
    %v922 = vld [vmem:[#allocation10 + $0xa8] sm:$0xf]
    %v923 = vld [vmem:[#allocation10 + $0xac] sm:$0xf]
    %v924 = vld [vmem:[#allocation10 + $0xb0] sm:$0xf]
    %v925 = vld [vmem:[#allocation10 + $0xb4] sm:$0xf]
    %v926 = vld [vmem:[#allocation10 + $0xb8] sm:$0xf]
    %v927 = vld [vmem:[#allocation10 + $0xbc] sm:$0xf]
    %v928 = vld [vmem:[#allocation10 + $0xc0] sm:$0xf]
    %v929 = vld [vmem:[#allocation10 + $0xc4] sm:$0xf]
    %v930 = vld [vmem:[#allocation10 + $0xc8] sm:$0xf]
    %v931 = vld [vmem:[#allocation10 + $0xcc] sm:$0xf]
    %v932 = vld [vmem:[#allocation10 + $0xd0] sm:$0xf]
    %v933 = vld [vmem:[#allocation10 + $0xd4] sm:$0xf]
    %v934 = vld [vmem:[#allocation10 + $0xd8] sm:$0xf]
    %v935 = vld [vmem:[#allocation10 + $0xdc] sm:$0xf]
    %v936 = vld [vmem:[#allocation10 + $0xe0] sm:$0xf]
    %v937 = vld [vmem:[#allocation10 + $0xe4] sm:$0xf]
    %v938 = vld [vmem:[#allocation10 + $0xe8] sm:$0xf]
    %v939 = vld [vmem:[#allocation10 + $0xec] sm:$0xf]
    %v940 = vld [vmem:[#allocation10 + $0xf0] sm:$0xf]
    %v941 = vld [vmem:[#allocation10 + $0xf4] sm:$0xf]
    %v942 = vld [vmem:[#allocation10 + $0xf8] sm:$0xf]
    %v943 = vld [vmem:[#allocation10 + $0xfc] sm:$0xf]
    %v944 = vld [vmem:[#allocation11] sm:$0x1]
    %v946 = vperm.slane %v944, 0
    %v1012 = vunpack.c.l.b16 %v880
    %v1013 = vunpack.c.l.b16 %v881
    %v1014 = vunpack.c.l.b16 %v882
    %v1015 = vunpack.c.l.b16 %v883
    %v1016 = vunpack.c.l.b16 %v884
    %v1017 = vunpack.c.l.b16 %v885
    %v1018 = vunpack.c.l.b16 %v886
    %v1019 = vunpack.c.l.b16 %v887
    %v1020 = vunpack.c.l.b16 %v888
    %v1021 = vunpack.c.l.b16 %v889
    %v1022 = vunpack.c.l.b16 %v890
    %v1023 = vunpack.c.l.b16 %v891
    %v1024 = vunpack.c.l.b16 %v892
    %v1025 = vunpack.c.l.b16 %v893
    %v1026 = vunpack.c.l.b16 %v894
    %v1027 = vunpack.c.l.b16 %v895
    %v1028 = vunpack.c.l.b16 %v896
    %v1029 = vunpack.c.l.b16 %v897
    %v1030 = vunpack.c.l.b16 %v898
    %v1031 = vunpack.c.l.b16 %v899
    %v1032 = vunpack.c.l.b16 %v900
    %v1033 = vunpack.c.l.b16 %v901
    %v1034 = vunpack.c.l.b16 %v902
    %v1035 = vunpack.c.l.b16 %v903
    %v1036 = vunpack.c.l.b16 %v904
    %v1037 = vunpack.c.l.b16 %v905
    %v1038 = vunpack.c.l.b16 %v906
    %v1039 = vunpack.c.l.b16 %v907
    %v1040 = vunpack.c.l.b16 %v908
    %v1041 = vunpack.c.l.b16 %v909
    %v1042 = vunpack.c.l.b16 %v910
    %v1043 = vunpack.c.l.b16 %v911
    %v1044 = vunpack.c.l.b16 %v912
    %v1045 = vunpack.c.l.b16 %v913
    %v1046 = vunpack.c.l.b16 %v914
    %v1047 = vunpack.c.l.b16 %v915
    %v1048 = vunpack.c.l.b16 %v916
    %v1049 = vunpack.c.l.b16 %v917
    %v1050 = vunpack.c.l.b16 %v918
    %v1051 = vunpack.c.l.b16 %v919
    %v1052 = vunpack.c.l.b16 %v920
    %v1053 = vunpack.c.l.b16 %v921
    %v1054 = vunpack.c.l.b16 %v922
    %v1055 = vunpack.c.l.b16 %v923
    %v1056 = vunpack.c.l.b16 %v924
    %v1057 = vunpack.c.l.b16 %v925
    %v1058 = vunpack.c.l.b16 %v926
    %v1059 = vunpack.c.l.b16 %v927
    %v1060 = vunpack.c.l.b16 %v928
    %v1061 = vunpack.c.l.b16 %v929
    %v1062 = vunpack.c.l.b16 %v930
    %v1063 = vunpack.c.l.b16 %v931
    %v1064 = vunpack.c.l.b16 %v932
    %v1065 = vunpack.c.l.b16 %v933
    %v1066 = vunpack.c.l.b16 %v934
    %v1067 = vunpack.c.l.b16 %v935
    %v1068 = vunpack.c.l.b16 %v936
    %v1069 = vunpack.c.l.b16 %v937
    %v1070 = vunpack.c.l.b16 %v938
    %v1071 = vunpack.c.l.b16 %v939
    %v1072 = vunpack.c.l.b16 %v940
    %v1073 = vunpack.c.l.b16 %v941
    %v1074 = vunpack.c.l.b16 %v942
    %v1075 = vunpack.c.l.b16 %v943
    %v1076 = vpack.c.b16 %v1013, %v1012
    %v1077 = vpack.c.b16 %v1015, %v1014
    %v1078 = vpack.c.b16 %v1017, %v1016
    %v1079 = vpack.c.b16 %v1019, %v1018
    %v1080 = vpack.c.b16 %v1021, %v1020
    %v1081 = vpack.c.b16 %v1023, %v1022
    %v1082 = vpack.c.b16 %v1025, %v1024
    %v1083 = vpack.c.b16 %v1027, %v1026
    %v1084 = vpack.c.b16 %v1029, %v1028
    %v1085 = vpack.c.b16 %v1031, %v1030
    %v1086 = vpack.c.b16 %v1033, %v1032
    %v1087 = vpack.c.b16 %v1035, %v1034
    %v1088 = vpack.c.b16 %v1037, %v1036
    %v1089 = vpack.c.b16 %v1039, %v1038
    %v1090 = vpack.c.b16 %v1041, %v1040
    %v1091 = vpack.c.b16 %v1043, %v1042
    %v1092 = vpack.c.b16 %v1045, %v1044
    %v1093 = vpack.c.b16 %v1047, %v1046
    %v1094 = vpack.c.b16 %v1049, %v1048
    %v1095 = vpack.c.b16 %v1051, %v1050
    %v1096 = vpack.c.b16 %v1053, %v1052
    %v1097 = vpack.c.b16 %v1055, %v1054
    %v1098 = vpack.c.b16 %v1057, %v1056
    %v1099 = vpack.c.b16 %v1059, %v1058
    %v1100 = vpack.c.b16 %v1061, %v1060
    %v1101 = vpack.c.b16 %v1063, %v1062
    %v1102 = vpack.c.b16 %v1065, %v1064
    %v1103 = vpack.c.b16 %v1067, %v1066
    %v1104 = vpack.c.b16 %v1069, %v1068
    %v1105 = vpack.c.b16 %v1071, %v1070
    %v1106 = vpack.c.b16 %v1073, %v1072
    %v1107 = vpack.c.b16 %v1075, %v1074
    %1140 = vmatpush.bf16.msra.mxu0 %v1083
    %1141 = vmatpush.bf16.msra.mxu0 %v1082
    %1142 = vmatpush.bf16.msra.mxu0 %v1081
    %1143 = vmatpush.bf16.msra.mxu0 %v1080
    %1144 = vmatpush.bf16.msra.mxu0 %v1079
    %1145 = vmatpush.bf16.msra.mxu0 %v1078
    %1146 = vmatpush.bf16.msra.mxu0 %v1077
    %1147 = vmatpush.bf16.msra.mxu0 %v1076
    %1148 = vmatmul.bf16.gmra.mxu0 %v876
    %v1149 = vpop.f32.mrf.mxu0
    %v1150 = vadd.f32 %v946, %v1149
    %v1151 = vpop.f32.mrf.mxu0
    %v1152 = vadd.f32 %v946, %v1151
    %1153 = vdwg.mxu0
    %1154 = vmatpush.bf16.msra.mxu0 %v1091
    %1155 = vmatpush.bf16.msra.mxu0 %v1090
    %1156 = vmatpush.bf16.msra.mxu0 %v1089
    %1157 = vmatpush.bf16.msra.mxu0 %v1088
    %1158 = vmatpush.bf16.msra.mxu0 %v1087
    %1159 = vmatpush.bf16.msra.mxu0 %v1086
    %1160 = vmatpush.bf16.msra.mxu0 %v1085
    %1161 = vmatpush.bf16.msra.mxu0 %v1084
    %1162 = vmatmul.bf16.gmra.mxu0 %v877
    %v1163 = vpop.f32.mrf.mxu0
    %v1164 = vadd.f32 %v1150, %v1163
    %v1165 = vpop.f32.mrf.mxu0
    %v1166 = vadd.f32 %v1152, %v1165
    %1167 = vdwg.mxu0
    %1168 = vmatpush.bf16.msra.mxu0 %v1099
    %1169 = vmatpush.bf16.msra.mxu0 %v1098
    %1170 = vmatpush.bf16.msra.mxu0 %v1097
    %1171 = vmatpush.bf16.msra.mxu0 %v1096
    %1172 = vmatpush.bf16.msra.mxu0 %v1095
    %1173 = vmatpush.bf16.msra.mxu0 %v1094
    %1174 = vmatpush.bf16.msra.mxu0 %v1093
    %1175 = vmatpush.bf16.msra.mxu0 %v1092
    %1176 = vmatmul.bf16.gmra.mxu0 %v878
    %v1177 = vpop.f32.mrf.mxu0
    %v1178 = vadd.f32 %v1164, %v1177
    %v1179 = vpop.f32.mrf.mxu0
    %v1180 = vadd.f32 %v1166, %v1179
    %1181 = vdwg.mxu0
    %1182 = vmatpush.bf16.msra.mxu0 %v1107
    %1183 = vmatpush.bf16.msra.mxu0 %v1106
    %1184 = vmatpush.bf16.msra.mxu0 %v1105
    %1185 = vmatpush.bf16.msra.mxu0 %v1104
    %1186 = vmatpush.bf16.msra.mxu0 %v1103
    %1187 = vmatpush.bf16.msra.mxu0 %v1102
    %1188 = vmatpush.bf16.msra.mxu0 %v1101
    %1189 = vmatpush.bf16.msra.mxu0 %v1100
    %1190 = vmatmul.bf16.gmra.mxu0 %v879
    %v1191 = vpop.f32.mrf.mxu0
    %v1192 = vadd.f32 %v1178, %v1191
    %v1193 = vpop.f32.mrf.mxu0
    %v1194 = vadd.f32 %v1180, %v1193
    %1195 = vdwg.mxu0
    %v1196 = vmax.f32 %v1192, 0.0
    %v1197 = vmax.f32 %v1194, 0.0
    %v1198 = vpack.c.bf16 %v1197, %v1196
    %v1199 = vld [vmem:[%s1] sm:$0xf]
    %v1200 = vld [vmem:[%s1 + $0x4] sm:$0xf]
    %v1201 = vld [vmem:[%s9] sm:$0xf]
    %v1202 = vld [vmem:[#allocation14] sm:$0x1]
    %v1204 = vperm.slane %v1202, 0
    %v1208 = vunpack.c.l.b16 %v1199
    %v1209 = vunpack.c.l.b16 %v1200
    %v1210 = vpack.c.b16 %v1209, %v1208
    %vm1211 = vcmask 64512
    %v1213 = vsel %vm1211, %v1210, 0
    %vm1215 = vcmask 1043456
    %v1217 = vsel %vm1215, %v1201, 0
    %1219 = vmatpush.bf16.msra.mxu0 0
    %1220 = vmatpush.bf16.msra.mxu0 0
    %1221 = vmatpush.bf16.msra.mxu0 0
    %1222 = vmatpush.bf16.msra.mxu0 0
    %1223 = vmatpush.bf16.msra.mxu0 0
    %1224 = vmatpush.bf16.msra.mxu0 0
    %1225 = vmatpush.bf16.msra.mxu0 0
    %1226 = vmatpush.bf16.msra.mxu0 %v1217
    %1227 = vmatmul.bf16.gmra.mxu0 %v1213
    %v1228 = vpop.f32.mrf.mxu0
    %v1229 = vadd.f32 %v1204, %v1228
    %v1230 = vpop.f32.mrf.mxu0
    %v1231 = vadd.f32 %v1204, %v1230
    %1232 = vdwg.mxu0
    %v1233 = vmax.f32 %v1229, 0.0
    %v1234 = vmax.f32 %v1231, 0.0
    %v1235 = vpack.c.bf16 %v1234, %v1233
    %v1236 = vld [vmem:[#allocation16] sm:$0xf]
    %v1237 = vld [vmem:[#allocation16 + $0x4] sm:$0xf]
    %v1238 = vld [vmem:[#allocation16 + $0x8] sm:$0xf]
    %v1239 = vld [vmem:[#allocation16 + $0xc] sm:$0xf]
    %v1240 = vld [vmem:[#allocation16 + $0x10] sm:$0xf]
    %v1241 = vld [vmem:[#allocation16 + $0x14] sm:$0xf]
    %v1242 = vld [vmem:[#allocation16 + $0x18] sm:$0xf]
    %v1243 = vld [vmem:[#allocation16 + $0x1c] sm:$0xf]
    %v1244 = vld [vmem:[#allocation16 + $0x20] sm:$0xf]
    %v1245 = vld [vmem:[#allocation16 + $0x24] sm:$0xf]
    %v1246 = vld [vmem:[#allocation16 + $0x28] sm:$0xf]
    %v1247 = vld [vmem:[#allocation16 + $0x2c] sm:$0xf]
    %v1248 = vld [vmem:[#allocation16 + $0x30] sm:$0xf]
    %v1249 = vld [vmem:[#allocation16 + $0x34] sm:$0xf]
    %v1250 = vld [vmem:[#allocation16 + $0x38] sm:$0xf]
    %v1251 = vld [vmem:[#allocation16 + $0x3c] sm:$0xf]
    %v1252 = vld [vmem:[#allocation17] sm:$0x1]
    %v1254 = vperm.slane %v1252, 0
    %v1272 = vunpack.c.l.b16 %v1236
    %v1273 = vunpack.c.l.b16 %v1237
    %v1274 = vunpack.c.l.b16 %v1238
    %v1275 = vunpack.c.l.b16 %v1239
    %v1276 = vunpack.c.l.b16 %v1240
    %v1277 = vunpack.c.l.b16 %v1241
    %v1278 = vunpack.c.l.b16 %v1242
    %v1279 = vunpack.c.l.b16 %v1243
    %v1280 = vunpack.c.l.b16 %v1244
    %v1281 = vunpack.c.l.b16 %v1245
    %v1282 = vunpack.c.l.b16 %v1246
    %v1283 = vunpack.c.l.b16 %v1247
    %v1284 = vunpack.c.l.b16 %v1248
    %v1285 = vunpack.c.l.b16 %v1249
    %v1286 = vunpack.c.l.b16 %v1250
    %v1287 = vunpack.c.l.b16 %v1251
    %v1288 = vpack.c.b16 %v1273, %v1272
    %v1289 = vpack.c.b16 %v1275, %v1274
    %v1290 = vpack.c.b16 %v1277, %v1276
    %v1291 = vpack.c.b16 %v1279, %v1278
    %v1292 = vpack.c.b16 %v1281, %v1280
    %v1293 = vpack.c.b16 %v1283, %v1282
    %v1294 = vpack.c.b16 %v1285, %v1284
    %v1295 = vpack.c.b16 %v1287, %v1286
    %1304 = vmatpush.bf16.msra.mxu0 %v1295
    %1305 = vmatpush.bf16.msra.mxu0 %v1294
    %1306 = vmatpush.bf16.msra.mxu0 %v1293
    %1307 = vmatpush.bf16.msra.mxu0 %v1292
    %1308 = vmatpush.bf16.msra.mxu0 %v1291
    %1309 = vmatpush.bf16.msra.mxu0 %v1290
    %1310 = vmatpush.bf16.msra.mxu0 %v1289
    %1311 = vmatpush.bf16.msra.mxu0 %v1288
    %1312 = vmatmul.bf16.gmra.mxu0 %v1235
    %v1313 = vpop.f32.mrf.mxu0
    %v1314 = vadd.f32 %v1254, %v1313
    %v1315 = vpop.f32.mrf.mxu0
    %v1316 = vadd.f32 %v1254, %v1315
    %1317 = vdwg.mxu0
    %v1318 = vmax.f32 %v1314, 0.0
    %v1319 = vmax.f32 %v1316, 0.0
    %v1320 = vpack.c.bf16 %v1319, %v1318
    %v1321 = vld [vmem:[#allocation19] sm:$0xff]
    %v1322 = vld [vmem:[#allocation19 + $0x8] sm:$0xff]
    %v1323 = vld [vmem:[#allocation19 + $0x10] sm:$0xff]
    %v1324 = vld [vmem:[#allocation19 + $0x18] sm:$0xff]
    %v1325 = vld [vmem:[#allocation19 + $0x20] sm:$0xff]
    %v1326 = vld [vmem:[#allocation19 + $0x28] sm:$0xff]
    %v1327 = vld [vmem:[#allocation19 + $0x30] sm:$0xff]
    %v1328 = vld [vmem:[#allocation19 + $0x38] sm:$0xff]
    %v1329 = vld [vmem:[#allocation19 + $0x40] sm:$0xff]
    %v1330 = vld [vmem:[#allocation19 + $0x48] sm:$0xff]
    %v1331 = vld [vmem:[#allocation19 + $0x50] sm:$0xff]
    %v1332 = vld [vmem:[#allocation19 + $0x58] sm:$0xff]
    %v1333 = vld [vmem:[#allocation19 + $0x60] sm:$0xff]
    %v1334 = vld [vmem:[#allocation19 + $0x68] sm:$0xff]
    %v1335 = vld [vmem:[#allocation19 + $0x70] sm:$0xff]
    %v1336 = vld [vmem:[#allocation19 + $0x78] sm:$0xff]
    %v1337 = vld [vmem:[#allocation19 + $0x80] sm:$0xff]
    %v1338 = vld [vmem:[#allocation19 + $0x88] sm:$0xff]
    %v1339 = vld [vmem:[#allocation19 + $0x90] sm:$0xff]
    %v1340 = vld [vmem:[#allocation19 + $0x98] sm:$0xff]
    %v1341 = vld [vmem:[#allocation19 + $0xa0] sm:$0xff]
    %v1342 = vld [vmem:[#allocation19 + $0xa8] sm:$0xff]
    %v1343 = vld [vmem:[#allocation19 + $0xb0] sm:$0xff]
    %v1344 = vld [vmem:[#allocation19 + $0xb8] sm:$0xff]
    %v1345 = vld [vmem:[#allocation19 + $0xc0] sm:$0xff]
    %v1346 = vld [vmem:[#allocation19 + $0xc8] sm:$0xff]
    %v1347 = vld [vmem:[#allocation19 + $0xd0] sm:$0xff]
    %v1348 = vld [vmem:[#allocation19 + $0xd8] sm:$0xff]
    %v1349 = vld [vmem:[#allocation19 + $0xe0] sm:$0xff]
    %v1350 = vld [vmem:[#allocation19 + $0xe8] sm:$0xff]
    %v1351 = vld [vmem:[#allocation19 + $0xf0] sm:$0xff]
    %v1352 = vld [vmem:[#allocation19 + $0xf8] sm:$0xff]
    %v1353 = vld [vmem:[#allocation19 + $0x100] sm:$0xff]
    %v1354 = vld [vmem:[#allocation19 + $0x108] sm:$0xff]
    %v1355 = vld [vmem:[#allocation19 + $0x110] sm:$0xff]
    %v1356 = vld [vmem:[#allocation19 + $0x118] sm:$0xff]
    %v1357 = vld [vmem:[#allocation19 + $0x120] sm:$0xff]
    %v1358 = vld [vmem:[#allocation19 + $0x128] sm:$0xff]
    %v1359 = vld [vmem:[#allocation19 + $0x130] sm:$0xff]
    %v1360 = vld [vmem:[#allocation19 + $0x138] sm:$0xff]
    %v1361 = vld [vmem:[#allocation19 + $0x140] sm:$0xff]
    %v1362 = vld [vmem:[#allocation19 + $0x148] sm:$0xff]
    %v1363 = vld [vmem:[#allocation19 + $0x150] sm:$0xff]
    %v1364 = vld [vmem:[#allocation19 + $0x158] sm:$0xff]
    %v1365 = vld [vmem:[#allocation19 + $0x160] sm:$0xff]
    %v1366 = vld [vmem:[#allocation19 + $0x168] sm:$0xff]
    %v1367 = vld [vmem:[#allocation19 + $0x170] sm:$0xff]
    %v1368 = vld [vmem:[#allocation19 + $0x178] sm:$0xff]
    %v1369 = vld [vmem:[#allocation19 + $0x180] sm:$0xff]
    %v1370 = vld [vmem:[#allocation19 + $0x188] sm:$0xff]
    %v1371 = vld [vmem:[#allocation19 + $0x190] sm:$0xff]
    %v1372 = vld [vmem:[#allocation19 + $0x198] sm:$0xff]
    %v1373 = vld [vmem:[#allocation19 + $0x1a0] sm:$0xff]
    %v1374 = vld [vmem:[#allocation19 + $0x1a8] sm:$0xff]
    %v1375 = vld [vmem:[#allocation19 + $0x1b0] sm:$0xff]
    %v1376 = vld [vmem:[#allocation19 + $0x1b8] sm:$0xff]
    %v1377 = vld [vmem:[#allocation19 + $0x1c0] sm:$0xff]
    %v1378 = vld [vmem:[#allocation19 + $0x1c8] sm:$0xff]
    %v1379 = vld [vmem:[#allocation19 + $0x1d0] sm:$0xff]
    %v1380 = vld [vmem:[#allocation19 + $0x1d8] sm:$0xff]
    %v1381 = vld [vmem:[#allocation19 + $0x1e0] sm:$0xff]
    %v1382 = vld [vmem:[#allocation19 + $0x1e8] sm:$0xff]
    %v1383 = vld [vmem:[#allocation19 + $0x1f0] sm:$0xff]
    %v1384 = vld [vmem:[#allocation19 + $0x1f8] sm:$0xff]
    %v1385 = vld [vmem:[%s14] sm:$0xff]
    %v1387 = vperm.slane %v1385, 0
    %v1388 = vperm.slane %v1385, 1
    %v1389 = vperm.slane %v1385, 2
    %v1390 = vperm.slane %v1385, 3
    %v1391 = vperm.slane %v1385, 4
    %v1392 = vperm.slane %v1385, 5
    %v1393 = vperm.slane %v1385, 6
    %v1394 = vperm.slane %v1385, 7
    %v1467 = vunpack.c.l.b16 %v1321
    %v1468 = vunpack.c.h.b16 %v1321
    %v1469 = vunpack.c.l.b16 %v1322
    %v1470 = vunpack.c.h.b16 %v1322
    %v1471 = vunpack.c.l.b16 %v1323
    %v1472 = vunpack.c.h.b16 %v1323
    %v1473 = vunpack.c.l.b16 %v1324
    %v1474 = vunpack.c.h.b16 %v1324
    %v1475 = vunpack.c.l.b16 %v1325
    %v1476 = vunpack.c.h.b16 %v1325
    %v1477 = vunpack.c.l.b16 %v1326
    %v1478 = vunpack.c.h.b16 %v1326
    %v1479 = vunpack.c.l.b16 %v1327
    %v1480 = vunpack.c.h.b16 %v1327
    %v1481 = vunpack.c.l.b16 %v1328
    %v1482 = vunpack.c.h.b16 %v1328
    %v1483 = vunpack.c.l.b16 %v1329
    %v1484 = vunpack.c.h.b16 %v1329
    %v1485 = vunpack.c.l.b16 %v1330
    %v1486 = vunpack.c.h.b16 %v1330
    %v1487 = vunpack.c.l.b16 %v1331
    %v1488 = vunpack.c.h.b16 %v1331
    %v1489 = vunpack.c.l.b16 %v1332
    %v1490 = vunpack.c.h.b16 %v1332
    %v1491 = vunpack.c.l.b16 %v1333
    %v1492 = vunpack.c.h.b16 %v1333
    %v1493 = vunpack.c.l.b16 %v1334
    %v1494 = vunpack.c.h.b16 %v1334
    %v1495 = vunpack.c.l.b16 %v1335
    %v1496 = vunpack.c.h.b16 %v1335
    %v1497 = vunpack.c.l.b16 %v1336
    %v1498 = vunpack.c.h.b16 %v1336
    %v1499 = vunpack.c.l.b16 %v1337
    %v1500 = vunpack.c.h.b16 %v1337
    %v1501 = vunpack.c.l.b16 %v1338
    %v1502 = vunpack.c.h.b16 %v1338
    %v1503 = vunpack.c.l.b16 %v1339
    %v1504 = vunpack.c.h.b16 %v1339
    %v1505 = vunpack.c.l.b16 %v1340
    %v1506 = vunpack.c.h.b16 %v1340
    %v1507 = vunpack.c.l.b16 %v1341
    %v1508 = vunpack.c.h.b16 %v1341
    %v1509 = vunpack.c.l.b16 %v1342
    %v1510 = vunpack.c.h.b16 %v1342
    %v1511 = vunpack.c.l.b16 %v1343
    %v1512 = vunpack.c.h.b16 %v1343
    %v1513 = vunpack.c.l.b16 %v1344
    %v1514 = vunpack.c.h.b16 %v1344
    %v1515 = vunpack.c.l.b16 %v1345
    %v1516 = vunpack.c.h.b16 %v1345
    %v1517 = vunpack.c.l.b16 %v1346
    %v1518 = vunpack.c.h.b16 %v1346
    %v1519 = vunpack.c.l.b16 %v1347
    %v1520 = vunpack.c.h.b16 %v1347
    %v1521 = vunpack.c.l.b16 %v1348
    %v1522 = vunpack.c.h.b16 %v1348
    %v1523 = vunpack.c.l.b16 %v1349
    %v1524 = vunpack.c.h.b16 %v1349
    %v1525 = vunpack.c.l.b16 %v1350
    %v1526 = vunpack.c.h.b16 %v1350
    %v1527 = vunpack.c.l.b16 %v1351
    %v1528 = vunpack.c.h.b16 %v1351
    %v1529 = vunpack.c.l.b16 %v1352
    %v1530 = vunpack.c.h.b16 %v1352
    %v1531 = vunpack.c.l.b16 %v1353
    %v1532 = vunpack.c.h.b16 %v1353
    %v1533 = vunpack.c.l.b16 %v1354
    %v1534 = vunpack.c.h.b16 %v1354
    %v1535 = vunpack.c.l.b16 %v1355
    %v1536 = vunpack.c.h.b16 %v1355
    %v1537 = vunpack.c.l.b16 %v1356
    %v1538 = vunpack.c.h.b16 %v1356
    %v1539 = vunpack.c.l.b16 %v1357
    %v1540 = vunpack.c.h.b16 %v1357
    %v1541 = vunpack.c.l.b16 %v1358
    %v1542 = vunpack.c.h.b16 %v1358
    %v1543 = vunpack.c.l.b16 %v1359
    %v1544 = vunpack.c.h.b16 %v1359
    %v1545 = vunpack.c.l.b16 %v1360
    %v1546 = vunpack.c.h.b16 %v1360
    %v1547 = vunpack.c.l.b16 %v1361
    %v1548 = vunpack.c.h.b16 %v1361
    %v1549 = vunpack.c.l.b16 %v1362
    %v1550 = vunpack.c.h.b16 %v1362
    %v1551 = vunpack.c.l.b16 %v1363
    %v1552 = vunpack.c.h.b16 %v1363
    %v1553 = vunpack.c.l.b16 %v1364
    %v1554 = vunpack.c.h.b16 %v1364
    %v1555 = vunpack.c.l.b16 %v1365
    %v1556 = vunpack.c.h.b16 %v1365
    %v1557 = vunpack.c.l.b16 %v1366
    %v1558 = vunpack.c.h.b16 %v1366
    %v1559 = vunpack.c.l.b16 %v1367
    %v1560 = vunpack.c.h.b16 %v1367
    %v1561 = vunpack.c.l.b16 %v1368
    %v1562 = vunpack.c.h.b16 %v1368
    %v1563 = vunpack.c.l.b16 %v1369
    %v1564 = vunpack.c.h.b16 %v1369
    %v1565 = vunpack.c.l.b16 %v1370
    %v1566 = vunpack.c.h.b16 %v1370
    %v1567 = vunpack.c.l.b16 %v1371
    %v1568 = vunpack.c.h.b16 %v1371
    %v1569 = vunpack.c.l.b16 %v1372
    %v1570 = vunpack.c.h.b16 %v1372
    %v1571 = vunpack.c.l.b16 %v1373
    %v1572 = vunpack.c.h.b16 %v1373
    %v1573 = vunpack.c.l.b16 %v1374
    %v1574 = vunpack.c.h.b16 %v1374
    %v1575 = vunpack.c.l.b16 %v1375
    %v1576 = vunpack.c.h.b16 %v1375
    %v1577 = vunpack.c.l.b16 %v1376
    %v1578 = vunpack.c.h.b16 %v1376
    %v1579 = vunpack.c.l.b16 %v1377
    %v1580 = vunpack.c.h.b16 %v1377
    %v1581 = vunpack.c.l.b16 %v1378
    %v1582 = vunpack.c.h.b16 %v1378
    %v1583 = vunpack.c.l.b16 %v1379
    %v1584 = vunpack.c.h.b16 %v1379
    %v1585 = vunpack.c.l.b16 %v1380
    %v1586 = vunpack.c.h.b16 %v1380
    %v1587 = vunpack.c.l.b16 %v1381
    %v1588 = vunpack.c.h.b16 %v1381
    %v1589 = vunpack.c.l.b16 %v1382
    %v1590 = vunpack.c.h.b16 %v1382
    %v1591 = vunpack.c.l.b16 %v1383
    %v1592 = vunpack.c.h.b16 %v1383
    %v1593 = vunpack.c.l.b16 %v1384
    %v1594 = vunpack.c.h.b16 %v1384
    %v1595 = vpack.c.b16 %v1475, %v1467
    %v1596 = vpack.c.b16 %v1476, %v1468
    %v1597 = vpack.c.b16 %v1477, %v1469
    %v1598 = vpack.c.b16 %v1478, %v1470
    %v1599 = vpack.c.b16 %v1479, %v1471
    %v1600 = vpack.c.b16 %v1480, %v1472
    %v1601 = vpack.c.b16 %v1481, %v1473
    %v1602 = vpack.c.b16 %v1482, %v1474
    %v1603 = vpack.c.b16 %v1491, %v1483
    %v1604 = vpack.c.b16 %v1492, %v1484
    %v1605 = vpack.c.b16 %v1493, %v1485
    %v1606 = vpack.c.b16 %v1494, %v1486
    %v1607 = vpack.c.b16 %v1495, %v1487
    %v1608 = vpack.c.b16 %v1496, %v1488
    %v1609 = vpack.c.b16 %v1497, %v1489
    %v1610 = vpack.c.b16 %v1498, %v1490
    %v1611 = vpack.c.b16 %v1507, %v1499
    %v1612 = vpack.c.b16 %v1508, %v1500
    %v1613 = vpack.c.b16 %v1509, %v1501
    %v1614 = vpack.c.b16 %v1510, %v1502
    %v1615 = vpack.c.b16 %v1511, %v1503
    %v1616 = vpack.c.b16 %v1512, %v1504
    %v1617 = vpack.c.b16 %v1513, %v1505
    %v1618 = vpack.c.b16 %v1514, %v1506
    %v1619 = vpack.c.b16 %v1523, %v1515
    %v1620 = vpack.c.b16 %v1524, %v1516
    %v1621 = vpack.c.b16 %v1525, %v1517
    %v1622 = vpack.c.b16 %v1526, %v1518
    %v1623 = vpack.c.b16 %v1527, %v1519
    %v1624 = vpack.c.b16 %v1528, %v1520
    %v1625 = vpack.c.b16 %v1529, %v1521
    %v1626 = vpack.c.b16 %v1530, %v1522
    %v1627 = vpack.c.b16 %v1539, %v1531
    %v1628 = vpack.c.b16 %v1540, %v1532
    %v1629 = vpack.c.b16 %v1541, %v1533
    %v1630 = vpack.c.b16 %v1542, %v1534
    %v1631 = vpack.c.b16 %v1543, %v1535
    %v1632 = vpack.c.b16 %v1544, %v1536
    %v1633 = vpack.c.b16 %v1545, %v1537
    %v1634 = vpack.c.b16 %v1546, %v1538
    %v1635 = vpack.c.b16 %v1555, %v1547
    %v1636 = vpack.c.b16 %v1556, %v1548
    %v1637 = vpack.c.b16 %v1557, %v1549
    %v1638 = vpack.c.b16 %v1558, %v1550
    %v1639 = vpack.c.b16 %v1559, %v1551
    %v1640 = vpack.c.b16 %v1560, %v1552
    %v1641 = vpack.c.b16 %v1561, %v1553
    %v1642 = vpack.c.b16 %v1562, %v1554
    %v1643 = vpack.c.b16 %v1571, %v1563
    %v1644 = vpack.c.b16 %v1572, %v1564
    %v1645 = vpack.c.b16 %v1573, %v1565
    %v1646 = vpack.c.b16 %v1574, %v1566
    %v1647 = vpack.c.b16 %v1575, %v1567
    %v1648 = vpack.c.b16 %v1576, %v1568
    %v1649 = vpack.c.b16 %v1577, %v1569
    %v1650 = vpack.c.b16 %v1578, %v1570
    %v1651 = vpack.c.b16 %v1587, %v1579
    %v1652 = vpack.c.b16 %v1588, %v1580
    %v1653 = vpack.c.b16 %v1589, %v1581
    %v1654 = vpack.c.b16 %v1590, %v1582
    %v1655 = vpack.c.b16 %v1591, %v1583
    %v1656 = vpack.c.b16 %v1592, %v1584
    %v1657 = vpack.c.b16 %v1593, %v1585
    %v1658 = vpack.c.b16 %v1594, %v1586
    %1723 = vmatpush.bf16.msra.mxu0 %v1651
    %1724 = vmatpush.bf16.msra.mxu0 %v1643
    %1725 = vmatpush.bf16.msra.mxu0 %v1635
    %1726 = vmatpush.bf16.msra.mxu0 %v1627
    %1727 = vmatpush.bf16.msra.mxu0 %v1619
    %1728 = vmatpush.bf16.msra.mxu0 %v1611
    %1729 = vmatpush.bf16.msra.mxu0 %v1603
    %1730 = vmatpush.bf16.msra.mxu0 %v1595
    %1731 = vmatmul.bf16.gmra.mxu0 %v1320
    %v1732 = vpop.f32.mrf.mxu0
    %v1733 = vadd.f32 %v1387, %v1732
    %v1734 = vpop.f32.mrf.mxu0
    %v1735 = vadd.f32 %v1387, %v1734
    %1736 = vdwg.mxu0
    %1737 = vmatpush.bf16.msra.mxu0 %v1652
    %1738 = vmatpush.bf16.msra.mxu0 %v1644
    %1739 = vmatpush.bf16.msra.mxu0 %v1636
    %1740 = vmatpush.bf16.msra.mxu0 %v1628
    %1741 = vmatpush.bf16.msra.mxu0 %v1620
    %1742 = vmatpush.bf16.msra.mxu0 %v1612
    %1743 = vmatpush.bf16.msra.mxu0 %v1604
    %1744 = vmatpush.bf16.msra.mxu0 %v1596
    %1745 = vmatmul.bf16.gmra.mxu0 %v1320
    %v1746 = vpop.f32.mrf.mxu0
    %v1747 = vadd.f32 %v1388, %v1746
    %v1748 = vpop.f32.mrf.mxu0
    %v1749 = vadd.f32 %v1388, %v1748
    %1750 = vdwg.mxu0
    %1751 = vmatpush.bf16.msra.mxu0 %v1653
    %1752 = vmatpush.bf16.msra.mxu0 %v1645
    %1753 = vmatpush.bf16.msra.mxu0 %v1637
    %1754 = vmatpush.bf16.msra.mxu0 %v1629
    %1755 = vmatpush.bf16.msra.mxu0 %v1621
    %1756 = vmatpush.bf16.msra.mxu0 %v1613
    %1757 = vmatpush.bf16.msra.mxu0 %v1605
    %1758 = vmatpush.bf16.msra.mxu0 %v1597
    %1759 = vmatmul.bf16.gmra.mxu0 %v1320
    %v1760 = vpop.f32.mrf.mxu0
    %v1761 = vadd.f32 %v1389, %v1760
    %v1762 = vpop.f32.mrf.mxu0
    %v1763 = vadd.f32 %v1389, %v1762
    %1764 = vdwg.mxu0
    %1765 = vmatpush.bf16.msra.mxu0 %v1654
    %1766 = vmatpush.bf16.msra.mxu0 %v1646
    %1767 = vmatpush.bf16.msra.mxu0 %v1638
    %1768 = vmatpush.bf16.msra.mxu0 %v1630
    %1769 = vmatpush.bf16.msra.mxu0 %v1622
    %1770 = vmatpush.bf16.msra.mxu0 %v1614
    %1771 = vmatpush.bf16.msra.mxu0 %v1606
    %1772 = vmatpush.bf16.msra.mxu0 %v1598
    %1773 = vmatmul.bf16.gmra.mxu0 %v1320
    %v1774 = vpop.f32.mrf.mxu0
    %v1775 = vadd.f32 %v1390, %v1774
    %v1776 = vpop.f32.mrf.mxu0
    %v1777 = vadd.f32 %v1390, %v1776
    %1778 = vdwg.mxu0
    %1779 = vmatpush.bf16.msra.mxu0 %v1655
    %1780 = vmatpush.bf16.msra.mxu0 %v1647
    %1781 = vmatpush.bf16.msra.mxu0 %v1639
    %1782 = vmatpush.bf16.msra.mxu0 %v1631
    %1783 = vmatpush.bf16.msra.mxu0 %v1623
    %1784 = vmatpush.bf16.msra.mxu0 %v1615
    %1785 = vmatpush.bf16.msra.mxu0 %v1607
    %1786 = vmatpush.bf16.msra.mxu0 %v1599
    %1787 = vmatmul.bf16.gmra.mxu0 %v1320
    %v1788 = vpop.f32.mrf.mxu0
    %v1789 = vadd.f32 %v1391, %v1788
    %v1790 = vpop.f32.mrf.mxu0
    %v1791 = vadd.f32 %v1391, %v1790
    %1792 = vdwg.mxu0
    %1793 = vmatpush.bf16.msra.mxu0 %v1656
    %1794 = vmatpush.bf16.msra.mxu0 %v1648
    %1795 = vmatpush.bf16.msra.mxu0 %v1640
    %1796 = vmatpush.bf16.msra.mxu0 %v1632
    %1797 = vmatpush.bf16.msra.mxu0 %v1624
    %1798 = vmatpush.bf16.msra.mxu0 %v1616
    %1799 = vmatpush.bf16.msra.mxu0 %v1608
    %1800 = vmatpush.bf16.msra.mxu0 %v1600
    %1801 = vmatmul.bf16.gmra.mxu0 %v1320
    %v1802 = vpop.f32.mrf.mxu0
    %v1803 = vadd.f32 %v1392, %v1802
    %v1804 = vpop.f32.mrf.mxu0
    %v1805 = vadd.f32 %v1392, %v1804
    %1806 = vdwg.mxu0
    %1807 = vmatpush.bf16.msra.mxu0 %v1657
    %1808 = vmatpush.bf16.msra.mxu0 %v1649
    %1809 = vmatpush.bf16.msra.mxu0 %v1641
    %1810 = vmatpush.bf16.msra.mxu0 %v1633
    %1811 = vmatpush.bf16.msra.mxu0 %v1625
    %1812 = vmatpush.bf16.msra.mxu0 %v1617
    %1813 = vmatpush.bf16.msra.mxu0 %v1609
    %1814 = vmatpush.bf16.msra.mxu0 %v1601
    %1815 = vmatmul.bf16.gmra.mxu0 %v1320
    %v1816 = vpop.f32.mrf.mxu0
    %v1817 = vadd.f32 %v1393, %v1816
    %v1818 = vpop.f32.mrf.mxu0
    %v1819 = vadd.f32 %v1393, %v1818
    %1820 = vdwg.mxu0
    %1821 = vmatpush.bf16.msra.mxu0 %v1658
    %1822 = vmatpush.bf16.msra.mxu0 %v1650
    %1823 = vmatpush.bf16.msra.mxu0 %v1642
    %1824 = vmatpush.bf16.msra.mxu0 %v1634
    %1825 = vmatpush.bf16.msra.mxu0 %v1626
    %1826 = vmatpush.bf16.msra.mxu0 %v1618
    %1827 = vmatpush.bf16.msra.mxu0 %v1610
    %1828 = vmatpush.bf16.msra.mxu0 %v1602
    %1829 = vmatmul.bf16.gmra.mxu0 %v1320
    %v1830 = vpop.f32.mrf.mxu0
    %v1831 = vadd.f32 %v1394, %v1830
    %v1832 = vpop.f32.mrf.mxu0
    %v1833 = vadd.f32 %v1394, %v1832
    %1834 = vdwg.mxu0
    %v1835 = vmax.f32 %v1733, 0.0
    %v1836 = vmax.f32 %v1747, 0.0
    %v1837 = vmax.f32 %v1761, 0.0
    %v1838 = vmax.f32 %v1775, 0.0
    %v1839 = vmax.f32 %v1789, 0.0
    %v1840 = vmax.f32 %v1803, 0.0
    %v1841 = vmax.f32 %v1817, 0.0
    %v1842 = vmax.f32 %v1831, 0.0
    %v1843 = vmax.f32 %v1735, 0.0
    %v1844 = vmax.f32 %v1749, 0.0
    %v1845 = vmax.f32 %v1763, 0.0
    %v1846 = vmax.f32 %v1777, 0.0
    %v1847 = vmax.f32 %v1791, 0.0
    %v1848 = vmax.f32 %v1805, 0.0
    %v1849 = vmax.f32 %v1819, 0.0
    %v1850 = vmax.f32 %v1833, 0.0
    %v1851 = vpack.c.bf16 %v1843, %v1835
    %v1852 = vpack.c.bf16 %v1844, %v1836
    %v1853 = vpack.c.bf16 %v1845, %v1837
    %v1854 = vpack.c.bf16 %v1846, %v1838
    %v1855 = vpack.c.bf16 %v1847, %v1839
    %v1856 = vpack.c.bf16 %v1848, %v1840
    %v1857 = vpack.c.bf16 %v1849, %v1841
    %v1858 = vpack.c.bf16 %v1850, %v1842
    %v1859 = vld [vmem:[#allocation20] sm:$0xff]
    %v1860 = vld [vmem:[#allocation20 + $0x8] sm:$0xff]
    %v1861 = vld [vmem:[#allocation20 + $0x10] sm:$0xff]
    %v1862 = vld [vmem:[#allocation20 + $0x18] sm:$0xff]
    %v1863 = vld [vmem:[#allocation20 + $0x20] sm:$0xff]
    %v1864 = vld [vmem:[#allocation20 + $0x28] sm:$0xff]
    %v1865 = vld [vmem:[#allocation20 + $0x30] sm:$0xff]
    %v1866 = vld [vmem:[#allocation20 + $0x38] sm:$0xff]
    %v1867 = vld [vmem:[#allocation20 + $0x40] sm:$0xff]
    %v1868 = vld [vmem:[#allocation20 + $0x48] sm:$0xff]
    %v1869 = vld [vmem:[#allocation20 + $0x50] sm:$0xff]
    %v1870 = vld [vmem:[#allocation20 + $0x58] sm:$0xff]
    %v1871 = vld [vmem:[#allocation20 + $0x60] sm:$0xff]
    %v1872 = vld [vmem:[#allocation20 + $0x68] sm:$0xff]
    %v1873 = vld [vmem:[#allocation20 + $0x70] sm:$0xff]
    %v1874 = vld [vmem:[#allocation20 + $0x78] sm:$0xff]
    %v1875 = vld [vmem:[#allocation20 + $0x80] sm:$0xff]
    %v1876 = vld [vmem:[#allocation20 + $0x88] sm:$0xff]
    %v1877 = vld [vmem:[#allocation20 + $0x90] sm:$0xff]
    %v1878 = vld [vmem:[#allocation20 + $0x98] sm:$0xff]
    %v1879 = vld [vmem:[#allocation20 + $0xa0] sm:$0xff]
    %v1880 = vld [vmem:[#allocation20 + $0xa8] sm:$0xff]
    %v1881 = vld [vmem:[#allocation20 + $0xb0] sm:$0xff]
    %v1882 = vld [vmem:[#allocation20 + $0xb8] sm:$0xff]
    %v1883 = vld [vmem:[#allocation20 + $0xc0] sm:$0xff]
    %v1884 = vld [vmem:[#allocation20 + $0xc8] sm:$0xff]
    %v1885 = vld [vmem:[#allocation20 + $0xd0] sm:$0xff]
    %v1886 = vld [vmem:[#allocation20 + $0xd8] sm:$0xff]
    %v1887 = vld [vmem:[#allocation20 + $0xe0] sm:$0xff]
    %v1888 = vld [vmem:[#allocation20 + $0xe8] sm:$0xff]
    %v1889 = vld [vmem:[#allocation20 + $0xf0] sm:$0xff]
    %v1890 = vld [vmem:[#allocation20 + $0xf8] sm:$0xff]
    %v1891 = vld [vmem:[#allocation20 + $0x100] sm:$0xff]
    %v1892 = vld [vmem:[#allocation20 + $0x108] sm:$0xff]
    %v1893 = vld [vmem:[#allocation20 + $0x110] sm:$0xff]
    %v1894 = vld [vmem:[#allocation20 + $0x118] sm:$0xff]
    %v1895 = vld [vmem:[#allocation20 + $0x120] sm:$0xff]
    %v1896 = vld [vmem:[#allocation20 + $0x128] sm:$0xff]
    %v1897 = vld [vmem:[#allocation20 + $0x130] sm:$0xff]
    %v1898 = vld [vmem:[#allocation20 + $0x138] sm:$0xff]
    %v1899 = vld [vmem:[#allocation20 + $0x140] sm:$0xff]
    %v1900 = vld [vmem:[#allocation20 + $0x148] sm:$0xff]
    %v1901 = vld [vmem:[#allocation20 + $0x150] sm:$0xff]
    %v1902 = vld [vmem:[#allocation20 + $0x158] sm:$0xff]
    %v1903 = vld [vmem:[#allocation20 + $0x160] sm:$0xff]
    %v1904 = vld [vmem:[#allocation20 + $0x168] sm:$0xff]
    %v1905 = vld [vmem:[#allocation20 + $0x170] sm:$0xff]
    %v1906 = vld [vmem:[#allocation20 + $0x178] sm:$0xff]
    %v1907 = vld [vmem:[#allocation20 + $0x180] sm:$0xff]
    %v1908 = vld [vmem:[#allocation20 + $0x188] sm:$0xff]
    %v1909 = vld [vmem:[#allocation20 + $0x190] sm:$0xff]
    %v1910 = vld [vmem:[#allocation20 + $0x198] sm:$0xff]
    %v1911 = vld [vmem:[#allocation20 + $0x1a0] sm:$0xff]
    %v1912 = vld [vmem:[#allocation20 + $0x1a8] sm:$0xff]
    %v1913 = vld [vmem:[#allocation20 + $0x1b0] sm:$0xff]
    %v1914 = vld [vmem:[#allocation20 + $0x1b8] sm:$0xff]
    %v1915 = vld [vmem:[#allocation20 + $0x1c0] sm:$0xff]
    %v1916 = vld [vmem:[#allocation20 + $0x1c8] sm:$0xff]
    %v1917 = vld [vmem:[#allocation20 + $0x1d0] sm:$0xff]
    %v1918 = vld [vmem:[#allocation20 + $0x1d8] sm:$0xff]
    %v1919 = vld [vmem:[#allocation20 + $0x1e0] sm:$0xff]
    %v1920 = vld [vmem:[#allocation20 + $0x1e8] sm:$0xff]
    %v1921 = vld [vmem:[#allocation20 + $0x1f0] sm:$0xff]
    %v1922 = vld [vmem:[#allocation20 + $0x1f8] sm:$0xff]
    %v1923 = vld [vmem:[#allocation20 + $0x200] sm:$0xff]
    %v1924 = vld [vmem:[#allocation20 + $0x208] sm:$0xff]
    %v1925 = vld [vmem:[#allocation20 + $0x210] sm:$0xff]
    %v1926 = vld [vmem:[#allocation20 + $0x218] sm:$0xff]
    %v1927 = vld [vmem:[#allocation20 + $0x220] sm:$0xff]
    %v1928 = vld [vmem:[#allocation20 + $0x228] sm:$0xff]
    %v1929 = vld [vmem:[#allocation20 + $0x230] sm:$0xff]
    %v1930 = vld [vmem:[#allocation20 + $0x238] sm:$0xff]
    %v1931 = vld [vmem:[#allocation20 + $0x240] sm:$0xff]
    %v1932 = vld [vmem:[#allocation20 + $0x248] sm:$0xff]
    %v1933 = vld [vmem:[#allocation20 + $0x250] sm:$0xff]
    %v1934 = vld [vmem:[#allocation20 + $0x258] sm:$0xff]
    %v1935 = vld [vmem:[#allocation20 + $0x260] sm:$0xff]
    %v1936 = vld [vmem:[#allocation20 + $0x268] sm:$0xff]
    %v1937 = vld [vmem:[#allocation20 + $0x270] sm:$0xff]
    %v1938 = vld [vmem:[#allocation20 + $0x278] sm:$0xff]
    %v1939 = vld [vmem:[#allocation20 + $0x280] sm:$0xff]
    %v1940 = vld [vmem:[#allocation20 + $0x288] sm:$0xff]
    %v1941 = vld [vmem:[#allocation20 + $0x290] sm:$0xff]
    %v1942 = vld [vmem:[#allocation20 + $0x298] sm:$0xff]
    %v1943 = vld [vmem:[#allocation20 + $0x2a0] sm:$0xff]
    %v1944 = vld [vmem:[#allocation20 + $0x2a8] sm:$0xff]
    %v1945 = vld [vmem:[#allocation20 + $0x2b0] sm:$0xff]
    %v1946 = vld [vmem:[#allocation20 + $0x2b8] sm:$0xff]
    %v1947 = vld [vmem:[#allocation20 + $0x2c0] sm:$0xff]
    %v1948 = vld [vmem:[#allocation20 + $0x2c8] sm:$0xff]
    %v1949 = vld [vmem:[#allocation20 + $0x2d0] sm:$0xff]
    %v1950 = vld [vmem:[#allocation20 + $0x2d8] sm:$0xff]
    %v1951 = vld [vmem:[#allocation20 + $0x2e0] sm:$0xff]
    %v1952 = vld [vmem:[#allocation20 + $0x2e8] sm:$0xff]
    %v1953 = vld [vmem:[#allocation20 + $0x2f0] sm:$0xff]
    %v1954 = vld [vmem:[#allocation20 + $0x2f8] sm:$0xff]
    %v1955 = vld [vmem:[#allocation20 + $0x300] sm:$0xff]
    %v1956 = vld [vmem:[#allocation20 + $0x308] sm:$0xff]
    %v1957 = vld [vmem:[#allocation20 + $0x310] sm:$0xff]
    %v1958 = vld [vmem:[#allocation20 + $0x318] sm:$0xff]
    %v1959 = vld [vmem:[#allocation20 + $0x320] sm:$0xff]
    %v1960 = vld [vmem:[#allocation20 + $0x328] sm:$0xff]
    %v1961 = vld [vmem:[#allocation20 + $0x330] sm:$0xff]
    %v1962 = vld [vmem:[#allocation20 + $0x338] sm:$0xff]
    %v1963 = vld [vmem:[#allocation20 + $0x340] sm:$0xff]
    %v1964 = vld [vmem:[#allocation20 + $0x348] sm:$0xff]
    %v1965 = vld [vmem:[#allocation20 + $0x350] sm:$0xff]
    %v1966 = vld [vmem:[#allocation20 + $0x358] sm:$0xff]
    %v1967 = vld [vmem:[#allocation20 + $0x360] sm:$0xff]
    %v1968 = vld [vmem:[#allocation20 + $0x368] sm:$0xff]
    %v1969 = vld [vmem:[#allocation20 + $0x370] sm:$0xff]
    %v1970 = vld [vmem:[#allocation20 + $0x378] sm:$0xff]
    %v1971 = vld [vmem:[#allocation20 + $0x380] sm:$0xff]
    %v1972 = vld [vmem:[#allocation20 + $0x388] sm:$0xff]
    %v1973 = vld [vmem:[#allocation20 + $0x390] sm:$0xff]
    %v1974 = vld [vmem:[#allocation20 + $0x398] sm:$0xff]
    %v1975 = vld [vmem:[#allocation20 + $0x3a0] sm:$0xff]
    %v1976 = vld [vmem:[#allocation20 + $0x3a8] sm:$0xff]
    %v1977 = vld [vmem:[#allocation20 + $0x3b0] sm:$0xff]
    %v1978 = vld [vmem:[#allocation20 + $0x3b8] sm:$0xff]
    %v1979 = vld [vmem:[#allocation20 + $0x3c0] sm:$0xff]
    %v1980 = vld [vmem:[#allocation20 + $0x3c8] sm:$0xff]
    %v1981 = vld [vmem:[#allocation20 + $0x3d0] sm:$0xff]
    %v1982 = vld [vmem:[#allocation20 + $0x3d8] sm:$0xff]
    %v1983 = vld [vmem:[#allocation20 + $0x3e0] sm:$0xff]
    %v1984 = vld [vmem:[#allocation20 + $0x3e8] sm:$0xff]
    %v1985 = vld [vmem:[#allocation20 + $0x3f0] sm:$0xff]
    %v1986 = vld [vmem:[#allocation20 + $0x3f8] sm:$0xff]
    %v1987 = vld [vmem:[#allocation20 + $0x400] sm:$0xff]
    %v1988 = vld [vmem:[#allocation20 + $0x408] sm:$0xff]
    %v1989 = vld [vmem:[#allocation20 + $0x410] sm:$0xff]
    %v1990 = vld [vmem:[#allocation20 + $0x418] sm:$0xff]
    %v1991 = vld [vmem:[#allocation20 + $0x420] sm:$0xff]
    %v1992 = vld [vmem:[#allocation20 + $0x428] sm:$0xff]
    %v1993 = vld [vmem:[#allocation20 + $0x430] sm:$0xff]
    %v1994 = vld [vmem:[#allocation20 + $0x438] sm:$0xff]
    %v1995 = vld [vmem:[#allocation20 + $0x440] sm:$0xff]
    %v1996 = vld [vmem:[#allocation20 + $0x448] sm:$0xff]
    %v1997 = vld [vmem:[#allocation20 + $0x450] sm:$0xff]
    %v1998 = vld [vmem:[#allocation20 + $0x458] sm:$0xff]
    %v1999 = vld [vmem:[#allocation20 + $0x460] sm:$0xff]
    %v2000 = vld [vmem:[#allocation20 + $0x468] sm:$0xff]
    %v2001 = vld [vmem:[#allocation20 + $0x470] sm:$0xff]
    %v2002 = vld [vmem:[#allocation20 + $0x478] sm:$0xff]
    %v2003 = vld [vmem:[#allocation20 + $0x480] sm:$0xff]
    %v2004 = vld [vmem:[#allocation20 + $0x488] sm:$0xff]
    %v2005 = vld [vmem:[#allocation20 + $0x490] sm:$0xff]
    %v2006 = vld [vmem:[#allocation20 + $0x498] sm:$0xff]
    %v2007 = vld [vmem:[#allocation20 + $0x4a0] sm:$0xff]
    %v2008 = vld [vmem:[#allocation20 + $0x4a8] sm:$0xff]
    %v2009 = vld [vmem:[#allocation20 + $0x4b0] sm:$0xff]
    %v2010 = vld [vmem:[#allocation20 + $0x4b8] sm:$0xff]
    %v2011 = vld [vmem:[#allocation20 + $0x4c0] sm:$0xff]
    %v2012 = vld [vmem:[#allocation20 + $0x4c8] sm:$0xff]
    %v2013 = vld [vmem:[#allocation20 + $0x4d0] sm:$0xff]
    %v2014 = vld [vmem:[#allocation20 + $0x4d8] sm:$0xff]
    %v2015 = vld [vmem:[#allocation20 + $0x4e0] sm:$0xff]
    %v2016 = vld [vmem:[#allocation20 + $0x4e8] sm:$0xff]
    %v2017 = vld [vmem:[#allocation20 + $0x4f0] sm:$0xff]
    %v2018 = vld [vmem:[#allocation20 + $0x4f8] sm:$0xff]
    %v2019 = vld [vmem:[#allocation20 + $0x500] sm:$0xff]
    %v2020 = vld [vmem:[#allocation20 + $0x508] sm:$0xff]
    %v2021 = vld [vmem:[#allocation20 + $0x510] sm:$0xff]
    %v2022 = vld [vmem:[#allocation20 + $0x518] sm:$0xff]
    %v2023 = vld [vmem:[#allocation20 + $0x520] sm:$0xff]
    %v2024 = vld [vmem:[#allocation20 + $0x528] sm:$0xff]
    %v2025 = vld [vmem:[#allocation20 + $0x530] sm:$0xff]
    %v2026 = vld [vmem:[#allocation20 + $0x538] sm:$0xff]
    %v2027 = vld [vmem:[#allocation20 + $0x540] sm:$0xff]
    %v2028 = vld [vmem:[#allocation20 + $0x548] sm:$0xff]
    %v2029 = vld [vmem:[#allocation20 + $0x550] sm:$0xff]
    %v2030 = vld [vmem:[#allocation20 + $0x558] sm:$0xff]
    %v2031 = vld [vmem:[#allocation20 + $0x560] sm:$0xff]
    %v2032 = vld [vmem:[#allocation20 + $0x568] sm:$0xff]
    %v2033 = vld [vmem:[#allocation20 + $0x570] sm:$0xff]
    %v2034 = vld [vmem:[#allocation20 + $0x578] sm:$0xff]
    %v2035 = vld [vmem:[#allocation20 + $0x580] sm:$0xff]
    %v2036 = vld [vmem:[#allocation20 + $0x588] sm:$0xff]
    %v2037 = vld [vmem:[#allocation20 + $0x590] sm:$0xff]
    %v2038 = vld [vmem:[#allocation20 + $0x598] sm:$0xff]
    %v2039 = vld [vmem:[#allocation20 + $0x5a0] sm:$0xff]
    %v2040 = vld [vmem:[#allocation20 + $0x5a8] sm:$0xff]
    %v2041 = vld [vmem:[#allocation20 + $0x5b0] sm:$0xff]
    %v2042 = vld [vmem:[#allocation20 + $0x5b8] sm:$0xff]
    %v2043 = vld [vmem:[#allocation20 + $0x5c0] sm:$0xff]
    %v2044 = vld [vmem:[#allocation20 + $0x5c8] sm:$0xff]
    %v2045 = vld [vmem:[#allocation20 + $0x5d0] sm:$0xff]
    %v2046 = vld [vmem:[#allocation20 + $0x5d8] sm:$0xff]
    %v2047 = vld [vmem:[#allocation20 + $0x5e0] sm:$0xff]
    %v2048 = vld [vmem:[#allocation20 + $0x5e8] sm:$0xff]
    %v2049 = vld [vmem:[#allocation20 + $0x5f0] sm:$0xff]
    %v2050 = vld [vmem:[#allocation20 + $0x5f8] sm:$0xff]
    %v2051 = vld [vmem:[#allocation20 + $0x600] sm:$0xff]
    %v2052 = vld [vmem:[#allocation20 + $0x608] sm:$0xff]
    %v2053 = vld [vmem:[#allocation20 + $0x610] sm:$0xff]
    %v2054 = vld [vmem:[#allocation20 + $0x618] sm:$0xff]
    %v2055 = vld [vmem:[#allocation20 + $0x620] sm:$0xff]
    %v2056 = vld [vmem:[#allocation20 + $0x628] sm:$0xff]
    %v2057 = vld [vmem:[#allocation20 + $0x630] sm:$0xff]
    %v2058 = vld [vmem:[#allocation20 + $0x638] sm:$0xff]
    %v2059 = vld [vmem:[#allocation20 + $0x640] sm:$0xff]
    %v2060 = vld [vmem:[#allocation20 + $0x648] sm:$0xff]
    %v2061 = vld [vmem:[#allocation20 + $0x650] sm:$0xff]
    %v2062 = vld [vmem:[#allocation20 + $0x658] sm:$0xff]
    %v2063 = vld [vmem:[#allocation20 + $0x660] sm:$0xff]
    %v2064 = vld [vmem:[#allocation20 + $0x668] sm:$0xff]
    %v2065 = vld [vmem:[#allocation20 + $0x670] sm:$0xff]
    %v2066 = vld [vmem:[#allocation20 + $0x678] sm:$0xff]
    %v2067 = vld [vmem:[#allocation20 + $0x680] sm:$0xff]
    %v2068 = vld [vmem:[#allocation20 + $0x688] sm:$0xff]
    %v2069 = vld [vmem:[#allocation20 + $0x690] sm:$0xff]
    %v2070 = vld [vmem:[#allocation20 + $0x698] sm:$0xff]
    %v2071 = vld [vmem:[#allocation20 + $0x6a0] sm:$0xff]
    %v2072 = vld [vmem:[#allocation20 + $0x6a8] sm:$0xff]
    %v2073 = vld [vmem:[#allocation20 + $0x6b0] sm:$0xff]
    %v2074 = vld [vmem:[#allocation20 + $0x6b8] sm:$0xff]
    %v2075 = vld [vmem:[#allocation20 + $0x6c0] sm:$0xff]
    %v2076 = vld [vmem:[#allocation20 + $0x6c8] sm:$0xff]
    %v2077 = vld [vmem:[#allocation20 + $0x6d0] sm:$0xff]
    %v2078 = vld [vmem:[#allocation20 + $0x6d8] sm:$0xff]
    %v2079 = vld [vmem:[#allocation20 + $0x6e0] sm:$0xff]
    %v2080 = vld [vmem:[#allocation20 + $0x6e8] sm:$0xff]
    %v2081 = vld [vmem:[#allocation20 + $0x6f0] sm:$0xff]
    %v2082 = vld [vmem:[#allocation20 + $0x6f8] sm:$0xff]
    %v2083 = vld [vmem:[#allocation20 + $0x700] sm:$0xff]
    %v2084 = vld [vmem:[#allocation20 + $0x708] sm:$0xff]
    %v2085 = vld [vmem:[#allocation20 + $0x710] sm:$0xff]
    %v2086 = vld [vmem:[#allocation20 + $0x718] sm:$0xff]
    %v2087 = vld [vmem:[#allocation20 + $0x720] sm:$0xff]
    %v2088 = vld [vmem:[#allocation20 + $0x728] sm:$0xff]
    %v2089 = vld [vmem:[#allocation20 + $0x730] sm:$0xff]
    %v2090 = vld [vmem:[#allocation20 + $0x738] sm:$0xff]
    %v2091 = vld [vmem:[#allocation20 + $0x740] sm:$0xff]
    %v2092 = vld [vmem:[#allocation20 + $0x748] sm:$0xff]
    %v2093 = vld [vmem:[#allocation20 + $0x750] sm:$0xff]
    %v2094 = vld [vmem:[#allocation20 + $0x758] sm:$0xff]
    %v2095 = vld [vmem:[#allocation20 + $0x760] sm:$0xff]
    %v2096 = vld [vmem:[#allocation20 + $0x768] sm:$0xff]
    %v2097 = vld [vmem:[#allocation20 + $0x770] sm:$0xff]
    %v2098 = vld [vmem:[#allocation20 + $0x778] sm:$0xff]
    %v2099 = vld [vmem:[#allocation20 + $0x780] sm:$0xff]
    %v2100 = vld [vmem:[#allocation20 + $0x788] sm:$0xff]
    %v2101 = vld [vmem:[#allocation20 + $0x790] sm:$0xff]
    %v2102 = vld [vmem:[#allocation20 + $0x798] sm:$0xff]
    %v2103 = vld [vmem:[#allocation20 + $0x7a0] sm:$0xff]
    %v2104 = vld [vmem:[#allocation20 + $0x7a8] sm:$0xff]
    %v2105 = vld [vmem:[#allocation20 + $0x7b0] sm:$0xff]
    %v2106 = vld [vmem:[#allocation20 + $0x7b8] sm:$0xff]
    %v2107 = vld [vmem:[#allocation20 + $0x7c0] sm:$0xff]
    %v2108 = vld [vmem:[#allocation20 + $0x7c8] sm:$0xff]
    %v2109 = vld [vmem:[#allocation20 + $0x7d0] sm:$0xff]
    %v2110 = vld [vmem:[#allocation20 + $0x7d8] sm:$0xff]
    %v2111 = vld [vmem:[#allocation20 + $0x7e0] sm:$0xff]
    %v2112 = vld [vmem:[#allocation20 + $0x7e8] sm:$0xff]
    %v2113 = vld [vmem:[#allocation20 + $0x7f0] sm:$0xff]
    %v2114 = vld [vmem:[#allocation20 + $0x7f8] sm:$0xff]
    %v2115 = vld [vmem:[%s16] sm:$0xf]
    %v2117 = vperm.slane %v2115, 0
    %v2118 = vperm.slane %v2115, 1
    %v2119 = vperm.slane %v2115, 2
    %v2120 = vperm.slane %v2115, 3
    %v2381 = vunpack.c.l.b16 %v1859
    %v2382 = vunpack.c.h.b16 %v1859
    %v2383 = vunpack.c.l.b16 %v1860
    %v2384 = vunpack.c.h.b16 %v1860
    %v2385 = vunpack.c.l.b16 %v1861
    %v2386 = vunpack.c.h.b16 %v1861
    %v2387 = vunpack.c.l.b16 %v1862
    %v2388 = vunpack.c.h.b16 %v1862
    %v2389 = vunpack.c.l.b16 %v1863
    %v2390 = vunpack.c.h.b16 %v1863
    %v2391 = vunpack.c.l.b16 %v1864
    %v2392 = vunpack.c.h.b16 %v1864
    %v2393 = vunpack.c.l.b16 %v1865
    %v2394 = vunpack.c.h.b16 %v1865
    %v2395 = vunpack.c.l.b16 %v1866
    %v2396 = vunpack.c.h.b16 %v1866
    %v2397 = vunpack.c.l.b16 %v1867
    %v2398 = vunpack.c.h.b16 %v1867
    %v2399 = vunpack.c.l.b16 %v1868
    %v2400 = vunpack.c.h.b16 %v1868
    %v2401 = vunpack.c.l.b16 %v1869
    %v2402 = vunpack.c.h.b16 %v1869
    %v2403 = vunpack.c.l.b16 %v1870
    %v2404 = vunpack.c.h.b16 %v1870
    %v2405 = vunpack.c.l.b16 %v1871
    %v2406 = vunpack.c.h.b16 %v1871
    %v2407 = vunpack.c.l.b16 %v1872
    %v2408 = vunpack.c.h.b16 %v1872
    %v2409 = vunpack.c.l.b16 %v1873
    %v2410 = vunpack.c.h.b16 %v1873
    %v2411 = vunpack.c.l.b16 %v1874
    %v2412 = vunpack.c.h.b16 %v1874
    %v2413 = vunpack.c.l.b16 %v1875
    %v2414 = vunpack.c.h.b16 %v1875
    %v2415 = vunpack.c.l.b16 %v1876
    %v2416 = vunpack.c.h.b16 %v1876
    %v2417 = vunpack.c.l.b16 %v1877
    %v2418 = vunpack.c.h.b16 %v1877
    %v2419 = vunpack.c.l.b16 %v1878
    %v2420 = vunpack.c.h.b16 %v1878
    %v2421 = vunpack.c.l.b16 %v1879
    %v2422 = vunpack.c.h.b16 %v1879
    %v2423 = vunpack.c.l.b16 %v1880
    %v2424 = vunpack.c.h.b16 %v1880
    %v2425 = vunpack.c.l.b16 %v1881
    %v2426 = vunpack.c.h.b16 %v1881
    %v2427 = vunpack.c.l.b16 %v1882
    %v2428 = vunpack.c.h.b16 %v1882
    %v2429 = vunpack.c.l.b16 %v1883
    %v2430 = vunpack.c.h.b16 %v1883
    %v2431 = vunpack.c.l.b16 %v1884
    %v2432 = vunpack.c.h.b16 %v1884
    %v2433 = vunpack.c.l.b16 %v1885
    %v2434 = vunpack.c.h.b16 %v1885
    %v2435 = vunpack.c.l.b16 %v1886
    %v2436 = vunpack.c.h.b16 %v1886
    %v2437 = vunpack.c.l.b16 %v1887
    %v2438 = vunpack.c.h.b16 %v1887
    %v2439 = vunpack.c.l.b16 %v1888
    %v2440 = vunpack.c.h.b16 %v1888
    %v2441 = vunpack.c.l.b16 %v1889
    %v2442 = vunpack.c.h.b16 %v1889
    %v2443 = vunpack.c.l.b16 %v1890
    %v2444 = vunpack.c.h.b16 %v1890
    %v2445 = vunpack.c.l.b16 %v1891
    %v2446 = vunpack.c.h.b16 %v1891
    %v2447 = vunpack.c.l.b16 %v1892
    %v2448 = vunpack.c.h.b16 %v1892
    %v2449 = vunpack.c.l.b16 %v1893
    %v2450 = vunpack.c.h.b16 %v1893
    %v2451 = vunpack.c.l.b16 %v1894
    %v2452 = vunpack.c.h.b16 %v1894
    %v2453 = vunpack.c.l.b16 %v1895
    %v2454 = vunpack.c.h.b16 %v1895
    %v2455 = vunpack.c.l.b16 %v1896
    %v2456 = vunpack.c.h.b16 %v1896
    %v2457 = vunpack.c.l.b16 %v1897
    %v2458 = vunpack.c.h.b16 %v1897
    %v2459 = vunpack.c.l.b16 %v1898
    %v2460 = vunpack.c.h.b16 %v1898
    %v2461 = vunpack.c.l.b16 %v1899
    %v2462 = vunpack.c.h.b16 %v1899
    %v2463 = vunpack.c.l.b16 %v1900
    %v2464 = vunpack.c.h.b16 %v1900
    %v2465 = vunpack.c.l.b16 %v1901
    %v2466 = vunpack.c.h.b16 %v1901
    %v2467 = vunpack.c.l.b16 %v1902
    %v2468 = vunpack.c.h.b16 %v1902
    %v2469 = vunpack.c.l.b16 %v1903
    %v2470 = vunpack.c.h.b16 %v1903
    %v2471 = vunpack.c.l.b16 %v1904
    %v2472 = vunpack.c.h.b16 %v1904
    %v2473 = vunpack.c.l.b16 %v1905
    %v2474 = vunpack.c.h.b16 %v1905
    %v2475 = vunpack.c.l.b16 %v1906
    %v2476 = vunpack.c.h.b16 %v1906
    %v2477 = vunpack.c.l.b16 %v1907
    %v2478 = vunpack.c.h.b16 %v1907
    %v2479 = vunpack.c.l.b16 %v1908
    %v2480 = vunpack.c.h.b16 %v1908
    %v2481 = vunpack.c.l.b16 %v1909
    %v2482 = vunpack.c.h.b16 %v1909
    %v2483 = vunpack.c.l.b16 %v1910
    %v2484 = vunpack.c.h.b16 %v1910
    %v2485 = vunpack.c.l.b16 %v1911
    %v2486 = vunpack.c.h.b16 %v1911
    %v2487 = vunpack.c.l.b16 %v1912
    %v2488 = vunpack.c.h.b16 %v1912
    %v2489 = vunpack.c.l.b16 %v1913
    %v2490 = vunpack.c.h.b16 %v1913
    %v2491 = vunpack.c.l.b16 %v1914
    %v2492 = vunpack.c.h.b16 %v1914
    %v2493 = vunpack.c.l.b16 %v1915
    %v2494 = vunpack.c.h.b16 %v1915
    %v2495 = vunpack.c.l.b16 %v1916
    %v2496 = vunpack.c.h.b16 %v1916
    %v2497 = vunpack.c.l.b16 %v1917
    %v2498 = vunpack.c.h.b16 %v1917
    %v2499 = vunpack.c.l.b16 %v1918
    %v2500 = vunpack.c.h.b16 %v1918
    %v2501 = vunpack.c.l.b16 %v1919
    %v2502 = vunpack.c.h.b16 %v1919
    %v2503 = vunpack.c.l.b16 %v1920
    %v2504 = vunpack.c.h.b16 %v1920
    %v2505 = vunpack.c.l.b16 %v1921
    %v2506 = vunpack.c.h.b16 %v1921
    %v2507 = vunpack.c.l.b16 %v1922
    %v2508 = vunpack.c.h.b16 %v1922
    %v2509 = vunpack.c.l.b16 %v1923
    %v2510 = vunpack.c.h.b16 %v1923
    %v2511 = vunpack.c.l.b16 %v1924
    %v2512 = vunpack.c.h.b16 %v1924
    %v2513 = vunpack.c.l.b16 %v1925
    %v2514 = vunpack.c.h.b16 %v1925
    %v2515 = vunpack.c.l.b16 %v1926
    %v2516 = vunpack.c.h.b16 %v1926
    %v2517 = vunpack.c.l.b16 %v1927
    %v2518 = vunpack.c.h.b16 %v1927
    %v2519 = vunpack.c.l.b16 %v1928
    %v2520 = vunpack.c.h.b16 %v1928
    %v2521 = vunpack.c.l.b16 %v1929
    %v2522 = vunpack.c.h.b16 %v1929
    %v2523 = vunpack.c.l.b16 %v1930
    %v2524 = vunpack.c.h.b16 %v1930
    %v2525 = vunpack.c.l.b16 %v1931
    %v2526 = vunpack.c.h.b16 %v1931
    %v2527 = vunpack.c.l.b16 %v1932
    %v2528 = vunpack.c.h.b16 %v1932
    %v2529 = vunpack.c.l.b16 %v1933
    %v2530 = vunpack.c.h.b16 %v1933
    %v2531 = vunpack.c.l.b16 %v1934
    %v2532 = vunpack.c.h.b16 %v1934
    %v2533 = vunpack.c.l.b16 %v1935
    %v2534 = vunpack.c.h.b16 %v1935
    %v2535 = vunpack.c.l.b16 %v1936
    %v2536 = vunpack.c.h.b16 %v1936
    %v2537 = vunpack.c.l.b16 %v1937
    %v2538 = vunpack.c.h.b16 %v1937
    %v2539 = vunpack.c.l.b16 %v1938
    %v2540 = vunpack.c.h.b16 %v1938
    %v2541 = vunpack.c.l.b16 %v1939
    %v2542 = vunpack.c.h.b16 %v1939
    %v2543 = vunpack.c.l.b16 %v1940
    %v2544 = vunpack.c.h.b16 %v1940
    %v2545 = vunpack.c.l.b16 %v1941
    %v2546 = vunpack.c.h.b16 %v1941
    %v2547 = vunpack.c.l.b16 %v1942
    %v2548 = vunpack.c.h.b16 %v1942
    %v2549 = vunpack.c.l.b16 %v1943
    %v2550 = vunpack.c.h.b16 %v1943
    %v2551 = vunpack.c.l.b16 %v1944
    %v2552 = vunpack.c.h.b16 %v1944
    %v2553 = vunpack.c.l.b16 %v1945
    %v2554 = vunpack.c.h.b16 %v1945
    %v2555 = vunpack.c.l.b16 %v1946
    %v2556 = vunpack.c.h.b16 %v1946
    %v2557 = vunpack.c.l.b16 %v1947
    %v2558 = vunpack.c.h.b16 %v1947
    %v2559 = vunpack.c.l.b16 %v1948
    %v2560 = vunpack.c.h.b16 %v1948
    %v2561 = vunpack.c.l.b16 %v1949
    %v2562 = vunpack.c.h.b16 %v1949
    %v2563 = vunpack.c.l.b16 %v1950
    %v2564 = vunpack.c.h.b16 %v1950
    %v2565 = vunpack.c.l.b16 %v1951
    %v2566 = vunpack.c.h.b16 %v1951
    %v2567 = vunpack.c.l.b16 %v1952
    %v2568 = vunpack.c.h.b16 %v1952
    %v2569 = vunpack.c.l.b16 %v1953
    %v2570 = vunpack.c.h.b16 %v1953
    %v2571 = vunpack.c.l.b16 %v1954
    %v2572 = vunpack.c.h.b16 %v1954
    %v2573 = vunpack.c.l.b16 %v1955
    %v2574 = vunpack.c.h.b16 %v1955
    %v2575 = vunpack.c.l.b16 %v1956
    %v2576 = vunpack.c.h.b16 %v1956
    %v2577 = vunpack.c.l.b16 %v1957
    %v2578 = vunpack.c.h.b16 %v1957
    %v2579 = vunpack.c.l.b16 %v1958
    %v2580 = vunpack.c.h.b16 %v1958
    %v2581 = vunpack.c.l.b16 %v1959
    %v2582 = vunpack.c.h.b16 %v1959
    %v2583 = vunpack.c.l.b16 %v1960
    %v2584 = vunpack.c.h.b16 %v1960
    %v2585 = vunpack.c.l.b16 %v1961
    %v2586 = vunpack.c.h.b16 %v1961
    %v2587 = vunpack.c.l.b16 %v1962
    %v2588 = vunpack.c.h.b16 %v1962
    %v2589 = vunpack.c.l.b16 %v1963
    %v2590 = vunpack.c.h.b16 %v1963
    %v2591 = vunpack.c.l.b16 %v1964
    %v2592 = vunpack.c.h.b16 %v1964
    %v2593 = vunpack.c.l.b16 %v1965
    %v2594 = vunpack.c.h.b16 %v1965
    %v2595 = vunpack.c.l.b16 %v1966
    %v2596 = vunpack.c.h.b16 %v1966
    %v2597 = vunpack.c.l.b16 %v1967
    %v2598 = vunpack.c.h.b16 %v1967
    %v2599 = vunpack.c.l.b16 %v1968
    %v2600 = vunpack.c.h.b16 %v1968
    %v2601 = vunpack.c.l.b16 %v1969
    %v2602 = vunpack.c.h.b16 %v1969
    %v2603 = vunpack.c.l.b16 %v1970
    %v2604 = vunpack.c.h.b16 %v1970
    %v2605 = vunpack.c.l.b16 %v1971
    %v2606 = vunpack.c.h.b16 %v1971
    %v2607 = vunpack.c.l.b16 %v1972
    %v2608 = vunpack.c.h.b16 %v1972
    %v2609 = vunpack.c.l.b16 %v1973
    %v2610 = vunpack.c.h.b16 %v1973
    %v2611 = vunpack.c.l.b16 %v1974
    %v2612 = vunpack.c.h.b16 %v1974
    %v2613 = vunpack.c.l.b16 %v1975
    %v2614 = vunpack.c.h.b16 %v1975
    %v2615 = vunpack.c.l.b16 %v1976
    %v2616 = vunpack.c.h.b16 %v1976
    %v2617 = vunpack.c.l.b16 %v1977
    %v2618 = vunpack.c.h.b16 %v1977
    %v2619 = vunpack.c.l.b16 %v1978
    %v2620 = vunpack.c.h.b16 %v1978
    %v2621 = vunpack.c.l.b16 %v1979
    %v2622 = vunpack.c.h.b16 %v1979
    %v2623 = vunpack.c.l.b16 %v1980
    %v2624 = vunpack.c.h.b16 %v1980
    %v2625 = vunpack.c.l.b16 %v1981
    %v2626 = vunpack.c.h.b16 %v1981
    %v2627 = vunpack.c.l.b16 %v1982
    %v2628 = vunpack.c.h.b16 %v1982
    %v2629 = vunpack.c.l.b16 %v1983
    %v2630 = vunpack.c.h.b16 %v1983
    %v2631 = vunpack.c.l.b16 %v1984
    %v2632 = vunpack.c.h.b16 %v1984
    %v2633 = vunpack.c.l.b16 %v1985
    %v2634 = vunpack.c.h.b16 %v1985
    %v2635 = vunpack.c.l.b16 %v1986
    %v2636 = vunpack.c.h.b16 %v1986
    %v2637 = vunpack.c.l.b16 %v1987
    %v2638 = vunpack.c.h.b16 %v1987
    %v2639 = vunpack.c.l.b16 %v1988
    %v2640 = vunpack.c.h.b16 %v1988
    %v2641 = vunpack.c.l.b16 %v1989
    %v2642 = vunpack.c.h.b16 %v1989
    %v2643 = vunpack.c.l.b16 %v1990
    %v2644 = vunpack.c.h.b16 %v1990
    %v2645 = vunpack.c.l.b16 %v1991
    %v2646 = vunpack.c.h.b16 %v1991
    %v2647 = vunpack.c.l.b16 %v1992
    %v2648 = vunpack.c.h.b16 %v1992
    %v2649 = vunpack.c.l.b16 %v1993
    %v2650 = vunpack.c.h.b16 %v1993
    %v2651 = vunpack.c.l.b16 %v1994
    %v2652 = vunpack.c.h.b16 %v1994
    %v2653 = vunpack.c.l.b16 %v1995
    %v2654 = vunpack.c.h.b16 %v1995
    %v2655 = vunpack.c.l.b16 %v1996
    %v2656 = vunpack.c.h.b16 %v1996
    %v2657 = vunpack.c.l.b16 %v1997
    %v2658 = vunpack.c.h.b16 %v1997
    %v2659 = vunpack.c.l.b16 %v1998
    %v2660 = vunpack.c.h.b16 %v1998
    %v2661 = vunpack.c.l.b16 %v1999
    %v2662 = vunpack.c.h.b16 %v1999
    %v2663 = vunpack.c.l.b16 %v2000
    %v2664 = vunpack.c.h.b16 %v2000
    %v2665 = vunpack.c.l.b16 %v2001
    %v2666 = vunpack.c.h.b16 %v2001
    %v2667 = vunpack.c.l.b16 %v2002
    %v2668 = vunpack.c.h.b16 %v2002
    %v2669 = vunpack.c.l.b16 %v2003
    %v2670 = vunpack.c.h.b16 %v2003
    %v2671 = vunpack.c.l.b16 %v2004
    %v2672 = vunpack.c.h.b16 %v2004
    %v2673 = vunpack.c.l.b16 %v2005
    %v2674 = vunpack.c.h.b16 %v2005
    %v2675 = vunpack.c.l.b16 %v2006
    %v2676 = vunpack.c.h.b16 %v2006
    %v2677 = vunpack.c.l.b16 %v2007
    %v2678 = vunpack.c.h.b16 %v2007
    %v2679 = vunpack.c.l.b16 %v2008
    %v2680 = vunpack.c.h.b16 %v2008
    %v2681 = vunpack.c.l.b16 %v2009
    %v2682 = vunpack.c.h.b16 %v2009
    %v2683 = vunpack.c.l.b16 %v2010
    %v2684 = vunpack.c.h.b16 %v2010
    %v2685 = vunpack.c.l.b16 %v2011
    %v2686 = vunpack.c.h.b16 %v2011
    %v2687 = vunpack.c.l.b16 %v2012
    %v2688 = vunpack.c.h.b16 %v2012
    %v2689 = vunpack.c.l.b16 %v2013
    %v2690 = vunpack.c.h.b16 %v2013
    %v2691 = vunpack.c.l.b16 %v2014
    %v2692 = vunpack.c.h.b16 %v2014
    %v2693 = vunpack.c.l.b16 %v2015
    %v2694 = vunpack.c.h.b16 %v2015
    %v2695 = vunpack.c.l.b16 %v2016
    %v2696 = vunpack.c.h.b16 %v2016
    %v2697 = vunpack.c.l.b16 %v2017
    %v2698 = vunpack.c.h.b16 %v2017
    %v2699 = vunpack.c.l.b16 %v2018
    %v2700 = vunpack.c.h.b16 %v2018
    %v2701 = vunpack.c.l.b16 %v2019
    %v2702 = vunpack.c.h.b16 %v2019
    %v2703 = vunpack.c.l.b16 %v2020
    %v2704 = vunpack.c.h.b16 %v2020
    %v2705 = vunpack.c.l.b16 %v2021
    %v2706 = vunpack.c.h.b16 %v2021
    %v2707 = vunpack.c.l.b16 %v2022
    %v2708 = vunpack.c.h.b16 %v2022
    %v2709 = vunpack.c.l.b16 %v2023
    %v2710 = vunpack.c.h.b16 %v2023
    %v2711 = vunpack.c.l.b16 %v2024
    %v2712 = vunpack.c.h.b16 %v2024
    %v2713 = vunpack.c.l.b16 %v2025
    %v2714 = vunpack.c.h.b16 %v2025
    %v2715 = vunpack.c.l.b16 %v2026
    %v2716 = vunpack.c.h.b16 %v2026
    %v2717 = vunpack.c.l.b16 %v2027
    %v2718 = vunpack.c.h.b16 %v2027
    %v2719 = vunpack.c.l.b16 %v2028
    %v2720 = vunpack.c.h.b16 %v2028
    %v2721 = vunpack.c.l.b16 %v2029
    %v2722 = vunpack.c.h.b16 %v2029
    %v2723 = vunpack.c.l.b16 %v2030
    %v2724 = vunpack.c.h.b16 %v2030
    %v2725 = vunpack.c.l.b16 %v2031
    %v2726 = vunpack.c.h.b16 %v2031
    %v2727 = vunpack.c.l.b16 %v2032
    %v2728 = vunpack.c.h.b16 %v2032
    %v2729 = vunpack.c.l.b16 %v2033
    %v2730 = vunpack.c.h.b16 %v2033
    %v2731 = vunpack.c.l.b16 %v2034
    %v2732 = vunpack.c.h.b16 %v2034
    %v2733 = vunpack.c.l.b16 %v2035
    %v2734 = vunpack.c.h.b16 %v2035
    %v2735 = vunpack.c.l.b16 %v2036
    %v2736 = vunpack.c.h.b16 %v2036
    %v2737 = vunpack.c.l.b16 %v2037
    %v2738 = vunpack.c.h.b16 %v2037
    %v2739 = vunpack.c.l.b16 %v2038
    %v2740 = vunpack.c.h.b16 %v2038
    %v2741 = vunpack.c.l.b16 %v2039
    %v2742 = vunpack.c.h.b16 %v2039
    %v2743 = vunpack.c.l.b16 %v2040
    %v2744 = vunpack.c.h.b16 %v2040
    %v2745 = vunpack.c.l.b16 %v2041
    %v2746 = vunpack.c.h.b16 %v2041
    %v2747 = vunpack.c.l.b16 %v2042
    %v2748 = vunpack.c.h.b16 %v2042
    %v2749 = vunpack.c.l.b16 %v2043
    %v2750 = vunpack.c.h.b16 %v2043
    %v2751 = vunpack.c.l.b16 %v2044
    %v2752 = vunpack.c.h.b16 %v2044
    %v2753 = vunpack.c.l.b16 %v2045
    %v2754 = vunpack.c.h.b16 %v2045
    %v2755 = vunpack.c.l.b16 %v2046
    %v2756 = vunpack.c.h.b16 %v2046
    %v2757 = vunpack.c.l.b16 %v2047
    %v2758 = vunpack.c.h.b16 %v2047
    %v2759 = vunpack.c.l.b16 %v2048
    %v2760 = vunpack.c.h.b16 %v2048
    %v2761 = vunpack.c.l.b16 %v2049
    %v2762 = vunpack.c.h.b16 %v2049
    %v2763 = vunpack.c.l.b16 %v2050
    %v2764 = vunpack.c.h.b16 %v2050
    %v2765 = vunpack.c.l.b16 %v2051
    %v2766 = vunpack.c.h.b16 %v2051
    %v2767 = vunpack.c.l.b16 %v2052
    %v2768 = vunpack.c.h.b16 %v2052
    %v2769 = vunpack.c.l.b16 %v2053
    %v2770 = vunpack.c.h.b16 %v2053
    %v2771 = vunpack.c.l.b16 %v2054
    %v2772 = vunpack.c.h.b16 %v2054
    %v2773 = vunpack.c.l.b16 %v2055
    %v2774 = vunpack.c.h.b16 %v2055
    %v2775 = vunpack.c.l.b16 %v2056
    %v2776 = vunpack.c.h.b16 %v2056
    %v2777 = vunpack.c.l.b16 %v2057
    %v2778 = vunpack.c.h.b16 %v2057
    %v2779 = vunpack.c.l.b16 %v2058
    %v2780 = vunpack.c.h.b16 %v2058
    %v2781 = vunpack.c.l.b16 %v2059
    %v2782 = vunpack.c.h.b16 %v2059
    %v2783 = vunpack.c.l.b16 %v2060
    %v2784 = vunpack.c.h.b16 %v2060
    %v2785 = vunpack.c.l.b16 %v2061
    %v2786 = vunpack.c.h.b16 %v2061
    %v2787 = vunpack.c.l.b16 %v2062
    %v2788 = vunpack.c.h.b16 %v2062
    %v2789 = vunpack.c.l.b16 %v2063
    %v2790 = vunpack.c.h.b16 %v2063
    %v2791 = vunpack.c.l.b16 %v2064
    %v2792 = vunpack.c.h.b16 %v2064
    %v2793 = vunpack.c.l.b16 %v2065
    %v2794 = vunpack.c.h.b16 %v2065
    %v2795 = vunpack.c.l.b16 %v2066
    %v2796 = vunpack.c.h.b16 %v2066
    %v2797 = vunpack.c.l.b16 %v2067
    %v2798 = vunpack.c.h.b16 %v2067
    %v2799 = vunpack.c.l.b16 %v2068
    %v2800 = vunpack.c.h.b16 %v2068
    %v2801 = vunpack.c.l.b16 %v2069
    %v2802 = vunpack.c.h.b16 %v2069
    %v2803 = vunpack.c.l.b16 %v2070
    %v2804 = vunpack.c.h.b16 %v2070
    %v2805 = vunpack.c.l.b16 %v2071
    %v2806 = vunpack.c.h.b16 %v2071
    %v2807 = vunpack.c.l.b16 %v2072
    %v2808 = vunpack.c.h.b16 %v2072
    %v2809 = vunpack.c.l.b16 %v2073
    %v2810 = vunpack.c.h.b16 %v2073
    %v2811 = vunpack.c.l.b16 %v2074
    %v2812 = vunpack.c.h.b16 %v2074
    %v2813 = vunpack.c.l.b16 %v2075
    %v2814 = vunpack.c.h.b16 %v2075
    %v2815 = vunpack.c.l.b16 %v2076
    %v2816 = vunpack.c.h.b16 %v2076
    %v2817 = vunpack.c.l.b16 %v2077
    %v2818 = vunpack.c.h.b16 %v2077
    %v2819 = vunpack.c.l.b16 %v2078
    %v2820 = vunpack.c.h.b16 %v2078
    %v2821 = vunpack.c.l.b16 %v2079
    %v2822 = vunpack.c.h.b16 %v2079
    %v2823 = vunpack.c.l.b16 %v2080
    %v2824 = vunpack.c.h.b16 %v2080
    %v2825 = vunpack.c.l.b16 %v2081
    %v2826 = vunpack.c.h.b16 %v2081
    %v2827 = vunpack.c.l.b16 %v2082
    %v2828 = vunpack.c.h.b16 %v2082
    %v2829 = vunpack.c.l.b16 %v2083
    %v2830 = vunpack.c.h.b16 %v2083
    %v2831 = vunpack.c.l.b16 %v2084
    %v2832 = vunpack.c.h.b16 %v2084
    %v2833 = vunpack.c.l.b16 %v2085
    %v2834 = vunpack.c.h.b16 %v2085
    %v2835 = vunpack.c.l.b16 %v2086
    %v2836 = vunpack.c.h.b16 %v2086
    %v2837 = vunpack.c.l.b16 %v2087
    %v2838 = vunpack.c.h.b16 %v2087
    %v2839 = vunpack.c.l.b16 %v2088
    %v2840 = vunpack.c.h.b16 %v2088
    %v2841 = vunpack.c.l.b16 %v2089
    %v2842 = vunpack.c.h.b16 %v2089
    %v2843 = vunpack.c.l.b16 %v2090
    %v2844 = vunpack.c.h.b16 %v2090
    %v2845 = vunpack.c.l.b16 %v2091
    %v2846 = vunpack.c.h.b16 %v2091
    %v2847 = vunpack.c.l.b16 %v2092
    %v2848 = vunpack.c.h.b16 %v2092
    %v2849 = vunpack.c.l.b16 %v2093
    %v2850 = vunpack.c.h.b16 %v2093
    %v2851 = vunpack.c.l.b16 %v2094
    %v2852 = vunpack.c.h.b16 %v2094
    %v2853 = vunpack.c.l.b16 %v2095
    %v2854 = vunpack.c.h.b16 %v2095
    %v2855 = vunpack.c.l.b16 %v2096
    %v2856 = vunpack.c.h.b16 %v2096
    %v2857 = vunpack.c.l.b16 %v2097
    %v2858 = vunpack.c.h.b16 %v2097
    %v2859 = vunpack.c.l.b16 %v2098
    %v2860 = vunpack.c.h.b16 %v2098
    %v2861 = vunpack.c.l.b16 %v2099
    %v2862 = vunpack.c.h.b16 %v2099
    %v2863 = vunpack.c.l.b16 %v2100
    %v2864 = vunpack.c.h.b16 %v2100
    %v2865 = vunpack.c.l.b16 %v2101
    %v2866 = vunpack.c.h.b16 %v2101
    %v2867 = vunpack.c.l.b16 %v2102
    %v2868 = vunpack.c.h.b16 %v2102
    %v2869 = vunpack.c.l.b16 %v2103
    %v2870 = vunpack.c.h.b16 %v2103
    %v2871 = vunpack.c.l.b16 %v2104
    %v2872 = vunpack.c.h.b16 %v2104
    %v2873 = vunpack.c.l.b16 %v2105
    %v2874 = vunpack.c.h.b16 %v2105
    %v2875 = vunpack.c.l.b16 %v2106
    %v2876 = vunpack.c.h.b16 %v2106
    %v2877 = vunpack.c.l.b16 %v2107
    %v2878 = vunpack.c.h.b16 %v2107
    %v2879 = vunpack.c.l.b16 %v2108
    %v2880 = vunpack.c.h.b16 %v2108
    %v2881 = vunpack.c.l.b16 %v2109
    %v2882 = vunpack.c.h.b16 %v2109
    %v2883 = vunpack.c.l.b16 %v2110
    %v2884 = vunpack.c.h.b16 %v2110
    %v2885 = vunpack.c.l.b16 %v2111
    %v2886 = vunpack.c.h.b16 %v2111
    %v2887 = vunpack.c.l.b16 %v2112
    %v2888 = vunpack.c.h.b16 %v2112
    %v2889 = vunpack.c.l.b16 %v2113
    %v2890 = vunpack.c.h.b16 %v2113
    %v2891 = vunpack.c.l.b16 %v2114
    %v2892 = vunpack.c.h.b16 %v2114
    %v2893 = vpack.c.b16 %v2385, %v2381
    %v2894 = vpack.c.b16 %v2386, %v2382
    %v2895 = vpack.c.b16 %v2387, %v2383
    %v2896 = vpack.c.b16 %v2388, %v2384
    %v2897 = vpack.c.b16 %v2393, %v2389
    %v2898 = vpack.c.b16 %v2394, %v2390
    %v2899 = vpack.c.b16 %v2395, %v2391
    %v2900 = vpack.c.b16 %v2396, %v2392
    %v2901 = vpack.c.b16 %v2401, %v2397
    %v2902 = vpack.c.b16 %v2402, %v2398
    %v2903 = vpack.c.b16 %v2403, %v2399
    %v2904 = vpack.c.b16 %v2404, %v2400
    %v2905 = vpack.c.b16 %v2409, %v2405
    %v2906 = vpack.c.b16 %v2410, %v2406
    %v2907 = vpack.c.b16 %v2411, %v2407
    %v2908 = vpack.c.b16 %v2412, %v2408
    %v2909 = vpack.c.b16 %v2417, %v2413
    %v2910 = vpack.c.b16 %v2418, %v2414
    %v2911 = vpack.c.b16 %v2419, %v2415
    %v2912 = vpack.c.b16 %v2420, %v2416
    %v2913 = vpack.c.b16 %v2425, %v2421
    %v2914 = vpack.c.b16 %v2426, %v2422
    %v2915 = vpack.c.b16 %v2427, %v2423
    %v2916 = vpack.c.b16 %v2428, %v2424
    %v2917 = vpack.c.b16 %v2433, %v2429
    %v2918 = vpack.c.b16 %v2434, %v2430
    %v2919 = vpack.c.b16 %v2435, %v2431
    %v2920 = vpack.c.b16 %v2436, %v2432
    %v2921 = vpack.c.b16 %v2441, %v2437
    %v2922 = vpack.c.b16 %v2442, %v2438
    %v2923 = vpack.c.b16 %v2443, %v2439
    %v2924 = vpack.c.b16 %v2444, %v2440
    %v2925 = vpack.c.b16 %v2449, %v2445
    %v2926 = vpack.c.b16 %v2450, %v2446
    %v2927 = vpack.c.b16 %v2451, %v2447
    %v2928 = vpack.c.b16 %v2452, %v2448
    %v2929 = vpack.c.b16 %v2457, %v2453
    %v2930 = vpack.c.b16 %v2458, %v2454
    %v2931 = vpack.c.b16 %v2459, %v2455
    %v2932 = vpack.c.b16 %v2460, %v2456
    %v2933 = vpack.c.b16 %v2465, %v2461
    %v2934 = vpack.c.b16 %v2466, %v2462
    %v2935 = vpack.c.b16 %v2467, %v2463
    %v2936 = vpack.c.b16 %v2468, %v2464
    %v2937 = vpack.c.b16 %v2473, %v2469
    %v2938 = vpack.c.b16 %v2474, %v2470
    %v2939 = vpack.c.b16 %v2475, %v2471
    %v2940 = vpack.c.b16 %v2476, %v2472
    %v2941 = vpack.c.b16 %v2481, %v2477
    %v2942 = vpack.c.b16 %v2482, %v2478
    %v2943 = vpack.c.b16 %v2483, %v2479
    %v2944 = vpack.c.b16 %v2484, %v2480
    %v2945 = vpack.c.b16 %v2489, %v2485
    %v2946 = vpack.c.b16 %v2490, %v2486
    %v2947 = vpack.c.b16 %v2491, %v2487
    %v2948 = vpack.c.b16 %v2492, %v2488
    %v2949 = vpack.c.b16 %v2497, %v2493
    %v2950 = vpack.c.b16 %v2498, %v2494
    %v2951 = vpack.c.b16 %v2499, %v2495
    %v2952 = vpack.c.b16 %v2500, %v2496
    %v2953 = vpack.c.b16 %v2505, %v2501
    %v2954 = vpack.c.b16 %v2506, %v2502
    %v2955 = vpack.c.b16 %v2507, %v2503
    %v2956 = vpack.c.b16 %v2508, %v2504
    %v2957 = vpack.c.b16 %v2513, %v2509
    %v2958 = vpack.c.b16 %v2514, %v2510
    %v2959 = vpack.c.b16 %v2515, %v2511
    %v2960 = vpack.c.b16 %v2516, %v2512
    %v2961 = vpack.c.b16 %v2521, %v2517
    %v2962 = vpack.c.b16 %v2522, %v2518
    %v2963 = vpack.c.b16 %v2523, %v2519
    %v2964 = vpack.c.b16 %v2524, %v2520
    %v2965 = vpack.c.b16 %v2529, %v2525
    %v2966 = vpack.c.b16 %v2530, %v2526
    %v2967 = vpack.c.b16 %v2531, %v2527
    %v2968 = vpack.c.b16 %v2532, %v2528
    %v2969 = vpack.c.b16 %v2537, %v2533
    %v2970 = vpack.c.b16 %v2538, %v2534
    %v2971 = vpack.c.b16 %v2539, %v2535
    %v2972 = vpack.c.b16 %v2540, %v2536
    %v2973 = vpack.c.b16 %v2545, %v2541
    %v2974 = vpack.c.b16 %v2546, %v2542
    %v2975 = vpack.c.b16 %v2547, %v2543
    %v2976 = vpack.c.b16 %v2548, %v2544
    %v2977 = vpack.c.b16 %v2553, %v2549
    %v2978 = vpack.c.b16 %v2554, %v2550
    %v2979 = vpack.c.b16 %v2555, %v2551
    %v2980 = vpack.c.b16 %v2556, %v2552
    %v2981 = vpack.c.b16 %v2561, %v2557
    %v2982 = vpack.c.b16 %v2562, %v2558
    %v2983 = vpack.c.b16 %v2563, %v2559
    %v2984 = vpack.c.b16 %v2564, %v2560
    %v2985 = vpack.c.b16 %v2569, %v2565
    %v2986 = vpack.c.b16 %v2570, %v2566
    %v2987 = vpack.c.b16 %v2571, %v2567
    %v2988 = vpack.c.b16 %v2572, %v2568
    %v2989 = vpack.c.b16 %v2577, %v2573
    %v2990 = vpack.c.b16 %v2578, %v2574
    %v2991 = vpack.c.b16 %v2579, %v2575
    %v2992 = vpack.c.b16 %v2580, %v2576
    %v2993 = vpack.c.b16 %v2585, %v2581
    %v2994 = vpack.c.b16 %v2586, %v2582
    %v2995 = vpack.c.b16 %v2587, %v2583
    %v2996 = vpack.c.b16 %v2588, %v2584
    %v2997 = vpack.c.b16 %v2593, %v2589
    %v2998 = vpack.c.b16 %v2594, %v2590
    %v2999 = vpack.c.b16 %v2595, %v2591
    %v3000 = vpack.c.b16 %v2596, %v2592
    %v3001 = vpack.c.b16 %v2601, %v2597
    %v3002 = vpack.c.b16 %v2602, %v2598
    %v3003 = vpack.c.b16 %v2603, %v2599
    %v3004 = vpack.c.b16 %v2604, %v2600
    %v3005 = vpack.c.b16 %v2609, %v2605
    %v3006 = vpack.c.b16 %v2610, %v2606
    %v3007 = vpack.c.b16 %v2611, %v2607
    %v3008 = vpack.c.b16 %v2612, %v2608
    %v3009 = vpack.c.b16 %v2617, %v2613
    %v3010 = vpack.c.b16 %v2618, %v2614
    %v3011 = vpack.c.b16 %v2619, %v2615
    %v3012 = vpack.c.b16 %v2620, %v2616
    %v3013 = vpack.c.b16 %v2625, %v2621
    %v3014 = vpack.c.b16 %v2626, %v2622
    %v3015 = vpack.c.b16 %v2627, %v2623
    %v3016 = vpack.c.b16 %v2628, %v2624
    %v3017 = vpack.c.b16 %v2633, %v2629
    %v3018 = vpack.c.b16 %v2634, %v2630
    %v3019 = vpack.c.b16 %v2635, %v2631
    %v3020 = vpack.c.b16 %v2636, %v2632
    %v3021 = vpack.c.b16 %v2641, %v2637
    %v3022 = vpack.c.b16 %v2642, %v2638
    %v3023 = vpack.c.b16 %v2643, %v2639
    %v3024 = vpack.c.b16 %v2644, %v2640
    %v3025 = vpack.c.b16 %v2649, %v2645
    %v3026 = vpack.c.b16 %v2650, %v2646
    %v3027 = vpack.c.b16 %v2651, %v2647
    %v3028 = vpack.c.b16 %v2652, %v2648
    %v3029 = vpack.c.b16 %v2657, %v2653
    %v3030 = vpack.c.b16 %v2658, %v2654
    %v3031 = vpack.c.b16 %v2659, %v2655
    %v3032 = vpack.c.b16 %v2660, %v2656
    %v3033 = vpack.c.b16 %v2665, %v2661
    %v3034 = vpack.c.b16 %v2666, %v2662
    %v3035 = vpack.c.b16 %v2667, %v2663
    %v3036 = vpack.c.b16 %v2668, %v2664
    %v3037 = vpack.c.b16 %v2673, %v2669
    %v3038 = vpack.c.b16 %v2674, %v2670
    %v3039 = vpack.c.b16 %v2675, %v2671
    %v3040 = vpack.c.b16 %v2676, %v2672
    %v3041 = vpack.c.b16 %v2681, %v2677
    %v3042 = vpack.c.b16 %v2682, %v2678
    %v3043 = vpack.c.b16 %v2683, %v2679
    %v3044 = vpack.c.b16 %v2684, %v2680
    %v3045 = vpack.c.b16 %v2689, %v2685
    %v3046 = vpack.c.b16 %v2690, %v2686
    %v3047 = vpack.c.b16 %v2691, %v2687
    %v3048 = vpack.c.b16 %v2692, %v2688
    %v3049 = vpack.c.b16 %v2697, %v2693
    %v3050 = vpack.c.b16 %v2698, %v2694
    %v3051 = vpack.c.b16 %v2699, %v2695
    %v3052 = vpack.c.b16 %v2700, %v2696
    %v3053 = vpack.c.b16 %v2705, %v2701
    %v3054 = vpack.c.b16 %v2706, %v2702
    %v3055 = vpack.c.b16 %v2707, %v2703
    %v3056 = vpack.c.b16 %v2708, %v2704
    %v3057 = vpack.c.b16 %v2713, %v2709
    %v3058 = vpack.c.b16 %v2714, %v2710
    %v3059 = vpack.c.b16 %v2715, %v2711
    %v3060 = vpack.c.b16 %v2716, %v2712
    %v3061 = vpack.c.b16 %v2721, %v2717
    %v3062 = vpack.c.b16 %v2722, %v2718
    %v3063 = vpack.c.b16 %v2723, %v2719
    %v3064 = vpack.c.b16 %v2724, %v2720
    %v3065 = vpack.c.b16 %v2729, %v2725
    %v3066 = vpack.c.b16 %v2730, %v2726
    %v3067 = vpack.c.b16 %v2731, %v2727
    %v3068 = vpack.c.b16 %v2732, %v2728
    %v3069 = vpack.c.b16 %v2737, %v2733
    %v3070 = vpack.c.b16 %v2738, %v2734
    %v3071 = vpack.c.b16 %v2739, %v2735
    %v3072 = vpack.c.b16 %v2740, %v2736
    %v3073 = vpack.c.b16 %v2745, %v2741
    %v3074 = vpack.c.b16 %v2746, %v2742
    %v3075 = vpack.c.b16 %v2747, %v2743
    %v3076 = vpack.c.b16 %v2748, %v2744
    %v3077 = vpack.c.b16 %v2753, %v2749
    %v3078 = vpack.c.b16 %v2754, %v2750
    %v3079 = vpack.c.b16 %v2755, %v2751
    %v3080 = vpack.c.b16 %v2756, %v2752
    %v3081 = vpack.c.b16 %v2761, %v2757
    %v3082 = vpack.c.b16 %v2762, %v2758
    %v3083 = vpack.c.b16 %v2763, %v2759
    %v3084 = vpack.c.b16 %v2764, %v2760
    %v3085 = vpack.c.b16 %v2769, %v2765
    %v3086 = vpack.c.b16 %v2770, %v2766
    %v3087 = vpack.c.b16 %v2771, %v2767
    %v3088 = vpack.c.b16 %v2772, %v2768
    %v3089 = vpack.c.b16 %v2777, %v2773
    %v3090 = vpack.c.b16 %v2778, %v2774
    %v3091 = vpack.c.b16 %v2779, %v2775
    %v3092 = vpack.c.b16 %v2780, %v2776
    %v3093 = vpack.c.b16 %v2785, %v2781
    %v3094 = vpack.c.b16 %v2786, %v2782
    %v3095 = vpack.c.b16 %v2787, %v2783
    %v3096 = vpack.c.b16 %v2788, %v2784
    %v3097 = vpack.c.b16 %v2793, %v2789
    %v3098 = vpack.c.b16 %v2794, %v2790
    %v3099 = vpack.c.b16 %v2795, %v2791
    %v3100 = vpack.c.b16 %v2796, %v2792
    %v3101 = vpack.c.b16 %v2801, %v2797
    %v3102 = vpack.c.b16 %v2802, %v2798
    %v3103 = vpack.c.b16 %v2803, %v2799
    %v3104 = vpack.c.b16 %v2804, %v2800
    %v3105 = vpack.c.b16 %v2809, %v2805
    %v3106 = vpack.c.b16 %v2810, %v2806
    %v3107 = vpack.c.b16 %v2811, %v2807
    %v3108 = vpack.c.b16 %v2812, %v2808
    %v3109 = vpack.c.b16 %v2817, %v2813
    %v3110 = vpack.c.b16 %v2818, %v2814
    %v3111 = vpack.c.b16 %v2819, %v2815
    %v3112 = vpack.c.b16 %v2820, %v2816
    %v3113 = vpack.c.b16 %v2825, %v2821
    %v3114 = vpack.c.b16 %v2826, %v2822
    %v3115 = vpack.c.b16 %v2827, %v2823
    %v3116 = vpack.c.b16 %v2828, %v2824
    %v3117 = vpack.c.b16 %v2833, %v2829
    %v3118 = vpack.c.b16 %v2834, %v2830
    %v3119 = vpack.c.b16 %v2835, %v2831
    %v3120 = vpack.c.b16 %v2836, %v2832
    %v3121 = vpack.c.b16 %v2841, %v2837
    %v3122 = vpack.c.b16 %v2842, %v2838
    %v3123 = vpack.c.b16 %v2843, %v2839
    %v3124 = vpack.c.b16 %v2844, %v2840
    %v3125 = vpack.c.b16 %v2849, %v2845
    %v3126 = vpack.c.b16 %v2850, %v2846
    %v3127 = vpack.c.b16 %v2851, %v2847
    %v3128 = vpack.c.b16 %v2852, %v2848
    %v3129 = vpack.c.b16 %v2857, %v2853
    %v3130 = vpack.c.b16 %v2858, %v2854
    %v3131 = vpack.c.b16 %v2859, %v2855
    %v3132 = vpack.c.b16 %v2860, %v2856
    %v3133 = vpack.c.b16 %v2865, %v2861
    %v3134 = vpack.c.b16 %v2866, %v2862
    %v3135 = vpack.c.b16 %v2867, %v2863
    %v3136 = vpack.c.b16 %v2868, %v2864
    %v3137 = vpack.c.b16 %v2873, %v2869
    %v3138 = vpack.c.b16 %v2874, %v2870
    %v3139 = vpack.c.b16 %v2875, %v2871
    %v3140 = vpack.c.b16 %v2876, %v2872
    %v3141 = vpack.c.b16 %v2881, %v2877
    %v3142 = vpack.c.b16 %v2882, %v2878
    %v3143 = vpack.c.b16 %v2883, %v2879
    %v3144 = vpack.c.b16 %v2884, %v2880
    %v3145 = vpack.c.b16 %v2889, %v2885
    %v3146 = vpack.c.b16 %v2890, %v2886
    %v3147 = vpack.c.b16 %v2891, %v2887
    %v3148 = vpack.c.b16 %v2892, %v2888
    %3405 = vmatpush.bf16.msra.mxu0 %v2921
    %3406 = vmatpush.bf16.msra.mxu0 %v2917
    %3407 = vmatpush.bf16.msra.mxu0 %v2913
    %3408 = vmatpush.bf16.msra.mxu0 %v2909
    %3409 = vmatpush.bf16.msra.mxu0 %v2905
    %3410 = vmatpush.bf16.msra.mxu0 %v2901
    %3411 = vmatpush.bf16.msra.mxu0 %v2897
    %3412 = vmatpush.bf16.msra.mxu0 %v2893
    %3413 = vmatmul.bf16.gmra.mxu0 %v1851
    %v3414 = vpop.f32.mrf.mxu0
    %v3415 = vadd.f32 %v2117, %v3414
    %v3416 = vpop.f32.mrf.mxu0
    %v3417 = vadd.f32 %v2117, %v3416
    %3418 = vdwg.mxu0
    %3419 = vmatpush.bf16.msra.mxu0 %v2953
    %3420 = vmatpush.bf16.msra.mxu0 %v2949
    %3421 = vmatpush.bf16.msra.mxu0 %v2945
    %3422 = vmatpush.bf16.msra.mxu0 %v2941
    %3423 = vmatpush.bf16.msra.mxu0 %v2937
    %3424 = vmatpush.bf16.msra.mxu0 %v2933
    %3425 = vmatpush.bf16.msra.mxu0 %v2929
    %3426 = vmatpush.bf16.msra.mxu0 %v2925
    %3427 = vmatmul.bf16.gmra.mxu0 %v1852
    %v3428 = vpop.f32.mrf.mxu0
    %v3429 = vadd.f32 %v3415, %v3428
    %v3430 = vpop.f32.mrf.mxu0
    %v3431 = vadd.f32 %v3417, %v3430
    %3432 = vdwg.mxu0
    %3433 = vmatpush.bf16.msra.mxu0 %v2985
    %3434 = vmatpush.bf16.msra.mxu0 %v2981
    %3435 = vmatpush.bf16.msra.mxu0 %v2977
    %3436 = vmatpush.bf16.msra.mxu0 %v2973
    %3437 = vmatpush.bf16.msra.mxu0 %v2969
    %3438 = vmatpush.bf16.msra.mxu0 %v2965
    %3439 = vmatpush.bf16.msra.mxu0 %v2961
    %3440 = vmatpush.bf16.msra.mxu0 %v2957
    %3441 = vmatmul.bf16.gmra.mxu0 %v1853
    %v3442 = vpop.f32.mrf.mxu0
    %v3443 = vadd.f32 %v3429, %v3442
    %v3444 = vpop.f32.mrf.mxu0
    %v3445 = vadd.f32 %v3431, %v3444
    %3446 = vdwg.mxu0
    %3447 = vmatpush.bf16.msra.mxu0 %v3017
    %3448 = vmatpush.bf16.msra.mxu0 %v3013
    %3449 = vmatpush.bf16.msra.mxu0 %v3009
    %3450 = vmatpush.bf16.msra.mxu0 %v3005
    %3451 = vmatpush.bf16.msra.mxu0 %v3001
    %3452 = vmatpush.bf16.msra.mxu0 %v2997
    %3453 = vmatpush.bf16.msra.mxu0 %v2993
    %3454 = vmatpush.bf16.msra.mxu0 %v2989
    %3455 = vmatmul.bf16.gmra.mxu0 %v1854
    %v3456 = vpop.f32.mrf.mxu0
    %v3457 = vadd.f32 %v3443, %v3456
    %v3458 = vpop.f32.mrf.mxu0
    %v3459 = vadd.f32 %v3445, %v3458
    %3460 = vdwg.mxu0
    %3461 = vmatpush.bf16.msra.mxu0 %v3049
    %3462 = vmatpush.bf16.msra.mxu0 %v3045
    %3463 = vmatpush.bf16.msra.mxu0 %v3041
    %3464 = vmatpush.bf16.msra.mxu0 %v3037
    %3465 = vmatpush.bf16.msra.mxu0 %v3033
    %3466 = vmatpush.bf16.msra.mxu0 %v3029
    %3467 = vmatpush.bf16.msra.mxu0 %v3025
    %3468 = vmatpush.bf16.msra.mxu0 %v3021
    %3469 = vmatmul.bf16.gmra.mxu0 %v1855
    %v3470 = vpop.f32.mrf.mxu0
    %v3471 = vadd.f32 %v3457, %v3470
    %v3472 = vpop.f32.mrf.mxu0
    %v3473 = vadd.f32 %v3459, %v3472
    %3474 = vdwg.mxu0
    %3475 = vmatpush.bf16.msra.mxu0 %v3081
    %3476 = vmatpush.bf16.msra.mxu0 %v3077
    %3477 = vmatpush.bf16.msra.mxu0 %v3073
    %3478 = vmatpush.bf16.msra.mxu0 %v3069
    %3479 = vmatpush.bf16.msra.mxu0 %v3065
    %3480 = vmatpush.bf16.msra.mxu0 %v3061
    %3481 = vmatpush.bf16.msra.mxu0 %v3057
    %3482 = vmatpush.bf16.msra.mxu0 %v3053
    %3483 = vmatmul.bf16.gmra.mxu0 %v1856
    %v3484 = vpop.f32.mrf.mxu0
    %v3485 = vadd.f32 %v3471, %v3484
    %v3486 = vpop.f32.mrf.mxu0
    %v3487 = vadd.f32 %v3473, %v3486
    %3488 = vdwg.mxu0
    %3489 = vmatpush.bf16.msra.mxu0 %v3113
    %3490 = vmatpush.bf16.msra.mxu0 %v3109
    %3491 = vmatpush.bf16.msra.mxu0 %v3105
    %3492 = vmatpush.bf16.msra.mxu0 %v3101
    %3493 = vmatpush.bf16.msra.mxu0 %v3097
    %3494 = vmatpush.bf16.msra.mxu0 %v3093
    %3495 = vmatpush.bf16.msra.mxu0 %v3089
    %3496 = vmatpush.bf16.msra.mxu0 %v3085
    %3497 = vmatmul.bf16.gmra.mxu0 %v1857
    %v3498 = vpop.f32.mrf.mxu0
    %v3499 = vadd.f32 %v3485, %v3498
    %v3500 = vpop.f32.mrf.mxu0
    %v3501 = vadd.f32 %v3487, %v3500
    %3502 = vdwg.mxu0
    %3503 = vmatpush.bf16.msra.mxu0 %v3145
    %3504 = vmatpush.bf16.msra.mxu0 %v3141
    %3505 = vmatpush.bf16.msra.mxu0 %v3137
    %3506 = vmatpush.bf16.msra.mxu0 %v3133
    %3507 = vmatpush.bf16.msra.mxu0 %v3129
    %3508 = vmatpush.bf16.msra.mxu0 %v3125
    %3509 = vmatpush.bf16.msra.mxu0 %v3121
    %3510 = vmatpush.bf16.msra.mxu0 %v3117
    %3511 = vmatmul.bf16.gmra.mxu0 %v1858
    %v3512 = vpop.f32.mrf.mxu0
    %v3513 = vadd.f32 %v3499, %v3512
    %v3514 = vpop.f32.mrf.mxu0
    %v3515 = vadd.f32 %v3501, %v3514
    %3516 = vdwg.mxu0
    %3517 = vmatpush.bf16.msra.mxu0 %v2922
    %3518 = vmatpush.bf16.msra.mxu0 %v2918
    %3519 = vmatpush.bf16.msra.mxu0 %v2914
    %3520 = vmatpush.bf16.msra.mxu0 %v2910
    %3521 = vmatpush.bf16.msra.mxu0 %v2906
    %3522 = vmatpush.bf16.msra.mxu0 %v2902
    %3523 = vmatpush.bf16.msra.mxu0 %v2898
    %3524 = vmatpush.bf16.msra.mxu0 %v2894
    %3525 = vmatmul.bf16.gmra.mxu0 %v1851
    %v3526 = vpop.f32.mrf.mxu0
    %v3527 = vadd.f32 %v2118, %v3526
    %v3528 = vpop.f32.mrf.mxu0
    %v3529 = vadd.f32 %v2118, %v3528
    %3530 = vdwg.mxu0
    %3531 = vmatpush.bf16.msra.mxu0 %v2954
    %3532 = vmatpush.bf16.msra.mxu0 %v2950
    %3533 = vmatpush.bf16.msra.mxu0 %v2946
    %3534 = vmatpush.bf16.msra.mxu0 %v2942
    %3535 = vmatpush.bf16.msra.mxu0 %v2938
    %3536 = vmatpush.bf16.msra.mxu0 %v2934
    %3537 = vmatpush.bf16.msra.mxu0 %v2930
    %3538 = vmatpush.bf16.msra.mxu0 %v2926
    %3539 = vmatmul.bf16.gmra.mxu0 %v1852
    %v3540 = vpop.f32.mrf.mxu0
    %v3541 = vadd.f32 %v3527, %v3540
    %v3542 = vpop.f32.mrf.mxu0
    %v3543 = vadd.f32 %v3529, %v3542
    %3544 = vdwg.mxu0
    %3545 = vmatpush.bf16.msra.mxu0 %v2986
    %3546 = vmatpush.bf16.msra.mxu0 %v2982
    %3547 = vmatpush.bf16.msra.mxu0 %v2978
    %3548 = vmatpush.bf16.msra.mxu0 %v2974
    %3549 = vmatpush.bf16.msra.mxu0 %v2970
    %3550 = vmatpush.bf16.msra.mxu0 %v2966
    %3551 = vmatpush.bf16.msra.mxu0 %v2962
    %3552 = vmatpush.bf16.msra.mxu0 %v2958
    %3553 = vmatmul.bf16.gmra.mxu0 %v1853
    %v3554 = vpop.f32.mrf.mxu0
    %v3555 = vadd.f32 %v3541, %v3554
    %v3556 = vpop.f32.mrf.mxu0
    %v3557 = vadd.f32 %v3543, %v3556
    %3558 = vdwg.mxu0
    %3559 = vmatpush.bf16.msra.mxu0 %v3018
    %3560 = vmatpush.bf16.msra.mxu0 %v3014
    %3561 = vmatpush.bf16.msra.mxu0 %v3010
    %3562 = vmatpush.bf16.msra.mxu0 %v3006
    %3563 = vmatpush.bf16.msra.mxu0 %v3002
    %3564 = vmatpush.bf16.msra.mxu0 %v2998
    %3565 = vmatpush.bf16.msra.mxu0 %v2994
    %3566 = vmatpush.bf16.msra.mxu0 %v2990
    %3567 = vmatmul.bf16.gmra.mxu0 %v1854
    %v3568 = vpop.f32.mrf.mxu0
    %v3569 = vadd.f32 %v3555, %v3568
    %v3570 = vpop.f32.mrf.mxu0
    %v3571 = vadd.f32 %v3557, %v3570
    %3572 = vdwg.mxu0
    %3573 = vmatpush.bf16.msra.mxu0 %v3050
    %3574 = vmatpush.bf16.msra.mxu0 %v3046
    %3575 = vmatpush.bf16.msra.mxu0 %v3042
    %3576 = vmatpush.bf16.msra.mxu0 %v3038
    %3577 = vmatpush.bf16.msra.mxu0 %v3034
    %3578 = vmatpush.bf16.msra.mxu0 %v3030
    %3579 = vmatpush.bf16.msra.mxu0 %v3026
    %3580 = vmatpush.bf16.msra.mxu0 %v3022
    %3581 = vmatmul.bf16.gmra.mxu0 %v1855
    %v3582 = vpop.f32.mrf.mxu0
    %v3583 = vadd.f32 %v3569, %v3582
    %v3584 = vpop.f32.mrf.mxu0
    %v3585 = vadd.f32 %v3571, %v3584
    %3586 = vdwg.mxu0
    %3587 = vmatpush.bf16.msra.mxu0 %v3082
    %3588 = vmatpush.bf16.msra.mxu0 %v3078
    %3589 = vmatpush.bf16.msra.mxu0 %v3074
    %3590 = vmatpush.bf16.msra.mxu0 %v3070
    %3591 = vmatpush.bf16.msra.mxu0 %v3066
    %3592 = vmatpush.bf16.msra.mxu0 %v3062
    %3593 = vmatpush.bf16.msra.mxu0 %v3058
    %3594 = vmatpush.bf16.msra.mxu0 %v3054
    %3595 = vmatmul.bf16.gmra.mxu0 %v1856
    %v3596 = vpop.f32.mrf.mxu0
    %v3597 = vadd.f32 %v3583, %v3596
    %v3598 = vpop.f32.mrf.mxu0
    %v3599 = vadd.f32 %v3585, %v3598
    %3600 = vdwg.mxu0
    %3601 = vmatpush.bf16.msra.mxu0 %v3114
    %3602 = vmatpush.bf16.msra.mxu0 %v3110
    %3603 = vmatpush.bf16.msra.mxu0 %v3106
    %3604 = vmatpush.bf16.msra.mxu0 %v3102
    %3605 = vmatpush.bf16.msra.mxu0 %v3098
    %3606 = vmatpush.bf16.msra.mxu0 %v3094
    %3607 = vmatpush.bf16.msra.mxu0 %v3090
    %3608 = vmatpush.bf16.msra.mxu0 %v3086
    %3609 = vmatmul.bf16.gmra.mxu0 %v1857
    %v3610 = vpop.f32.mrf.mxu0
    %v3611 = vadd.f32 %v3597, %v3610
    %v3612 = vpop.f32.mrf.mxu0
    %v3613 = vadd.f32 %v3599, %v3612
    %3614 = vdwg.mxu0
    %3615 = vmatpush.bf16.msra.mxu0 %v3146
    %3616 = vmatpush.bf16.msra.mxu0 %v3142
    %3617 = vmatpush.bf16.msra.mxu0 %v3138
    %3618 = vmatpush.bf16.msra.mxu0 %v3134
    %3619 = vmatpush.bf16.msra.mxu0 %v3130
    %3620 = vmatpush.bf16.msra.mxu0 %v3126
    %3621 = vmatpush.bf16.msra.mxu0 %v3122
    %3622 = vmatpush.bf16.msra.mxu0 %v3118
    %3623 = vmatmul.bf16.gmra.mxu0 %v1858
    %v3624 = vpop.f32.mrf.mxu0
    %v3625 = vadd.f32 %v3611, %v3624
    %v3626 = vpop.f32.mrf.mxu0
    %v3627 = vadd.f32 %v3613, %v3626
    %3628 = vdwg.mxu0
    %3629 = vmatpush.bf16.msra.mxu0 %v2923
    %3630 = vmatpush.bf16.msra.mxu0 %v2919
    %3631 = vmatpush.bf16.msra.mxu0 %v2915
    %3632 = vmatpush.bf16.msra.mxu0 %v2911
    %3633 = vmatpush.bf16.msra.mxu0 %v2907
    %3634 = vmatpush.bf16.msra.mxu0 %v2903
    %3635 = vmatpush.bf16.msra.mxu0 %v2899
    %3636 = vmatpush.bf16.msra.mxu0 %v2895
    %3637 = vmatmul.bf16.gmra.mxu0 %v1851
    %v3638 = vpop.f32.mrf.mxu0
    %v3639 = vadd.f32 %v2119, %v3638
    %v3640 = vpop.f32.mrf.mxu0
    %v3641 = vadd.f32 %v2119, %v3640
    %3642 = vdwg.mxu0
    %3643 = vmatpush.bf16.msra.mxu0 %v2955
    %3644 = vmatpush.bf16.msra.mxu0 %v2951
    %3645 = vmatpush.bf16.msra.mxu0 %v2947
    %3646 = vmatpush.bf16.msra.mxu0 %v2943
    %3647 = vmatpush.bf16.msra.mxu0 %v2939
    %3648 = vmatpush.bf16.msra.mxu0 %v2935
    %3649 = vmatpush.bf16.msra.mxu0 %v2931
    %3650 = vmatpush.bf16.msra.mxu0 %v2927
    %3651 = vmatmul.bf16.gmra.mxu0 %v1852
    %v3652 = vpop.f32.mrf.mxu0
    %v3653 = vadd.f32 %v3639, %v3652
    %v3654 = vpop.f32.mrf.mxu0
    %v3655 = vadd.f32 %v3641, %v3654
    %3656 = vdwg.mxu0
    %3657 = vmatpush.bf16.msra.mxu0 %v2987
    %3658 = vmatpush.bf16.msra.mxu0 %v2983
    %3659 = vmatpush.bf16.msra.mxu0 %v2979
    %3660 = vmatpush.bf16.msra.mxu0 %v2975
    %3661 = vmatpush.bf16.msra.mxu0 %v2971
    %3662 = vmatpush.bf16.msra.mxu0 %v2967
    %3663 = vmatpush.bf16.msra.mxu0 %v2963
    %3664 = vmatpush.bf16.msra.mxu0 %v2959
    %3665 = vmatmul.bf16.gmra.mxu0 %v1853
    %v3666 = vpop.f32.mrf.mxu0
    %v3667 = vadd.f32 %v3653, %v3666
    %v3668 = vpop.f32.mrf.mxu0
    %v3669 = vadd.f32 %v3655, %v3668
    %3670 = vdwg.mxu0
    %3671 = vmatpush.bf16.msra.mxu0 %v3019
    %3672 = vmatpush.bf16.msra.mxu0 %v3015
    %3673 = vmatpush.bf16.msra.mxu0 %v3011
    %3674 = vmatpush.bf16.msra.mxu0 %v3007
    %3675 = vmatpush.bf16.msra.mxu0 %v3003
    %3676 = vmatpush.bf16.msra.mxu0 %v2999
    %3677 = vmatpush.bf16.msra.mxu0 %v2995
    %3678 = vmatpush.bf16.msra.mxu0 %v2991
    %3679 = vmatmul.bf16.gmra.mxu0 %v1854
    %v3680 = vpop.f32.mrf.mxu0
    %v3681 = vadd.f32 %v3667, %v3680
    %v3682 = vpop.f32.mrf.mxu0
    %v3683 = vadd.f32 %v3669, %v3682
    %3684 = vdwg.mxu0
    %3685 = vmatpush.bf16.msra.mxu0 %v3051
    %3686 = vmatpush.bf16.msra.mxu0 %v3047
    %3687 = vmatpush.bf16.msra.mxu0 %v3043
    %3688 = vmatpush.bf16.msra.mxu0 %v3039
    %3689 = vmatpush.bf16.msra.mxu0 %v3035
    %3690 = vmatpush.bf16.msra.mxu0 %v3031
    %3691 = vmatpush.bf16.msra.mxu0 %v3027
    %3692 = vmatpush.bf16.msra.mxu0 %v3023
    %3693 = vmatmul.bf16.gmra.mxu0 %v1855
    %v3694 = vpop.f32.mrf.mxu0
    %v3695 = vadd.f32 %v3681, %v3694
    %v3696 = vpop.f32.mrf.mxu0
    %v3697 = vadd.f32 %v3683, %v3696
    %3698 = vdwg.mxu0
    %3699 = vmatpush.bf16.msra.mxu0 %v3083
    %3700 = vmatpush.bf16.msra.mxu0 %v3079
    %3701 = vmatpush.bf16.msra.mxu0 %v3075
    %3702 = vmatpush.bf16.msra.mxu0 %v3071
    %3703 = vmatpush.bf16.msra.mxu0 %v3067
    %3704 = vmatpush.bf16.msra.mxu0 %v3063
    %3705 = vmatpush.bf16.msra.mxu0 %v3059
    %3706 = vmatpush.bf16.msra.mxu0 %v3055
    %3707 = vmatmul.bf16.gmra.mxu0 %v1856
    %v3708 = vpop.f32.mrf.mxu0
    %v3709 = vadd.f32 %v3695, %v3708
    %v3710 = vpop.f32.mrf.mxu0
    %v3711 = vadd.f32 %v3697, %v3710
    %3712 = vdwg.mxu0
    %3713 = vmatpush.bf16.msra.mxu0 %v3115
    %3714 = vmatpush.bf16.msra.mxu0 %v3111
    %3715 = vmatpush.bf16.msra.mxu0 %v3107
    %3716 = vmatpush.bf16.msra.mxu0 %v3103
    %3717 = vmatpush.bf16.msra.mxu0 %v3099
    %3718 = vmatpush.bf16.msra.mxu0 %v3095
    %3719 = vmatpush.bf16.msra.mxu0 %v3091
    %3720 = vmatpush.bf16.msra.mxu0 %v3087
    %3721 = vmatmul.bf16.gmra.mxu0 %v1857
    %v3722 = vpop.f32.mrf.mxu0
    %v3723 = vadd.f32 %v3709, %v3722
    %v3724 = vpop.f32.mrf.mxu0
    %v3725 = vadd.f32 %v3711, %v3724
    %3726 = vdwg.mxu0
    %3727 = vmatpush.bf16.msra.mxu0 %v3147
    %3728 = vmatpush.bf16.msra.mxu0 %v3143
    %3729 = vmatpush.bf16.msra.mxu0 %v3139
    %3730 = vmatpush.bf16.msra.mxu0 %v3135
    %3731 = vmatpush.bf16.msra.mxu0 %v3131
    %3732 = vmatpush.bf16.msra.mxu0 %v3127
    %3733 = vmatpush.bf16.msra.mxu0 %v3123
    %3734 = vmatpush.bf16.msra.mxu0 %v3119
    %3735 = vmatmul.bf16.gmra.mxu0 %v1858
    %v3736 = vpop.f32.mrf.mxu0
    %v3737 = vadd.f32 %v3723, %v3736
    %v3738 = vpop.f32.mrf.mxu0
    %v3739 = vadd.f32 %v3725, %v3738
    %3740 = vdwg.mxu0
    %3741 = vmatpush.bf16.msra.mxu0 %v2924
    %3742 = vmatpush.bf16.msra.mxu0 %v2920
    %3743 = vmatpush.bf16.msra.mxu0 %v2916
    %3744 = vmatpush.bf16.msra.mxu0 %v2912
    %3745 = vmatpush.bf16.msra.mxu0 %v2908
    %3746 = vmatpush.bf16.msra.mxu0 %v2904
    %3747 = vmatpush.bf16.msra.mxu0 %v2900
    %3748 = vmatpush.bf16.msra.mxu0 %v2896
    %3749 = vmatmul.bf16.gmra.mxu0 %v1851
    %v3750 = vpop.f32.mrf.mxu0
    %v3751 = vadd.f32 %v2120, %v3750
    %v3752 = vpop.f32.mrf.mxu0
    %v3753 = vadd.f32 %v2120, %v3752
    %3754 = vdwg.mxu0
    %3755 = vmatpush.bf16.msra.mxu0 %v2956
    %3756 = vmatpush.bf16.msra.mxu0 %v2952
    %3757 = vmatpush.bf16.msra.mxu0 %v2948
    %3758 = vmatpush.bf16.msra.mxu0 %v2944
    %3759 = vmatpush.bf16.msra.mxu0 %v2940
    %3760 = vmatpush.bf16.msra.mxu0 %v2936
    %3761 = vmatpush.bf16.msra.mxu0 %v2932
    %3762 = vmatpush.bf16.msra.mxu0 %v2928
    %3763 = vmatmul.bf16.gmra.mxu0 %v1852
    %v3764 = vpop.f32.mrf.mxu0
    %v3765 = vadd.f32 %v3751, %v3764
    %v3766 = vpop.f32.mrf.mxu0
    %v3767 = vadd.f32 %v3753, %v3766
    %3768 = vdwg.mxu0
    %3769 = vmatpush.bf16.msra.mxu0 %v2988
    %3770 = vmatpush.bf16.msra.mxu0 %v2984
    %3771 = vmatpush.bf16.msra.mxu0 %v2980
    %3772 = vmatpush.bf16.msra.mxu0 %v2976
    %3773 = vmatpush.bf16.msra.mxu0 %v2972
    %3774 = vmatpush.bf16.msra.mxu0 %v2968
    %3775 = vmatpush.bf16.msra.mxu0 %v2964
    %3776 = vmatpush.bf16.msra.mxu0 %v2960
    %3777 = vmatmul.bf16.gmra.mxu0 %v1853
    %v3778 = vpop.f32.mrf.mxu0
    %v3779 = vadd.f32 %v3765, %v3778
    %v3780 = vpop.f32.mrf.mxu0
    %v3781 = vadd.f32 %v3767, %v3780
    %3782 = vdwg.mxu0
    %3783 = vmatpush.bf16.msra.mxu0 %v3020
    %3784 = vmatpush.bf16.msra.mxu0 %v3016
    %3785 = vmatpush.bf16.msra.mxu0 %v3012
    %3786 = vmatpush.bf16.msra.mxu0 %v3008
    %3787 = vmatpush.bf16.msra.mxu0 %v3004
    %3788 = vmatpush.bf16.msra.mxu0 %v3000
    %3789 = vmatpush.bf16.msra.mxu0 %v2996
    %3790 = vmatpush.bf16.msra.mxu0 %v2992
    %3791 = vmatmul.bf16.gmra.mxu0 %v1854
    %v3792 = vpop.f32.mrf.mxu0
    %v3793 = vadd.f32 %v3779, %v3792
    %v3794 = vpop.f32.mrf.mxu0
    %v3795 = vadd.f32 %v3781, %v3794
    %3796 = vdwg.mxu0
    %3797 = vmatpush.bf16.msra.mxu0 %v3052
    %3798 = vmatpush.bf16.msra.mxu0 %v3048
    %3799 = vmatpush.bf16.msra.mxu0 %v3044
    %3800 = vmatpush.bf16.msra.mxu0 %v3040
    %3801 = vmatpush.bf16.msra.mxu0 %v3036
    %3802 = vmatpush.bf16.msra.mxu0 %v3032
    %3803 = vmatpush.bf16.msra.mxu0 %v3028
    %3804 = vmatpush.bf16.msra.mxu0 %v3024
    %3805 = vmatmul.bf16.gmra.mxu0 %v1855
    %v3806 = vpop.f32.mrf.mxu0
    %v3807 = vadd.f32 %v3793, %v3806
    %v3808 = vpop.f32.mrf.mxu0
    %v3809 = vadd.f32 %v3795, %v3808
    %3810 = vdwg.mxu0
    %3811 = vmatpush.bf16.msra.mxu0 %v3084
    %3812 = vmatpush.bf16.msra.mxu0 %v3080
    %3813 = vmatpush.bf16.msra.mxu0 %v3076
    %3814 = vmatpush.bf16.msra.mxu0 %v3072
    %3815 = vmatpush.bf16.msra.mxu0 %v3068
    %3816 = vmatpush.bf16.msra.mxu0 %v3064
    %3817 = vmatpush.bf16.msra.mxu0 %v3060
    %3818 = vmatpush.bf16.msra.mxu0 %v3056
    %3819 = vmatmul.bf16.gmra.mxu0 %v1856
    %v3820 = vpop.f32.mrf.mxu0
    %v3821 = vadd.f32 %v3807, %v3820
    %v3822 = vpop.f32.mrf.mxu0
    %v3823 = vadd.f32 %v3809, %v3822
    %3824 = vdwg.mxu0
    %3825 = vmatpush.bf16.msra.mxu0 %v3116
    %3826 = vmatpush.bf16.msra.mxu0 %v3112
    %3827 = vmatpush.bf16.msra.mxu0 %v3108
    %3828 = vmatpush.bf16.msra.mxu0 %v3104
    %3829 = vmatpush.bf16.msra.mxu0 %v3100
    %3830 = vmatpush.bf16.msra.mxu0 %v3096
    %3831 = vmatpush.bf16.msra.mxu0 %v3092
    %3832 = vmatpush.bf16.msra.mxu0 %v3088
    %3833 = vmatmul.bf16.gmra.mxu0 %v1857
    %v3834 = vpop.f32.mrf.mxu0
    %v3835 = vadd.f32 %v3821, %v3834
    %v3836 = vpop.f32.mrf.mxu0
    %v3837 = vadd.f32 %v3823, %v3836
    %3838 = vdwg.mxu0
    %3839 = vmatpush.bf16.msra.mxu0 %v3148
    %3840 = vmatpush.bf16.msra.mxu0 %v3144
    %3841 = vmatpush.bf16.msra.mxu0 %v3140
    %3842 = vmatpush.bf16.msra.mxu0 %v3136
    %3843 = vmatpush.bf16.msra.mxu0 %v3132
    %3844 = vmatpush.bf16.msra.mxu0 %v3128
    %3845 = vmatpush.bf16.msra.mxu0 %v3124
    %3846 = vmatpush.bf16.msra.mxu0 %v3120
    %3847 = vmatmul.bf16.gmra.mxu0 %v1858
    %v3848 = vpop.f32.mrf.mxu0
    %v3849 = vadd.f32 %v3835, %v3848
    %v3850 = vpop.f32.mrf.mxu0
    %v3851 = vadd.f32 %v3837, %v3850
    %3852 = vdwg.mxu0
    %v3853 = vmax.f32 %v3513, 0.0
    %v3854 = vmax.f32 %v3625, 0.0
    %v3855 = vmax.f32 %v3737, 0.0
    %v3856 = vmax.f32 %v3849, 0.0
    %v3857 = vmax.f32 %v3515, 0.0
    %v3858 = vmax.f32 %v3627, 0.0
    %v3859 = vmax.f32 %v3739, 0.0
    %v3860 = vmax.f32 %v3851, 0.0
    %v3861 = vpack.c.bf16 %v3857, %v3853
    %v3862 = vpack.c.bf16 %v3858, %v3854
    %v3863 = vpack.c.bf16 %v3859, %v3855
    %v3864 = vpack.c.bf16 %v3860, %v3856
    %v3865 = vld [vmem:[#allocation13] sm:$0xf]
    %v3866 = vld [vmem:[#allocation13 + $0x4] sm:$0xf]
    %v3867 = vld [vmem:[#allocation13 + $0x8] sm:$0xf]
    %v3868 = vld [vmem:[#allocation13 + $0xc] sm:$0xf]
    %v3869 = vld [vmem:[#allocation13 + $0x10] sm:$0xf]
    %v3870 = vld [vmem:[#allocation13 + $0x14] sm:$0xf]
    %v3871 = vld [vmem:[#allocation13 + $0x18] sm:$0xf]
    %v3872 = vld [vmem:[#allocation13 + $0x1c] sm:$0xf]
    %v3873 = vld [vmem:[#allocation13 + $0x20] sm:$0xf]
    %v3874 = vld [vmem:[#allocation13 + $0x24] sm:$0xf]
    %v3875 = vld [vmem:[#allocation13 + $0x28] sm:$0xf]
    %v3876 = vld [vmem:[#allocation13 + $0x2c] sm:$0xf]
    %v3877 = vld [vmem:[#allocation13 + $0x30] sm:$0xf]
    %v3878 = vld [vmem:[#allocation13 + $0x34] sm:$0xf]
    %v3879 = vld [vmem:[#allocation13 + $0x38] sm:$0xf]
    %v3880 = vld [vmem:[#allocation13 + $0x3c] sm:$0xf]
    %v3881 = vld [vmem:[#allocation22] sm:$0xf]
    %v3882 = vld [vmem:[#allocation22 + $0x4] sm:$0xf]
    %v3883 = vld [vmem:[#allocation22 + $0x8] sm:$0xf]
    %v3884 = vld [vmem:[#allocation22 + $0xc] sm:$0xf]
    %v3885 = vld [vmem:[#allocation22 + $0x10] sm:$0xf]
    %v3886 = vld [vmem:[#allocation22 + $0x14] sm:$0xf]
    %v3887 = vld [vmem:[#allocation22 + $0x18] sm:$0xf]
    %v3888 = vld [vmem:[#allocation22 + $0x1c] sm:$0xf]
    %v3889 = vld [vmem:[#allocation22 + $0x20] sm:$0xf]
    %v3890 = vld [vmem:[#allocation22 + $0x24] sm:$0xf]
    %v3891 = vld [vmem:[#allocation22 + $0x28] sm:$0xf]
    %v3892 = vld [vmem:[#allocation22 + $0x2c] sm:$0xf]
    %v3893 = vld [vmem:[#allocation22 + $0x30] sm:$0xf]
    %v3894 = vld [vmem:[#allocation22 + $0x34] sm:$0xf]
    %v3895 = vld [vmem:[#allocation22 + $0x38] sm:$0xf]
    %v3896 = vld [vmem:[#allocation22 + $0x3c] sm:$0xf]
    %v3897 = vld [vmem:[#allocation22 + $0x40] sm:$0xf]
    %v3898 = vld [vmem:[#allocation22 + $0x44] sm:$0xf]
    %v3899 = vld [vmem:[#allocation22 + $0x48] sm:$0xf]
    %v3900 = vld [vmem:[#allocation22 + $0x4c] sm:$0xf]
    %v3901 = vld [vmem:[#allocation22 + $0x50] sm:$0xf]
    %v3902 = vld [vmem:[#allocation22 + $0x54] sm:$0xf]
    %v3903 = vld [vmem:[#allocation22 + $0x58] sm:$0xf]
    %v3904 = vld [vmem:[#allocation22 + $0x5c] sm:$0xf]
    %v3905 = vld [vmem:[#allocation22 + $0x60] sm:$0xf]
    %v3906 = vld [vmem:[#allocation22 + $0x64] sm:$0xf]
    %v3907 = vld [vmem:[#allocation22 + $0x68] sm:$0xf]
    %v3908 = vld [vmem:[#allocation22 + $0x6c] sm:$0xf]
    %v3909 = vld [vmem:[#allocation22 + $0x70] sm:$0xf]
    %v3910 = vld [vmem:[#allocation22 + $0x74] sm:$0xf]
    %v3911 = vld [vmem:[#allocation22 + $0x78] sm:$0xf]
    %v3912 = vld [vmem:[#allocation22 + $0x7c] sm:$0xf]
    %v3913 = vld [vmem:[#allocation22 + $0x80] sm:$0xf]
    %v3914 = vld [vmem:[#allocation22 + $0x84] sm:$0xf]
    %v3915 = vld [vmem:[#allocation22 + $0x88] sm:$0xf]
    %v3916 = vld [vmem:[#allocation22 + $0x8c] sm:$0xf]
    %v3917 = vld [vmem:[#allocation22 + $0x90] sm:$0xf]
    %v3918 = vld [vmem:[#allocation22 + $0x94] sm:$0xf]
    %v3919 = vld [vmem:[#allocation22 + $0x98] sm:$0xf]
    %v3920 = vld [vmem:[#allocation22 + $0x9c] sm:$0xf]
    %v3921 = vld [vmem:[#allocation22 + $0xa0] sm:$0xf]
    %v3922 = vld [vmem:[#allocation22 + $0xa4] sm:$0xf]
    %v3923 = vld [vmem:[#allocation22 + $0xa8] sm:$0xf]
    %v3924 = vld [vmem:[#allocation22 + $0xac] sm:$0xf]
    %v3925 = vld [vmem:[#allocation22 + $0xb0] sm:$0xf]
    %v3926 = vld [vmem:[#allocation22 + $0xb4] sm:$0xf]
    %v3927 = vld [vmem:[#allocation22 + $0xb8] sm:$0xf]
    %v3928 = vld [vmem:[#allocation22 + $0xbc] sm:$0xf]
    %v3929 = vld [vmem:[#allocation22 + $0xc0] sm:$0xf]
    %v3930 = vld [vmem:[#allocation22 + $0xc4] sm:$0xf]
    %v3931 = vld [vmem:[#allocation22 + $0xc8] sm:$0xf]
    %v3932 = vld [vmem:[#allocation22 + $0xcc] sm:$0xf]
    %v3933 = vld [vmem:[#allocation22 + $0xd0] sm:$0xf]
    %v3934 = vld [vmem:[#allocation22 + $0xd4] sm:$0xf]
    %v3935 = vld [vmem:[#allocation22 + $0xd8] sm:$0xf]
    %v3936 = vld [vmem:[#allocation22 + $0xdc] sm:$0xf]
    %v3937 = vld [vmem:[#allocation22 + $0xe0] sm:$0xf]
    %v3938 = vld [vmem:[#allocation22 + $0xe4] sm:$0xf]
    %v3939 = vld [vmem:[#allocation22 + $0xe8] sm:$0xf]
    %v3940 = vld [vmem:[#allocation22 + $0xec] sm:$0xf]
    %v3941 = vld [vmem:[#allocation22 + $0xf0] sm:$0xf]
    %v3942 = vld [vmem:[#allocation22 + $0xf4] sm:$0xf]
    %v3943 = vld [vmem:[#allocation22 + $0xf8] sm:$0xf]
    %v3944 = vld [vmem:[#allocation22 + $0xfc] sm:$0xf]
    %v4009 = vunpack.c.l.b16 %v3881
    %v4010 = vunpack.c.l.b16 %v3882
    %v4011 = vunpack.c.l.b16 %v3883
    %v4012 = vunpack.c.l.b16 %v3884
    %v4013 = vunpack.c.l.b16 %v3885
    %v4014 = vunpack.c.l.b16 %v3886
    %v4015 = vunpack.c.l.b16 %v3887
    %v4016 = vunpack.c.l.b16 %v3888
    %v4017 = vunpack.c.l.b16 %v3889
    %v4018 = vunpack.c.l.b16 %v3890
    %v4019 = vunpack.c.l.b16 %v3891
    %v4020 = vunpack.c.l.b16 %v3892
    %v4021 = vunpack.c.l.b16 %v3893
    %v4022 = vunpack.c.l.b16 %v3894
    %v4023 = vunpack.c.l.b16 %v3895
    %v4024 = vunpack.c.l.b16 %v3896
    %v4025 = vunpack.c.l.b16 %v3897
    %v4026 = vunpack.c.l.b16 %v3898
    %v4027 = vunpack.c.l.b16 %v3899
    %v4028 = vunpack.c.l.b16 %v3900
    %v4029 = vunpack.c.l.b16 %v3901
    %v4030 = vunpack.c.l.b16 %v3902
    %v4031 = vunpack.c.l.b16 %v3903
    %v4032 = vunpack.c.l.b16 %v3904
    %v4033 = vunpack.c.l.b16 %v3905
    %v4034 = vunpack.c.l.b16 %v3906
    %v4035 = vunpack.c.l.b16 %v3907
    %v4036 = vunpack.c.l.b16 %v3908
    %v4037 = vunpack.c.l.b16 %v3909
    %v4038 = vunpack.c.l.b16 %v3910
    %v4039 = vunpack.c.l.b16 %v3911
    %v4040 = vunpack.c.l.b16 %v3912
    %v4041 = vunpack.c.l.b16 %v3913
    %v4042 = vunpack.c.l.b16 %v3914
    %v4043 = vunpack.c.l.b16 %v3915
    %v4044 = vunpack.c.l.b16 %v3916
    %v4045 = vunpack.c.l.b16 %v3917
    %v4046 = vunpack.c.l.b16 %v3918
    %v4047 = vunpack.c.l.b16 %v3919
    %v4048 = vunpack.c.l.b16 %v3920
    %v4049 = vunpack.c.l.b16 %v3921
    %v4050 = vunpack.c.l.b16 %v3922
    %v4051 = vunpack.c.l.b16 %v3923
    %v4052 = vunpack.c.l.b16 %v3924
    %v4053 = vunpack.c.l.b16 %v3925
    %v4054 = vunpack.c.l.b16 %v3926
    %v4055 = vunpack.c.l.b16 %v3927
    %v4056 = vunpack.c.l.b16 %v3928
    %v4057 = vunpack.c.l.b16 %v3929
    %v4058 = vunpack.c.l.b16 %v3930
    %v4059 = vunpack.c.l.b16 %v3931
    %v4060 = vunpack.c.l.b16 %v3932
    %v4061 = vunpack.c.l.b16 %v3933
    %v4062 = vunpack.c.l.b16 %v3934
    %v4063 = vunpack.c.l.b16 %v3935
    %v4064 = vunpack.c.l.b16 %v3936
    %v4065 = vunpack.c.l.b16 %v3937
    %v4066 = vunpack.c.l.b16 %v3938
    %v4067 = vunpack.c.l.b16 %v3939
    %v4068 = vunpack.c.l.b16 %v3940
    %v4069 = vunpack.c.l.b16 %v3941
    %v4070 = vunpack.c.l.b16 %v3942
    %v4071 = vunpack.c.l.b16 %v3943
    %v4072 = vunpack.c.l.b16 %v3944
    %v4073 = vpack.c.b16 %v4010, %v4009
    %v4074 = vpack.c.b16 %v4012, %v4011
    %v4075 = vpack.c.b16 %v4014, %v4013
    %v4076 = vpack.c.b16 %v4016, %v4015
    %v4077 = vpack.c.b16 %v4018, %v4017
    %v4078 = vpack.c.b16 %v4020, %v4019
    %v4079 = vpack.c.b16 %v4022, %v4021
    %v4080 = vpack.c.b16 %v4024, %v4023
    %v4081 = vpack.c.b16 %v4026, %v4025
    %v4082 = vpack.c.b16 %v4028, %v4027
    %v4083 = vpack.c.b16 %v4030, %v4029
    %v4084 = vpack.c.b16 %v4032, %v4031
    %v4085 = vpack.c.b16 %v4034, %v4033
    %v4086 = vpack.c.b16 %v4036, %v4035
    %v4087 = vpack.c.b16 %v4038, %v4037
    %v4088 = vpack.c.b16 %v4040, %v4039
    %v4089 = vpack.c.b16 %v4042, %v4041
    %v4090 = vpack.c.b16 %v4044, %v4043
    %v4091 = vpack.c.b16 %v4046, %v4045
    %v4092 = vpack.c.b16 %v4048, %v4047
    %v4093 = vpack.c.b16 %v4050, %v4049
    %v4094 = vpack.c.b16 %v4052, %v4051
    %v4095 = vpack.c.b16 %v4054, %v4053
    %v4096 = vpack.c.b16 %v4056, %v4055
    %v4097 = vpack.c.b16 %v4058, %v4057
    %v4098 = vpack.c.b16 %v4060, %v4059
    %v4099 = vpack.c.b16 %v4062, %v4061
    %v4100 = vpack.c.b16 %v4064, %v4063
    %v4101 = vpack.c.b16 %v4066, %v4065
    %v4102 = vpack.c.b16 %v4068, %v4067
    %v4103 = vpack.c.b16 %v4070, %v4069
    %v4104 = vpack.c.b16 %v4072, %v4071
    %4137 = vmatpush.bf16.msra.mxu0 %v4080
    %4138 = vmatpush.bf16.msra.mxu0 %v4079
    %4139 = vmatpush.bf16.msra.mxu0 %v4078
    %4140 = vmatpush.bf16.msra.mxu0 %v4077
    %4141 = vmatpush.bf16.msra.mxu0 %v4076
    %4142 = vmatpush.bf16.msra.mxu0 %v4075
    %4143 = vmatpush.bf16.msra.mxu0 %v4074
    %4144 = vmatpush.bf16.msra.mxu0 %v4073
    %4145 = vmatmul.bf16.gmra.mxu0 %v3861
    %v4146 = vpop.f32.mrf.mxu0
    %v4147 = vadd.f32 0.0, %v4146
    %v4148 = vpop.f32.mrf.mxu0
    %v4149 = vadd.f32 0.0, %v4148
    %4150 = vdwg.mxu0
    %4151 = vmatpush.bf16.msra.mxu0 %v4088
    %4152 = vmatpush.bf16.msra.mxu0 %v4087
    %4153 = vmatpush.bf16.msra.mxu0 %v4086
    %4154 = vmatpush.bf16.msra.mxu0 %v4085
    %4155 = vmatpush.bf16.msra.mxu0 %v4084
    %4156 = vmatpush.bf16.msra.mxu0 %v4083
    %4157 = vmatpush.bf16.msra.mxu0 %v4082
    %4158 = vmatpush.bf16.msra.mxu0 %v4081
    %4159 = vmatmul.bf16.gmra.mxu0 %v3862
    %v4160 = vpop.f32.mrf.mxu0
    %v4161 = vadd.f32 %v4147, %v4160
    %v4162 = vpop.f32.mrf.mxu0
    %v4163 = vadd.f32 %v4149, %v4162
    %4164 = vdwg.mxu0
    %4165 = vmatpush.bf16.msra.mxu0 %v4096
    %4166 = vmatpush.bf16.msra.mxu0 %v4095
    %4167 = vmatpush.bf16.msra.mxu0 %v4094
    %4168 = vmatpush.bf16.msra.mxu0 %v4093
    %4169 = vmatpush.bf16.msra.mxu0 %v4092
    %4170 = vmatpush.bf16.msra.mxu0 %v4091
    %4171 = vmatpush.bf16.msra.mxu0 %v4090
    %4172 = vmatpush.bf16.msra.mxu0 %v4089
    %4173 = vmatmul.bf16.gmra.mxu0 %v3863
    %v4174 = vpop.f32.mrf.mxu0
    %v4175 = vadd.f32 %v4161, %v4174
    %v4176 = vpop.f32.mrf.mxu0
    %v4177 = vadd.f32 %v4163, %v4176
    %4178 = vdwg.mxu0
    %4179 = vmatpush.bf16.msra.mxu0 %v4104
    %4180 = vmatpush.bf16.msra.mxu0 %v4103
    %4181 = vmatpush.bf16.msra.mxu0 %v4102
    %4182 = vmatpush.bf16.msra.mxu0 %v4101
    %4183 = vmatpush.bf16.msra.mxu0 %v4100
    %4184 = vmatpush.bf16.msra.mxu0 %v4099
    %4185 = vmatpush.bf16.msra.mxu0 %v4098
    %4186 = vmatpush.bf16.msra.mxu0 %v4097
    %4187 = vmatmul.bf16.gmra.mxu0 %v3864
    %v4188 = vpop.f32.mrf.mxu0
    %v4189 = vadd.f32 %v4175, %v4188
    %v4190 = vpop.f32.mrf.mxu0
    %v4191 = vadd.f32 %v4177, %v4190
    %4192 = vdwg.mxu0
    %v4209 = vunpack.c.l.b16 %v3865
    %v4210 = vunpack.c.l.b16 %v3866
    %v4211 = vunpack.c.l.b16 %v3867
    %v4212 = vunpack.c.l.b16 %v3868
    %v4213 = vunpack.c.l.b16 %v3869
    %v4214 = vunpack.c.l.b16 %v3870
    %v4215 = vunpack.c.l.b16 %v3871
    %v4216 = vunpack.c.l.b16 %v3872
    %v4217 = vunpack.c.l.b16 %v3873
    %v4218 = vunpack.c.l.b16 %v3874
    %v4219 = vunpack.c.l.b16 %v3875
    %v4220 = vunpack.c.l.b16 %v3876
    %v4221 = vunpack.c.l.b16 %v3877
    %v4222 = vunpack.c.l.b16 %v3878
    %v4223 = vunpack.c.l.b16 %v3879
    %v4224 = vunpack.c.l.b16 %v3880
    %v4225 = vpack.c.b16 %v4210, %v4209
    %v4226 = vpack.c.b16 %v4212, %v4211
    %v4227 = vpack.c.b16 %v4214, %v4213
    %v4228 = vpack.c.b16 %v4216, %v4215
    %v4229 = vpack.c.b16 %v4218, %v4217
    %v4230 = vpack.c.b16 %v4220, %v4219
    %v4231 = vpack.c.b16 %v4222, %v4221
    %v4232 = vpack.c.b16 %v4224, %v4223
    %4241 = vmatpush.bf16.msra.mxu0 %v4232
    %4242 = vmatpush.bf16.msra.mxu0 %v4231
    %4243 = vmatpush.bf16.msra.mxu0 %v4230
    %4244 = vmatpush.bf16.msra.mxu0 %v4229
    %4245 = vmatpush.bf16.msra.mxu0 %v4228
    %4246 = vmatpush.bf16.msra.mxu0 %v4227
    %4247 = vmatpush.bf16.msra.mxu0 %v4226
    %4248 = vmatpush.bf16.msra.mxu0 %v4225
    %4249 = vmatmul.bf16.gmra.mxu0 %v1198
    %v4250 = vpop.f32.mrf.mxu0
    %v4251 = vadd.f32 %v4189, %v4250
    %v4252 = vpop.f32.mrf.mxu0
    %v4253 = vadd.f32 %v4191, %v4252
    %4254 = vdwg.mxu0
    %v4255 = vld [vmem:[%s18] sm:$0x1]
    %v4257 = vperm.slane %v4255, 0
    %v4259 = vadd.f32 %v4251, %v4257
    %v4260 = vadd.f32 %v4253, %v4257
    %v4261 = vmax.f32 %v4259, 0.0
    %v4262 = vmax.f32 %v4260, 0.0
    %v4263 = vpack.c.bf16 %v4262, %v4261
    %v4264 = vld [vmem:[#allocation23] sm:$0xf]
    %v4265 = vld [vmem:[#allocation23 + $0x4] sm:$0xf]
    %v4266 = vld [vmem:[#allocation23 + $0x8] sm:$0xf]
    %v4267 = vld [vmem:[#allocation23 + $0xc] sm:$0xf]
    %v4268 = vld [vmem:[#allocation23 + $0x10] sm:$0xf]
    %v4269 = vld [vmem:[#allocation23 + $0x14] sm:$0xf]
    %v4270 = vld [vmem:[#allocation23 + $0x18] sm:$0xf]
    %v4271 = vld [vmem:[#allocation23 + $0x1c] sm:$0xf]
    %v4272 = vld [vmem:[#allocation23 + $0x20] sm:$0xf]
    %v4273 = vld [vmem:[#allocation23 + $0x24] sm:$0xf]
    %v4274 = vld [vmem:[#allocation23 + $0x28] sm:$0xf]
    %v4275 = vld [vmem:[#allocation23 + $0x2c] sm:$0xf]
    %v4276 = vld [vmem:[#allocation23 + $0x30] sm:$0xf]
    %v4277 = vld [vmem:[#allocation23 + $0x34] sm:$0xf]
    %v4278 = vld [vmem:[#allocation23 + $0x38] sm:$0xf]
    %v4279 = vld [vmem:[#allocation23 + $0x3c] sm:$0xf]
    %v4280 = vld [vmem:[%s20] sm:$0x1]
    %v4282 = vperm.slane %v4280, 0
    %v4300 = vunpack.c.l.b16 %v4264
    %v4301 = vunpack.c.l.b16 %v4265
    %v4302 = vunpack.c.l.b16 %v4266
    %v4303 = vunpack.c.l.b16 %v4267
    %v4304 = vunpack.c.l.b16 %v4268
    %v4305 = vunpack.c.l.b16 %v4269
    %v4306 = vunpack.c.l.b16 %v4270
    %v4307 = vunpack.c.l.b16 %v4271
    %v4308 = vunpack.c.l.b16 %v4272
    %v4309 = vunpack.c.l.b16 %v4273
    %v4310 = vunpack.c.l.b16 %v4274
    %v4311 = vunpack.c.l.b16 %v4275
    %v4312 = vunpack.c.l.b16 %v4276
    %v4313 = vunpack.c.l.b16 %v4277
    %v4314 = vunpack.c.l.b16 %v4278
    %v4315 = vunpack.c.l.b16 %v4279
    %v4316 = vpack.c.b16 %v4301, %v4300
    %v4317 = vpack.c.b16 %v4303, %v4302
    %v4318 = vpack.c.b16 %v4305, %v4304
    %v4319 = vpack.c.b16 %v4307, %v4306
    %v4320 = vpack.c.b16 %v4309, %v4308
    %v4321 = vpack.c.b16 %v4311, %v4310
    %v4322 = vpack.c.b16 %v4313, %v4312
    %v4323 = vpack.c.b16 %v4315, %v4314
    %4332 = vmatpush.bf16.msra.mxu0 %v4323
    %4333 = vmatpush.bf16.msra.mxu0 %v4322
    %4334 = vmatpush.bf16.msra.mxu0 %v4321
    %4335 = vmatpush.bf16.msra.mxu0 %v4320
    %4336 = vmatpush.bf16.msra.mxu0 %v4319
    %4337 = vmatpush.bf16.msra.mxu0 %v4318
    %4338 = vmatpush.bf16.msra.mxu0 %v4317
    %4339 = vmatpush.bf16.msra.mxu0 %v4316
    %4340 = vmatmul.bf16.gmra.mxu0 %v4263
    %v4341 = vpop.f32.mrf.mxu0
    %v4342 = vadd.f32 %v4282, %v4341
    %v4343 = vpop.f32.mrf.mxu0
    %v4344 = vadd.f32 %v4282, %v4343
    %4345 = vdwg.mxu0
    %v4346 = vmax.f32 %v4342, 0.0
    %v4347 = vmax.f32 %v4344, 0.0
    %v4348 = vpack.c.bf16 %v4347, %v4346
    %v4349 = vld [vmem:[#allocation25] sm:$0xf]
    %v4350 = vld [vmem:[#allocation25 + $0x4] sm:$0xf]
    %v4351 = vld [vmem:[#allocation25 + $0x8] sm:$0xf]
    %v4352 = vld [vmem:[#allocation25 + $0xc] sm:$0xf]
    %v4353 = vld [vmem:[#allocation25 + $0x10] sm:$0xf]
    %v4354 = vld [vmem:[#allocation25 + $0x14] sm:$0xf]
    %v4355 = vld [vmem:[#allocation25 + $0x18] sm:$0xf]
    %v4356 = vld [vmem:[#allocation25 + $0x1c] sm:$0xf]
    %v4357 = vld [vmem:[#allocation25 + $0x20] sm:$0xf]
    %v4358 = vld [vmem:[#allocation25 + $0x24] sm:$0xf]
    %v4359 = vld [vmem:[#allocation25 + $0x28] sm:$0xf]
    %v4360 = vld [vmem:[#allocation25 + $0x2c] sm:$0xf]
    %v4361 = vld [vmem:[#allocation25 + $0x30] sm:$0xf]
    %v4362 = vld [vmem:[#allocation25 + $0x34] sm:$0xf]
    %v4363 = vld [vmem:[#allocation25 + $0x38] sm:$0xf]
    %v4364 = vld [vmem:[#allocation25 + $0x3c] sm:$0xf]
    %v4365 = vld [vmem:[%s22] sm:$0x1]
    %v4367 = vperm.slane %v4365, 0
    %v4385 = vunpack.c.l.b16 %v4349
    %v4386 = vunpack.c.l.b16 %v4350
    %v4387 = vunpack.c.l.b16 %v4351
    %v4388 = vunpack.c.l.b16 %v4352
    %v4389 = vunpack.c.l.b16 %v4353
    %v4390 = vunpack.c.l.b16 %v4354
    %v4391 = vunpack.c.l.b16 %v4355
    %v4392 = vunpack.c.l.b16 %v4356
    %v4393 = vunpack.c.l.b16 %v4357
    %v4394 = vunpack.c.l.b16 %v4358
    %v4395 = vunpack.c.l.b16 %v4359
    %v4396 = vunpack.c.l.b16 %v4360
    %v4397 = vunpack.c.l.b16 %v4361
    %v4398 = vunpack.c.l.b16 %v4362
    %v4399 = vunpack.c.l.b16 %v4363
    %v4400 = vunpack.c.l.b16 %v4364
    %v4401 = vpack.c.b16 %v4386, %v4385
    %v4402 = vpack.c.b16 %v4388, %v4387
    %v4403 = vpack.c.b16 %v4390, %v4389
    %v4404 = vpack.c.b16 %v4392, %v4391
    %v4405 = vpack.c.b16 %v4394, %v4393
    %v4406 = vpack.c.b16 %v4396, %v4395
    %v4407 = vpack.c.b16 %v4398, %v4397
    %v4408 = vpack.c.b16 %v4400, %v4399
    %4417 = vmatpush.bf16.msra.mxu0 %v4408
    %4418 = vmatpush.bf16.msra.mxu0 %v4407
    %4419 = vmatpush.bf16.msra.mxu0 %v4406
    %4420 = vmatpush.bf16.msra.mxu0 %v4405
    %4421 = vmatpush.bf16.msra.mxu0 %v4404
    %4422 = vmatpush.bf16.msra.mxu0 %v4403
    %4423 = vmatpush.bf16.msra.mxu0 %v4402
    %4424 = vmatpush.bf16.msra.mxu0 %v4401
    %4425 = vmatmul.bf16.gmra.mxu0 %v4348
    %v4426 = vpop.f32.mrf.mxu0
    %v4427 = vadd.f32 %v4367, %v4426
    %v4428 = vpop.f32.mrf.mxu0
    %v4429 = vadd.f32 %v4367, %v4428
    %4430 = vdwg.mxu0
    %v4431 = vpack.c.bf16 %v4427, %v4427
    %v4432 = vpack.c.bf16 %v4429, %v4429
    %4433 = vst [vmem:[#allocation26] sm:$0xf] %v4431
    %4434 = vst [vmem:[#allocation26 + $0x4] sm:$0xf] %v4432
    // Predicated region
    $region154: #{tpu_custom_call.1} parent=1 // pred_check
      _
    $region155: #{tpu_custom_call.1} parent=1 // pred_check_branch
      %4436 = sbr.rel (0) target = $region157
    $region156: #{tpu_custom_call.1} parent=1 // pred_region
      %4438 = vsyncadd [#allocation4], 0
      %s4439 = sshll.u32 [#allocation26], 4
      %s4440 = int_to_ptr.vmem [resolvable:$true] %s4439
      %s4441 = sshll.u32 %s23, 4
      %s4442 = int_to_ptr.hbm [resolvable:$true] %s4441
      %4447 = dma.vmem_to_hbm [thread:$0]  %s4440, 128, %s4442, [#allocation4], 64, 64, 4
    $region157: #{tpu_custom_call.1} parent=1 // pred_fallthru
      _
    // Predicated region
    $region158: #{tpu_custom_call.1} parent=1 // pred_check
      _
    $region159: #{tpu_custom_call.1} parent=1 // pred_check_branch
      %4449 = sbr.rel (0) target = $region161
    $region160: #{tpu_custom_call.1} parent=1 // pred_region
      %4451 = dma.done [#allocation4], 128
    $region161: #{tpu_custom_call.1} parent=1 // pred_fallthru
      _
    %4452 = vsyncpa [#allocation3], 1
    %4453 = vsyncpa [#allocation6], 1
    %4454 = vsyncpa [#allocation9], 1
    %4455 = vsyncpa [#allocation12], 1
    %4456 = vsyncpa [#allocation15], 1
    %4457 = vsyncpa [#allocation18], 1
    %4458 = vsyncpa [#allocation21], 1
    %4459 = vsyncpa [#allocation24], 1
    %4460 = vsyncpa [#allocation4], 1

</llo_original>
